<compile_context>
chip_gen: v5e
topology: v5e:2x2
jax: 0.10.0
libtpu: 0.0.40
codegen_flags: <defaults>
</compile_context>

<pallas_src>
import functools

import numpy as np
import jax
import jax.numpy as jnp
from jax.experimental import pallas as pl
from jax.experimental.pallas import tpu as pltpu


def _round_up(x, m):
    return ((int(x) + m - 1) // m) * m


# ----------------------------------------------------------------------------
# Pallas kernel 1: fused Euler time loop.
#   grid = (branch, step).  State (B*N, Dr) lives in a VMEM scratch accumulator
#   and is carried across the (inner, "arbitrary") step axis.  Per step:
#     f    = DDC-ODE(h)                     (K-hop diffusion MLP)
#     h1   = h + dt * f                     (Euler)
#     h2   = DDC-GRU(x_t, h1)               (fused r/u gate, split x/h weights)
#     hnew = h1*(1-m) + h2*m                (observation merge; m==0 off-obs)
#   Output: lane-dense slab [h1 | hnew | 0-pad]  (width multiple of 128).
# ----------------------------------------------------------------------------
def time_loop_kernel(hz0_ref, x_ref, m_ref, abd_ref,
                     win_ref, bin_ref, whid_ref, bhid_ref, wout_ref, bout_ref,
                     wrux_ref, wruh_ref, bru_ref, wcx_ref, wch_ref, bc_ref,
                     slab_ref, state_ref, *, K, L, dt, Dr):
    s = pl.program_id(1)

    @pl.when(s == 0)
    def _():
        state_ref[...] = hz0_ref[0]

    h = state_ref[...]                        # (BN, Dr)    f32
    x = x_ref[0]                              # (BN, dimIn) f32
    m = m_ref[0]                              # (BN, 1)     f32

    def hops(v):
        # [v, A v, A^2 v, ...] against PRE-COMPUTED powers (independent matmuls)
        out = [v]
        for k in range(K - 1):
            out.append(jnp.dot(abd_ref[k], v, preferred_element_type=jnp.float32))
        return out

    def diffconv(feats, w_ref, idx, b):
        # sum_k feats[k] @ W[k]  (+ b)   -- no feature concatenation.
        acc = jnp.dot(feats[0], w_ref[idx + (0,)],
                      preferred_element_type=jnp.float32)
        for k in range(1, K):
            acc = acc + jnp.dot(feats[k], w_ref[idx + (k,)],
                                preferred_element_type=jnp.float32)
        return acc + b

    # ---- diffusion-conv ODE function f(h, A) --------------------------------
    y = jnp.tanh(diffconv(hops(h), win_ref, (0,), bin_ref[0]))
    for l in range(L):
        y = jnp.tanh(diffconv(hops(y), whid_ref, (0, l), bhid_ref[0, l]))
    f = diffconv(hops(y), wout_ref, (0,), bout_ref[0])

    h1 = h + dt * f                                              # Euler update

    # ---- diffusion-conv GRU against the (masked) observation ----------------
    x_hops = hops(x)                      # computed once, reused for gate + cand
    h1_hops = hops(h1)
    ru = jax.nn.sigmoid(diffconv(x_hops, wrux_ref, (0,), bru_ref[0])
                        + diffconv(h1_hops, wruh_ref, (0,), 0.0))
    r = ru[:, :Dr]
    u = ru[:, Dr:]
    c = jnp.tanh(diffconv(x_hops, wcx_ref, (0,), bc_ref[0])
                 + diffconv(hops(r * h1), wch_ref, (0,), 0.0))
    h2 = u * h1 + (1.0 - u) * c

    hnew = h1 * (1.0 - m) + h2 * m
    state_ref[...] = hnew                                        # carry

    pad = slab_ref.shape[-1] - 2 * Dr
    slab_ref[0, 0] = jnp.concatenate(
        [h1, hnew, jnp.zeros((h1.shape[0], pad), jnp.float32)], axis=-1)


# ----------------------------------------------------------------------------
# Pallas kernel 2: fused output head.
#   input rows  : [h_pre | z_pre | h_post]                       (M, 3*Dr)
#   gate        = sigmoid(tanh(tanh(z W1 + b1) W2 + b2) W3 + b3) (Net_Zout)
#   output slab : [h_pre*gate | gate | h_post*gate | xpred_pad]  (M, 128-mult)
# ----------------------------------------------------------------------------
def head_kernel(hzp_ref, w1_ref, b1_ref, w2_ref, b2_ref, w3_ref, b3_ref,
                wo_ref, bo_ref, slab_ref, *, D):
    hzp = hzp_ref[...]
    h = hzp[:, :D]
    z = hzp[:, D:2 * D]
    hpost = hzp[:, 2 * D:3 * D]

    def dense(v, w_ref, b_ref):
        return jnp.dot(v, w_ref[...], preferred_element_type=jnp.float32) + b_ref[...]

    g = jnp.tanh(dense(z, w1_ref, b1_ref))
    g = jnp.tanh(dense(g, w2_ref, b2_ref))
    g = jax.nn.sigmoid(dense(g, w3_ref, b3_ref))
    hg = h * g
    hpg = hpost * g
    xp = dense(hg, wo_ref, bo_ref)                      # padded output columns
    slab_ref[...] = jnp.concatenate([hg, g, hpg, xp], axis=-1)


def output_head(hzp_flat, hp, D):
    """hzp_flat: (M, 3D) rows [h_pre | z_pre | h_post].  Returns head slab
    (M, round_up(3D + dimIn, 128)) = [h_pre*gate | gate | h_post*gate | xpred_pad]."""
    M = hzp_flat.shape[0]
    pad_w = hp["bo_pad"].shape[-1]
    slab_w = 3 * D + pad_w

    TM = min(512, _round_up(max(M, 8), 8))              # one tile for small M
    Mp = _round_up(M, TM)
    hzp_p = jnp.pad(hzp_flat, ((0, Mp - M), (0, 0)))

    row_spec = pl.BlockSpec((TM, 3 * D), lambda i: (i, 0))

    def pin(shape):
        nd = len(shape)
        return pl.BlockSpec(shape, lambda i, _nd=nd: (0,) * _nd)

    slab = pl.pallas_call(
        functools.partial(head_kernel, D=D),
        out_shape=jax.ShapeDtypeStruct((Mp, slab_w), jnp.float32),
        grid=(Mp // TM,),
        in_specs=[row_spec,
                  pin((D, D)), pin((1, D)),
                  pin((D, D)), pin((1, D)),
                  pin((D, D)), pin((1, D)),
                  pin((D, pad_w)), pin((1, pad_w))],
        out_specs=pl.BlockSpec((TM, slab_w), lambda i: (i, 0)),
        compiler_params=pltpu.CompilerParams(dimension_semantics=("parallel",)),
    )(hzp_p, hp["W1"], hp["b1"], hp["W2"], hp["b2"], hp["W3"], hp["b3"],
      hp["Wo_pad"], hp["bo_pad"])
    return slab[:M]


# ----------------------------------------------------------------------------
# Parameter construction (deterministic, synthetic) + one-time preparation.
# ----------------------------------------------------------------------------
def make_gru_params(key, dimIn, dimRnn, K):
    k = jax.random.split(key, 3)
    cin = dimIn + dimRnn
    s = 0.1
    return dict(
        Wr=s * jax.random.normal(k[0], (K, cin, dimRnn), jnp.float32),
        br=jnp.zeros((dimRnn,), jnp.float32),
        Wu=s * jax.random.normal(k[1], (K, cin, dimRnn), jnp.float32),
        bu=jnp.zeros((dimRnn,), jnp.float32),
        Wc=s * jax.random.normal(k[2], (K, cin, dimRnn), jnp.float32),
        bc=jnp.zeros((dimRnn,), jnp.float32),
    )


def make_ode_params(key, dimRnn, dimODEHidden, numODEHidden, K):
    keys = jax.random.split(key, numODEHidden + 2)
    s = 0.1
    hidden = []
    for i in range(numODEHidden):
        hidden.append((
            s * jax.random.normal(keys[1 + i], (K, dimODEHidden, dimODEHidden),
                                  jnp.float32),
            jnp.zeros((dimODEHidden,), jnp.float32),
        ))
    return dict(
        Win=s * jax.random.normal(keys[0], (K, dimRnn, dimODEHidden), jnp.float32),
        bin=jnp.zeros((dimODEHidden,), jnp.float32),
        hidden=hidden,
        Wout=s * jax.random.normal(keys[-1], (K, dimODEHidden, dimRnn), jnp.float32),
        bout=jnp.zeros((dimRnn,), jnp.float32),
    )


def make_head_params(key, dimRnn, dimIn):
    k = jax.random.split(key, 4)
    s = 0.1
    return dict(
        W1=s * jax.random.normal(k[0], (dimRnn, dimRnn), jnp.float32),
        b1=jnp.zeros((dimRnn,), jnp.float32),
        W2=s * jax.random.normal(k[1], (dimRnn, dimRnn), jnp.float32),
        b2=jnp.zeros((dimRnn,), jnp.float32),
        W3=s * jax.random.normal(k[2], (dimRnn, dimRnn), jnp.float32),
        b3=jnp.zeros((dimRnn,), jnp.float32),
        Wo=s * jax.random.normal(k[3], (dimRnn, dimIn), jnp.float32),
        bo=jnp.zeros((dimIn,), jnp.float32),
    )


def make_params(key, dimIn, dimRnn, dimODEHidden, numODEHidden, K):
    k = jax.random.split(key, 7)
    return dict(
        h0=0.01 * jax.random.normal(k[0], (1, 1, dimRnn), jnp.float32),
        z0=0.01 * jax.random.normal(k[1], (1, 1, dimRnn), jnp.float32),
        GRU_V=make_gru_params(k[2], dimIn, dimRnn, K),
        GRU_G=make_gru_params(k[3], dimIn, dimRnn, K),
        ODE_V=make_ode_params(k[4], dimRnn, dimODEHidden, numODEHidden, K),
        ODE_G=make_ode_params(k[5], dimRnn, dimODEHidden, numODEHidden, K),
        head=make_head_params(k[6], dimRnn, dimIn),
    )


def prepare_params(raw, dimIn, dimRnn, K):
    """Stack V/G branches, fuse [Wr|Wu] and split GRU weights into x-/h-row
    parts, pad the head projection to a lane-dense slab.  Done ONCE."""
    f32 = jnp.float32

    def ode_pack(p):
        Dh = p["Win"].shape[-1]
        win = jnp.asarray(p["Win"], f32)                         # (K, Dr, Dh)
        bin_ = jnp.asarray(p["bin"], f32).reshape(1, -1)
        if len(p["hidden"]) > 0:
            whid = jnp.stack([jnp.asarray(W, f32) for (W, _) in p["hidden"]], 0)
            bhid = jnp.stack([jnp.asarray(b, f32).reshape(1, -1)
                              for (_, b) in p["hidden"]], 0)
        else:  # dummy (unused) hidden slot so kernel signature stays fixed
            whid = jnp.zeros((1, K, Dh, Dh), f32)
            bhid = jnp.zeros((1, 1, Dh), f32)
        wout = jnp.asarray(p["Wout"], f32)                       # (K, Dh, Dr)
        bout = jnp.asarray(p["bout"], f32).reshape(1, -1)
        return win, bin_, whid, bhid, wout, bout

    def gru_pack(p):
        Wr = jnp.asarray(p["Wr"], f32)
        Wu = jnp.asarray(p["Wu"], f32)
        Wc = jnp.asarray(p["Wc"], f32)
        Wru = jnp.concatenate([Wr, Wu], axis=-1)                 # (K, dimIn+Dr, 2Dr)
        wru_x, wru_h = Wru[:, :dimIn, :], Wru[:, dimIn:, :]
        wc_x, wc_h = Wc[:, :dimIn, :], Wc[:, dimIn:, :]
        bru = jnp.concatenate([p["br"], p["bu"]]).astype(f32).reshape(1, -1)
        bc = jnp.asarray(p["bc"], f32).reshape(1, -1)
        return wru_x, wru_h, bru, wc_x, wc_h, bc

    odeV, odeG = ode_pack(raw["ODE_V"]), ode_pack(raw["ODE_G"])
    gruV, gruG = gru_pack(raw["GRU_V"]), gru_pack(raw["GRU_G"])

    def s2(a, b):
        return jnp.stack([a, b], axis=0)

    step = dict(
        win=s2(odeV[0], odeG[0]), bin=s2(odeV[1], odeG[1]),
        whid=s2(odeV[2], odeG[2]), bhid=s2(odeV[3], odeG[3]),
        wout=s2(odeV[4], odeG[4]), bout=s2(odeV[5], odeG[5]),
        wru_x=s2(gruV[0], gruG[0]), wru_h=s2(gruV[1], gruG[1]),
        bru=s2(gruV[2], gruG[2]),
        wc_x=s2(gruV[3], gruG[3]), wc_h=s2(gruV[4], gruG[4]),
        bc=s2(gruV[5], gruG[5]),
    )

    h = raw["head"]
    pad_w = _round_up(3 * dimRnn + dimIn, 128) - 3 * dimRnn
    Wo_pad = jnp.zeros((dimRnn, pad_w), f32).at[:, :dimIn].set(
        jnp.asarray(h["Wo"], f32))
    bo_pad = jnp.zeros((1, pad_w), f32).at[:, :dimIn].set(
        jnp.asarray(h["bo"], f32).reshape(1, -1))
    head = dict(
        W1=jnp.asarray(h["W1"], f32), b1=jnp.asarray(h["b1"], f32).reshape(1, -1),
        W2=jnp.asarray(h["W2"], f32), b2=jnp.asarray(h["b2"], f32).reshape(1, -1),
        W3=jnp.asarray(h["W3"], f32), b3=jnp.asarray(h["b3"], f32).reshape(1, -1),
        Wo_pad=Wo_pad, bo_pad=bo_pad,
    )
    return dict(step=step, head=head, h0=raw["h0"], z0=raw["z0"],
                num_hidden=len(raw["ODE_V"]["hidden"]), K=K)


# ----------------------------------------------------------------------------
# Device-side forward: ONE fused time-loop pallas_call + fused head.
# ----------------------------------------------------------------------------
@functools.partial(jax.jit, static_argnames=("dt", "num_hidden", "K"))
def _device_forward(prep, values, masks, A, n_arr, obs_flag, obs_idx, *,
                    dt, num_hidden, K):
    X = values * masks
    B, T, N, dimIn = X.shape
    sp = prep["step"]
    Dr = sp["bout"].shape[-1]
    BN = B * N
    S = n_arr.shape[0]

    # Initial state stacked per branch: branch 0 = hv, branch 1 = zv.
    h0 = jnp.broadcast_to(jnp.reshape(prep["h0"], (1, 1, Dr)), (B, N, Dr))
    z0 = jnp.broadcast_to(jnp.reshape(prep["z0"], (1, 1, Dr)), (B, N, Dr))
    hz0 = jnp.stack([h0.reshape(BN, Dr), z0.reshape(BN, Dr)], 0).astype(jnp.float32)

    # Per-step observation inputs / node masks (zeroed on non-observation steps).
    node_obs = (jnp.sum(jnp.abs(masks), axis=-1, keepdims=True)
                > 0.0001).astype(jnp.float32)                           # (B,T,N,1)
    x_seq = jnp.transpose(jnp.take(X, n_arr, axis=1), (1, 0, 2, 3))
    x_seq = x_seq.reshape(S, BN, dimIn)
    m_seq = jnp.transpose(jnp.take(node_obs, n_arr, axis=1), (1, 0, 2, 3))
    m_seq = m_seq.reshape(S, BN, 1) * obs_flag[:, None, None]

    # Precomputed block-diagonal adjacency powers [A, A^2, ..., A^(K-1)].
    eyeB = jnp.eye(B, dtype=jnp.float32)
    powers = []
    P = A.astype(jnp.float32)
    for _ in range(K - 1):
        powers.append(jnp.einsum('bc,bij->bicj', eyeB, P).reshape(BN, BN))
        P = jnp.einsum('bij,bjk->bik', P, A.astype(jnp.float32))
    if not powers:                       # K == 1: dummy, never read in-kernel
        powers = [jnp.zeros((BN, BN), jnp.float32)]
    abd = jnp.stack(powers, axis=0)

    Wslab = _round_up(2 * Dr, 128)

    def pin(shape):
        nd = len(shape)
        return pl.BlockSpec(shape, lambda g, s, _nd=nd: (0,) * _nd)

    def branch(shape):
        nd = len(shape)
        return pl.BlockSpec((1,) + tuple(shape[1:]),
                            lambda g, s, _nd=nd: (g,) + (0,) * (_nd - 1))

    def per_step(shape):
        nd = len(shape)
        return pl.BlockSpec((1,) + tuple(shape[1:]),
                            lambda g, s, _nd=nd: (s,) + (0,) * (_nd - 1))

    kernel = functools.partial(time_loop_kernel, K=K, L=num_hidden,
                               dt=float(dt), Dr=Dr)

    slab = pl.pallas_call(
        kernel,
        out_shape=jax.ShapeDtypeStruct((2, S, BN, Wslab), jnp.float32),
        grid=(2, S),
        in_specs=[
            branch(hz0.shape),            # (2, BN, Dr)
            per_step(x_seq.shape),        # (S, BN, dimIn)
            per_step(m_seq.shape),        # (S, BN, 1)
            pin(abd.shape),               # (max(K-1,1), BN, BN)
            branch(sp["win"].shape),      # (2, K, Dr, Dh)
            branch(sp["bin"].shape),      # (2, 1, Dh)
            branch(sp["whid"].shape),     # (2, Lp, K, Dh, Dh)
            branch(sp["bhid"].shape),     # (2, Lp, 1, Dh)
            branch(sp["wout"].shape),     # (2, K, Dh, Dr)
            branch(sp["bout"].shape),     # (2, 1, Dr)
            branch(sp["wru_x"].shape),    # (2, K, dimIn, 2Dr)
            branch(sp["wru_h"].shape),    # (2, K, Dr, 2Dr)
            branch(sp["bru"].shape),      # (2, 1, 2Dr)
            branch(sp["wc_x"].shape),     # (2, K, dimIn, Dr)
            branch(sp["wc_h"].shape),     # (2, K, Dr, Dr)
            branch(sp["bc"].shape),       # (2, 1, Dr)
        ],
        out_specs=pl.BlockSpec((1, 1, BN, Wslab), lambda g, s: (g, s, 0, 0)),
        scratch_shapes=[pltpu.VMEM((BN, Dr), jnp.float32)],
        compiler_params=pltpu.CompilerParams(
            dimension_semantics=("parallel", "arbitrary")),
    )(hz0, x_seq, m_seq, abd,
      sp["win"], sp["bin"], sp["whid"], sp["bhid"], sp["wout"], sp["bout"],
      sp["wru_x"], sp["wru_h"], sp["bru"], sp["wc_x"], sp["wc_h"], sp["bc"])

    # hv_pre (all Euler pre-states, branch 0): (B, S, N, Dr)
    hv_pre = jnp.transpose(slab[0, :, :, :Dr].reshape(S, B, N, Dr), (1, 0, 2, 3))

    # Observation-step states for the head.
    obs = jnp.take(slab, obs_idx, axis=1)                  # (2, Tob, BN, Wslab)
    Tob = obs_idx.shape[0]
    h_pre_N = obs[0, :, :, :Dr]
    z_pre_N = obs[1, :, :, :Dr]
    h_post_N = obs[0, :, :, Dr:2 * Dr]

    M = Tob * BN
    hzp = jnp.concatenate([h_pre_N, z_pre_N, h_post_N], axis=-1).reshape(M, 3 * Dr)
    head_slab = output_head(hzp, prep["head"], Dr)

    def unflat(a):                                         # (M, C) -> (B, Tob, N, C)
        C = a.shape[-1]
        return jnp.transpose(a.reshape(Tob, B, N, C), (1, 0, 2, 3))

    h_pre_gated = unflat(head_slab[:, :Dr])
    h_post_gated = unflat(head_slab[:, 2 * Dr:3 * Dr])
    X_pred = unflat(head_slab[:, 3 * Dr:3 * Dr + dimIn])
    return X_pred, hv_pre, h_pre_gated, h_post_gated


# ----------------------------------------------------------------------------
# HGDCODE forward (PyTorch control flow; schedule computed on host from the
# timestamps, all compute runs in two pallas_calls).
# ----------------------------------------------------------------------------
def hgdcode_forward(prep, data_batch, delta_t, return_h=True):
    t = np.asarray(jax.device_get(data_batch["t"]))[0].astype(np.float64)
    T = int(t.shape[0])

    # Host-side schedule (exactly the PyTorch while-loop bookkeeping).
    traj, n_ids, obs_flags, obs_steps = [], [], [], []
    t_current, t_max, n = 0.0, float(t[-1]), 0
    s = 0
    while t_current <= t_max + 0.0001 * delta_t:
        is_obs = (n < T) and (t_current > t[n] - 0.0001 * delta_t)
        traj.append(t_current)
        n_ids.append(min(n, T - 1))
        obs_flags.append(1.0 if is_obs else 0.0)
        if is_obs:
            obs_steps.append(s)
            t_current = float(t[n])
            n += 1
        t_current += delta_t
        s += 1

    arrays = dict(step=prep["step"], head=prep["head"],
                  h0=prep["h0"], z0=prep["z0"])
    X_pred, hv_pre, h_pre_gated, h_post_gated = _device_forward(
        arrays,
        data_batch["values"], data_batch["masks"],
        data_batch["adjacent_matrices"],
        jnp.asarray(n_ids, jnp.int32),
        jnp.asarray(obs_flags, jnp.float32),
        jnp.asarray(obs_steps, jnp.int32),
        dt=float(delta_t), num_hidden=int(prep["num_hidden"]),
        K=int(prep["K"]))

    traj_t = jnp.asarray(traj, jnp.float32)
    X_std = None  # learnstd=False -> Output_std is None

    if return_h:
        return (X_pred[:, 1:], X_std, hv_pre, h_pre_gated, h_post_gated, traj_t)
    return (X_pred[:, 1:], X_std)


# ----------------------------------------------------------------------------
# Main
# ----------------------------------------------------------------------------
if __name__ == "__main__":
    B, T, N = 2, 4, 8
    dimIn, dimRnn, dimODEHidden, numODEHidden, K = 4, 32, 16, 1, 3
    delta_t = 0.5

    key = jax.random.PRNGKey(0)
    kd, kp = jax.random.split(key)
    kv, km, ka = jax.random.split(kd, 3)

    values = jax.random.normal(kv, (B, T, N, dimIn), jnp.float32)
    masks = (jax.random.uniform(km, (B, T, N, dimIn)) > 0.3).astype(jnp.float32)
    adj = jax.random.uniform(ka, (B, N, N), jnp.float32)
    adj = adj / jnp.sum(adj, axis=-1, keepdims=True)       # row-normalized
    t = jnp.tile(jnp.arange(T, dtype=jnp.float32)[None, :], (B, 1))

    data_batch = dict(t=t, masks=masks, values=values, adjacent_matrices=adj)
    raw_params = make_params(kp, dimIn, dimRnn, dimODEHidden, numODEHidden, K)
    prep = prepare_params(raw_params, dimIn, dimRnn, K)

    outs = hgdcode_forward(prep, data_batch, delta_t, return_h=True)
    X_pred, X_std, hv_pre, h_pre_gated, h_post_gated, traj_t = outs

    for o in (X_pred, hv_pre, h_pre_gated, h_post_gated, traj_t):
        jax.block_until_ready(o)

    assert X_pred.shape == (B, T - 1, N, dimIn), X_pred.shape
    assert h_pre_gated.shape == (B, T, N, dimRnn), h_pre_gated.shape
    assert h_post_gated.shape == (B, T, N, dimRnn), h_post_gated.shape
    assert bool(jnp.all(jnp.isfinite(X_pred)))
    assert bool(jnp.all(jnp.isfinite(hv_pre)))
    assert bool(jnp.all(jnp.isfinite(h_pre_gated)))
    assert bool(jnp.all(jnp.isfinite(h_post_gated)))
    print("KERNEL_OK")
</pallas_src>

<mosaic_0001>
module attributes {stable_mosaic.version = 11 : i64} {
  func.func @time_loop_kernel(%arg0: i32, %arg1: i32, %arg2: memref<1x16x32xf32, #tpu.memory_space<vmem>>, %arg3: memref<1x16x4xf32, #tpu.memory_space<vmem>>, %arg4: memref<1x16x1xf32, #tpu.memory_space<vmem>>, %arg5: memref<2x16x16xf32, #tpu.memory_space<vmem>>, %arg6: memref<1x3x32x16xf32, #tpu.memory_space<vmem>>, %arg7: memref<1x1x16xf32, #tpu.memory_space<vmem>>, %arg8: memref<1x1x3x16x16xf32, #tpu.memory_space<vmem>>, %arg9: memref<1x1x1x16xf32, #tpu.memory_space<vmem>>, %arg10: memref<1x3x16x32xf32, #tpu.memory_space<vmem>>, %arg11: memref<1x1x32xf32, #tpu.memory_space<vmem>>, %arg12: memref<1x3x4x64xf32, #tpu.memory_space<vmem>>, %arg13: memref<1x3x32x64xf32, #tpu.memory_space<vmem>>, %arg14: memref<1x1x64xf32, #tpu.memory_space<vmem>>, %arg15: memref<1x3x4x32xf32, #tpu.memory_space<vmem>>, %arg16: memref<1x3x32x32xf32, #tpu.memory_space<vmem>>, %arg17: memref<1x1x32xf32, #tpu.memory_space<vmem>>, %arg18: memref<1x1x16x128xf32, #tpu.memory_space<vmem>>, %arg19: memref<16x32xf32, #tpu.memory_space<vmem>>) attributes {dimension_semantics = [#tpu.dimension_semantics<parallel>, #tpu.dimension_semantics<arbitrary>], iteration_bounds = array<i64: 2, 7>, scalar_prefetch = 0 : i64, scratch_operands = 1 : i64, tpu.core_type = #tpu.core_type<tc>, window_params = [{transform_indices = @transform_0, window_bounds = array<i64: 1, 16, 32>}, {transform_indices = @transform_1, window_bounds = array<i64: 1, 16, 4>}, {transform_indices = @transform_2, window_bounds = array<i64: 1, 16, 1>}, {pipeline_mode = #tpu.pipeline_mode<synchronous>, transform_indices = @transform_3, window_bounds = array<i64: 2, 16, 16>}, {transform_indices = @transform_4, window_bounds = array<i64: 1, 3, 32, 16>}, {transform_indices = @transform_5, window_bounds = array<i64: 1, 1, 16>}, {transform_indices = @transform_6, window_bounds = array<i64: 1, 1, 3, 16, 16>}, {transform_indices = @transform_7, window_bounds = array<i64: 1, 1, 1, 16>}, {transform_indices = @transform_8, window_bounds = array<i64: 1, 3, 16, 32>}, {transform_indices = @transform_9, window_bounds = array<i64: 1, 1, 32>}, {transform_indices = @transform_10, window_bounds = array<i64: 1, 3, 4, 64>}, {transform_indices = @transform_11, window_bounds = array<i64: 1, 3, 32, 64>}, {transform_indices = @transform_12, window_bounds = array<i64: 1, 1, 64>}, {transform_indices = @transform_13, window_bounds = array<i64: 1, 3, 4, 32>}, {transform_indices = @transform_14, window_bounds = array<i64: 1, 3, 32, 32>}, {transform_indices = @transform_15, window_bounds = array<i64: 1, 1, 32>}, {transform_indices = @transform_16, window_bounds = array<i64: 1, 1, 16, 128>}]} {
    %c0_i32 = arith.constant 0 : i32
    %0 = arith.cmpi eq, %arg1, %c0_i32 : i32
    %1 = arith.extui %0 : i1 to i32
    %c0_i32_0 = arith.constant 0 : i32
    %2 = arith.cmpi ne, %1, %c0_i32_0 : i32
    scf.if %2 {
      %c0_190 = arith.constant 0 : index
      %c0_191 = arith.constant 0 : index
      %c0_192 = arith.constant 0 : index
      %179 = vector.load %arg2[%c0_190, %c0_191, %c0_192] : memref<1x16x32xf32, #tpu.memory_space<vmem>>, vector<1x16x32xf32>
      %180 = vector.shape_cast %179 : vector<1x16x32xf32> to vector<16x32xf32>
      %c0_193 = arith.constant 0 : index
      %c0_194 = arith.constant 0 : index
      %181 = vector.load %arg19[%c0_193, %c0_194] : memref<16x32xf32, #tpu.memory_space<vmem>>, vector<16x32xf32>
      tpu.vector_store %arg19[%c0_193, %c0_194], %180 {strides = array<i32>} : memref<16x32xf32, #tpu.memory_space<vmem>>, vector<16x32xf32>,
    } else {
    }
    %c0 = arith.constant 0 : index
    %c0_1 = arith.constant 0 : index
    %3 = vector.load %arg19[%c0, %c0_1] : memref<16x32xf32, #tpu.memory_space<vmem>>, vector<16x32xf32>
    %c0_2 = arith.constant 0 : index
    %c0_3 = arith.constant 0 : index
    %c0_4 = arith.constant 0 : index
    %4 = vector.load %arg3[%c0_2, %c0_3, %c0_4] : memref<1x16x4xf32, #tpu.memory_space<vmem>>, vector<1x16x4xf32>
    %5 = vector.shape_cast %4 : vector<1x16x4xf32> to vector<16x4xf32>
    %c0_5 = arith.constant 0 : index
    %c0_6 = arith.constant 0 : index
    %c0_7 = arith.constant 0 : index
    %6 = vector.load %arg4[%c0_5, %c0_6, %c0_7] : memref<1x16x1xf32, #tpu.memory_space<vmem>>, vector<1x16x1xf32>
    %7 = vector.shape_cast %6 : vector<1x16x1xf32> to vector<16x1xf32>
    %c0_8 = arith.constant 0 : index
    %c0_9 = arith.constant 0 : index
    %c0_10 = arith.constant 0 : index
    %8 = vector.load %arg5[%c0_8, %c0_9, %c0_10] : memref<2x16x16xf32, #tpu.memory_space<vmem>>, vector<1x16x16xf32>
    %9 = vector.shape_cast %8 : vector<1x16x16xf32> to vector<16x16xf32>
    %cst = arith.constant dense<0.000000e+00> : vector<16x32xf32>
    %10 = tpu.matmul %9, %3, %cst {dimension_numbers = #tpu.dot_dimension_numbers<[1], [0], [0], [1], [0, 0, 1, 1], [], []>} : vector<16x16xf32>, vector<16x32xf32>, vector<16x32xf32> -> vector<16x32xf32>
    %c1 = arith.constant 1 : index
    %c0_11 = arith.constant 0 : index
    %c0_12 = arith.constant 0 : index
    %11 = vector.load %arg5[%c1, %c0_11, %c0_12] : memref<2x16x16xf32, #tpu.memory_space<vmem>>, vector<1x16x16xf32>
    %12 = vector.shape_cast %11 : vector<1x16x16xf32> to vector<16x16xf32>
    %cst_13 = arith.constant dense<0.000000e+00> : vector<16x32xf32>
    %13 = tpu.matmul %12, %3, %cst_13 {dimension_numbers = #tpu.dot_dimension_numbers<[1], [0], [0], [1], [0, 0, 1, 1], [], []>} : vector<16x16xf32>, vector<16x32xf32>, vector<16x32xf32> -> vector<16x32xf32>
    %c0_14 = arith.constant 0 : index
    %c0_15 = arith.constant 0 : index
    %c0_16 = arith.constant 0 : index
    %14 = vector.load %arg7[%c0_14, %c0_15, %c0_16] : memref<1x1x16xf32, #tpu.memory_space<vmem>>, vector<1x1x16xf32>
    %15 = vector.shape_cast %14 : vector<1x1x16xf32> to vector<1x16xf32>
    %c0_17 = arith.constant 0 : index
    %c0_18 = arith.constant 0 : index
    %c0_19 = arith.constant 0 : index
    %c0_20 = arith.constant 0 : index
    %16 = vector.load %arg6[%c0_17, %c0_18, %c0_19, %c0_20] : memref<1x3x32x16xf32, #tpu.memory_space<vmem>>, vector<1x1x32x16xf32>
    %17 = vector.shape_cast %16 : vector<1x1x32x16xf32> to vector<32x16xf32>
    %cst_21 = arith.constant dense<0.000000e+00> : vector<16x16xf32>
    %18 = tpu.matmul %3, %17, %cst_21 {dimension_numbers = #tpu.dot_dimension_numbers<[1], [0], [0], [1], [0, 0, 1, 1], [], []>} : vector<16x32xf32>, vector<32x16xf32>, vector<16x16xf32> -> vector<16x16xf32>
    %c0_22 = arith.constant 0 : index
    %c1_23 = arith.constant 1 : index
    %c0_24 = arith.constant 0 : index
    %c0_25 = arith.constant 0 : index
    %19 = vector.load %arg6[%c0_22, %c1_23, %c0_24, %c0_25] : memref<1x3x32x16xf32, #tpu.memory_space<vmem>>, vector<1x1x32x16xf32>
    %20 = vector.shape_cast %19 : vector<1x1x32x16xf32> to vector<32x16xf32>
    %cst_26 = arith.constant dense<0.000000e+00> : vector<16x16xf32>
    %21 = tpu.matmul %10, %20, %cst_26 {dimension_numbers = #tpu.dot_dimension_numbers<[1], [0], [0], [1], [0, 0, 1, 1], [], []>} : vector<16x32xf32>, vector<32x16xf32>, vector<16x16xf32> -> vector<16x16xf32>
    %22 = arith.addf %18, %21 : vector<16x16xf32>
    %c0_27 = arith.constant 0 : index
    %c2 = arith.constant 2 : index
    %c0_28 = arith.constant 0 : index
    %c0_29 = arith.constant 0 : index
    %23 = vector.load %arg6[%c0_27, %c2, %c0_28, %c0_29] : memref<1x3x32x16xf32, #tpu.memory_space<vmem>>, vector<1x1x32x16xf32>
    %24 = vector.shape_cast %23 : vector<1x1x32x16xf32> to vector<32x16xf32>
    %cst_30 = arith.constant dense<0.000000e+00> : vector<16x16xf32>
    %25 = tpu.matmul %13, %24, %cst_30 {dimension_numbers = #tpu.dot_dimension_numbers<[1], [0], [0], [1], [0, 0, 1, 1], [], []>} : vector<16x32xf32>, vector<32x16xf32>, vector<16x16xf32> -> vector<16x16xf32>
    %26 = arith.addf %22, %25 : vector<16x16xf32>
    %27 = vector.broadcast %15 : vector<1x16xf32> to vector<16x16xf32>
    %28 = arith.addf %26, %27 : vector<16x16xf32>
    %29 = math.tanh %28 : vector<16x16xf32>
    %c0_31 = arith.constant 0 : index
    %c0_32 = arith.constant 0 : index
    %c0_33 = arith.constant 0 : index
    %30 = vector.load %arg5[%c0_31, %c0_32, %c0_33] : memref<2x16x16xf32, #tpu.memory_space<vmem>>, vector<1x16x16xf32>
    %31 = vector.shape_cast %30 : vector<1x16x16xf32> to vector<16x16xf32>
    %cst_34 = arith.constant dense<0.000000e+00> : vector<16x16xf32>
    %32 = tpu.matmul %31, %29, %cst_34 {dimension_numbers = #tpu.dot_dimension_numbers<[1], [0], [0], [1], [0, 0, 1, 1], [], []>} : vector<16x16xf32>, vector<16x16xf32>, vector<16x16xf32> -> vector<16x16xf32>
    %c1_35 = arith.constant 1 : index
    %c0_36 = arith.constant 0 : index
    %c0_37 = arith.constant 0 : index
    %33 = vector.load %arg5[%c1_35, %c0_36, %c0_37] : memref<2x16x16xf32, #tpu.memory_space<vmem>>, vector<1x16x16xf32>
    %34 = vector.shape_cast %33 : vector<1x16x16xf32> to vector<16x16xf32>
    %cst_38 = arith.constant dense<0.000000e+00> : vector<16x16xf32>
    %35 = tpu.matmul %34, %29, %cst_38 {dimension_numbers = #tpu.dot_dimension_numbers<[1], [0], [0], [1], [0, 0, 1, 1], [], []>} : vector<16x16xf32>, vector<16x16xf32>, vector<16x16xf32> -> vector<16x16xf32>
    %c0_39 = arith.constant 0 : index
    %c0_40 = arith.constant 0 : index
    %c0_41 = arith.constant 0 : index
    %c0_42 = arith.constant 0 : index
    %36 = vector.load %arg9[%c0_39, %c0_40, %c0_41, %c0_42] : memref<1x1x1x16xf32, #tpu.memory_space<vmem>>, vector<1x1x1x16xf32>
    %37 = vector.shape_cast %36 : vector<1x1x1x16xf32> to vector<1x16xf32>
    %c0_43 = arith.constant 0 : index
    %c0_44 = arith.constant 0 : index
    %c0_45 = arith.constant 0 : index
    %c0_46 = arith.constant 0 : index
    %c0_47 = arith.constant 0 : index
    %38 = vector.load %arg8[%c0_43, %c0_44, %c0_45, %c0_46, %c0_47] : memref<1x1x3x16x16xf32, #tpu.memory_space<vmem>>, vector<1x1x1x16x16xf32>
    %39 = vector.shape_cast %38 : vector<1x1x1x16x16xf32> to vector<16x16xf32>
    %cst_48 = arith.constant dense<0.000000e+00> : vector<16x16xf32>
    %40 = tpu.matmul %29, %39, %cst_48 {dimension_numbers = #tpu.dot_dimension_numbers<[1], [0], [0], [1], [0, 0, 1, 1], [], []>} : vector<16x16xf32>, vector<16x16xf32>, vector<16x16xf32> -> vector<16x16xf32>
    %c0_49 = arith.constant 0 : index
    %c0_50 = arith.constant 0 : index
    %c1_51 = arith.constant 1 : index
    %c0_52 = arith.constant 0 : index
    %c0_53 = arith.constant 0 : index
    %41 = vector.load %arg8[%c0_49, %c0_50, %c1_51, %c0_52, %c0_53] : memref<1x1x3x16x16xf32, #tpu.memory_space<vmem>>, vector<1x1x1x16x16xf32>
    %42 = vector.shape_cast %41 : vector<1x1x1x16x16xf32> to vector<16x16xf32>
    %cst_54 = arith.constant dense<0.000000e+00> : vector<16x16xf32>
    %43 = tpu.matmul %32, %42, %cst_54 {dimension_numbers = #tpu.dot_dimension_numbers<[1], [0], [0], [1], [0, 0, 1, 1], [], []>} : vector<16x16xf32>, vector<16x16xf32>, vector<16x16xf32> -> vector<16x16xf32>
    %44 = arith.addf %40, %43 : vector<16x16xf32>
    %c0_55 = arith.constant 0 : index
    %c0_56 = arith.constant 0 : index
    %c2_57 = arith.constant 2 : index
    %c0_58 = arith.constant 0 : index
    %c0_59 = arith.constant 0 : index
    %45 = vector.load %arg8[%c0_55, %c0_56, %c2_57, %c0_58, %c0_59] : memref<1x1x3x16x16xf32, #tpu.memory_space<vmem>>, vector<1x1x1x16x16xf32>
    %46 = vector.shape_cast %45 : vector<1x1x1x16x16xf32> to vector<16x16xf32>
    %cst_60 = arith.constant dense<0.000000e+00> : vector<16x16xf32>
    %47 = tpu.matmul %35, %46, %cst_60 {dimension_numbers = #tpu.dot_dimension_numbers<[1], [0], [0], [1], [0, 0, 1, 1], [], []>} : vector<16x16xf32>, vector<16x16xf32>, vector<16x16xf32> -> vector<16x16xf32>
    %48 = arith.addf %44, %47 : vector<16x16xf32>
    %49 = vector.broadcast %37 : vector<1x16xf32> to vector<16x16xf32>
    %50 = arith.addf %48, %49 : vector<16x16xf32>
    %51 = math.tanh %50 : vector<16x16xf32>
    %c0_61 = arith.constant 0 : index
    %c0_62 = arith.constant 0 : index
    %c0_63 = arith.constant 0 : index
    %52 = vector.load %arg5[%c0_61, %c0_62, %c0_63] : memref<2x16x16xf32, #tpu.memory_space<vmem>>, vector<1x16x16xf32>
    %53 = vector.shape_cast %52 : vector<1x16x16xf32> to vector<16x16xf32>
    %cst_64 = arith.constant dense<0.000000e+00> : vector<16x16xf32>
    %54 = tpu.matmul %53, %51, %cst_64 {dimension_numbers = #tpu.dot_dimension_numbers<[1], [0], [0], [1], [0, 0, 1, 1], [], []>} : vector<16x16xf32>, vector<16x16xf32>, vector<16x16xf32> -> vector<16x16xf32>
    %c1_65 = arith.constant 1 : index
    %c0_66 = arith.constant 0 : index
    %c0_67 = arith.constant 0 : index
    %55 = vector.load %arg5[%c1_65, %c0_66, %c0_67] : memref<2x16x16xf32, #tpu.memory_space<vmem>>, vector<1x16x16xf32>
    %56 = vector.shape_cast %55 : vector<1x16x16xf32> to vector<16x16xf32>
    %cst_68 = arith.constant dense<0.000000e+00> : vector<16x16xf32>
    %57 = tpu.matmul %56, %51, %cst_68 {dimension_numbers = #tpu.dot_dimension_numbers<[1], [0], [0], [1], [0, 0, 1, 1], [], []>} : vector<16x16xf32>, vector<16x16xf32>, vector<16x16xf32> -> vector<16x16xf32>
    %c0_69 = arith.constant 0 : index
    %c0_70 = arith.constant 0 : index
    %c0_71 = arith.constant 0 : index
    %58 = vector.load %arg11[%c0_69, %c0_70, %c0_71] : memref<1x1x32xf32, #tpu.memory_space<vmem>>, vector<1x1x32xf32>
    %59 = vector.shape_cast %58 : vector<1x1x32xf32> to vector<1x32xf32>
    %c0_72 = arith.constant 0 : index
    %c0_73 = arith.constant 0 : index
    %c0_74 = arith.constant 0 : index
    %c0_75 = arith.constant 0 : index
    %60 = vector.load %arg10[%c0_72, %c0_73, %c0_74, %c0_75] : memref<1x3x16x32xf32, #tpu.memory_space<vmem>>, vector<1x1x16x32xf32>
    %61 = vector.shape_cast %60 : vector<1x1x16x32xf32> to vector<16x32xf32>
    %cst_76 = arith.constant dense<0.000000e+00> : vector<16x32xf32>
    %62 = tpu.matmul %51, %61, %cst_76 {dimension_numbers = #tpu.dot_dimension_numbers<[1], [0], [0], [1], [0, 0, 1, 1], [], []>} : vector<16x16xf32>, vector<16x32xf32>, vector<16x32xf32> -> vector<16x32xf32>
    %c0_77 = arith.constant 0 : index
    %c1_78 = arith.constant 1 : index
    %c0_79 = arith.constant 0 : index
    %c0_80 = arith.constant 0 : index
    %63 = vector.load %arg10[%c0_77, %c1_78, %c0_79, %c0_80] : memref<1x3x16x32xf32, #tpu.memory_space<vmem>>, vector<1x1x16x32xf32>
    %64 = vector.shape_cast %63 : vector<1x1x16x32xf32> to vector<16x32xf32>
    %cst_81 = arith.constant dense<0.000000e+00> : vector<16x32xf32>
    %65 = tpu.matmul %54, %64, %cst_81 {dimension_numbers = #tpu.dot_dimension_numbers<[1], [0], [0], [1], [0, 0, 1, 1], [], []>} : vector<16x16xf32>, vector<16x32xf32>, vector<16x32xf32> -> vector<16x32xf32>
    %66 = arith.addf %62, %65 : vector<16x32xf32>
    %c0_82 = arith.constant 0 : index
    %c2_83 = arith.constant 2 : index
    %c0_84 = arith.constant 0 : index
    %c0_85 = arith.constant 0 : index
    %67 = vector.load %arg10[%c0_82, %c2_83, %c0_84, %c0_85] : memref<1x3x16x32xf32, #tpu.memory_space<vmem>>, vector<1x1x16x32xf32>
    %68 = vector.shape_cast %67 : vector<1x1x16x32xf32> to vector<16x32xf32>
    %cst_86 = arith.constant dense<0.000000e+00> : vector<16x32xf32>
    %69 = tpu.matmul %57, %68, %cst_86 {dimension_numbers = #tpu.dot_dimension_numbers<[1], [0], [0], [1], [0, 0, 1, 1], [], []>} : vector<16x16xf32>, vector<16x32xf32>, vector<16x32xf32> -> vector<16x32xf32>
    %70 = arith.addf %66, %69 : vector<16x32xf32>
    %71 = vector.broadcast %59 : vector<1x32xf32> to vector<16x32xf32>
    %72 = arith.addf %70, %71 : vector<16x32xf32>
    %cst_87 = arith.constant 5.000000e-01 : f32
    %73 = vector.broadcast %cst_87 : f32 to vector<16x32xf32>
    %74 = arith.mulf %73, %72 : vector<16x32xf32>
    %75 = arith.addf %3, %74 : vector<16x32xf32>
    %c0_88 = arith.constant 0 : index
    %c0_89 = arith.constant 0 : index
    %c0_90 = arith.constant 0 : index
    %76 = vector.load %arg5[%c0_88, %c0_89, %c0_90] : memref<2x16x16xf32, #tpu.memory_space<vmem>>, vector<1x16x16xf32>
    %77 = vector.shape_cast %76 : vector<1x16x16xf32> to vector<16x16xf32>
    %cst_91 = arith.constant dense<0.000000e+00> : vector<16x4xf32>
    %78 = tpu.matmul %77, %5, %cst_91 {dimension_numbers = #tpu.dot_dimension_numbers<[1], [0], [0], [1], [0, 0, 1, 1], [], []>} : vector<16x16xf32>, vector<16x4xf32>, vector<16x4xf32> -> vector<16x4xf32>
    %c1_92 = arith.constant 1 : index
    %c0_93 = arith.constant 0 : index
    %c0_94 = arith.constant 0 : index
    %79 = vector.load %arg5[%c1_92, %c0_93, %c0_94] : memref<2x16x16xf32, #tpu.memory_space<vmem>>, vector<1x16x16xf32>
    %80 = vector.shape_cast %79 : vector<1x16x16xf32> to vector<16x16xf32>
    %cst_95 = arith.constant dense<0.000000e+00> : vector<16x4xf32>
    %81 = tpu.matmul %80, %5, %cst_95 {dimension_numbers = #tpu.dot_dimension_numbers<[1], [0], [0], [1], [0, 0, 1, 1], [], []>} : vector<16x16xf32>, vector<16x4xf32>, vector<16x4xf32> -> vector<16x4xf32>
    %c0_96 = arith.constant 0 : index
    %c0_97 = arith.constant 0 : index
    %c0_98 = arith.constant 0 : index
    %82 = vector.load %arg5[%c0_96, %c0_97, %c0_98] : memref<2x16x16xf32, #tpu.memory_space<vmem>>, vector<1x16x16xf32>
    %83 = vector.shape_cast %82 : vector<1x16x16xf32> to vector<16x16xf32>
    %cst_99 = arith.constant dense<0.000000e+00> : vector<16x32xf32>
    %84 = tpu.matmul %83, %75, %cst_99 {dimension_numbers = #tpu.dot_dimension_numbers<[1], [0], [0], [1], [0, 0, 1, 1], [], []>} : vector<16x16xf32>, vector<16x32xf32>, vector<16x32xf32> -> vector<16x32xf32>
    %c1_100 = arith.constant 1 : index
    %c0_101 = arith.constant 0 : index
    %c0_102 = arith.constant 0 : index
    %85 = vector.load %arg5[%c1_100, %c0_101, %c0_102] : memref<2x16x16xf32, #tpu.memory_space<vmem>>, vector<1x16x16xf32>
    %86 = vector.shape_cast %85 : vector<1x16x16xf32> to vector<16x16xf32>
    %cst_103 = arith.constant dense<0.000000e+00> : vector<16x32xf32>
    %87 = tpu.matmul %86, %75, %cst_103 {dimension_numbers = #tpu.dot_dimension_numbers<[1], [0], [0], [1], [0, 0, 1, 1], [], []>} : vector<16x16xf32>, vector<16x32xf32>, vector<16x32xf32> -> vector<16x32xf32>
    %c0_104 = arith.constant 0 : index
    %c0_105 = arith.constant 0 : index
    %c0_106 = arith.constant 0 : index
    %88 = vector.load %arg14[%c0_104, %c0_105, %c0_106] : memref<1x1x64xf32, #tpu.memory_space<vmem>>, vector<1x1x64xf32>
    %89 = vector.shape_cast %88 : vector<1x1x64xf32> to vector<1x64xf32>
    %c0_107 = arith.constant 0 : index
    %c0_108 = arith.constant 0 : index
    %c0_109 = arith.constant 0 : index
    %c0_110 = arith.constant 0 : index
    %90 = vector.load %arg12[%c0_107, %c0_108, %c0_109, %c0_110] : memref<1x3x4x64xf32, #tpu.memory_space<vmem>>, vector<1x1x4x64xf32>
    %91 = vector.shape_cast %90 : vector<1x1x4x64xf32> to vector<4x64xf32>
    %cst_111 = arith.constant dense<0.000000e+00> : vector<16x64xf32>
    %92 = tpu.matmul %5, %91, %cst_111 {dimension_numbers = #tpu.dot_dimension_numbers<[1], [0], [0], [1], [0, 0, 1, 1], [], []>} : vector<16x4xf32>, vector<4x64xf32>, vector<16x64xf32> -> vector<16x64xf32>
    %c0_112 = arith.constant 0 : index
    %c1_113 = arith.constant 1 : index
    %c0_114 = arith.constant 0 : index
    %c0_115 = arith.constant 0 : index
    %93 = vector.load %arg12[%c0_112, %c1_113, %c0_114, %c0_115] : memref<1x3x4x64xf32, #tpu.memory_space<vmem>>, vector<1x1x4x64xf32>
    %94 = vector.shape_cast %93 : vector<1x1x4x64xf32> to vector<4x64xf32>
    %cst_116 = arith.constant dense<0.000000e+00> : vector<16x64xf32>
    %95 = tpu.matmul %78, %94, %cst_116 {dimension_numbers = #tpu.dot_dimension_numbers<[1], [0], [0], [1], [0, 0, 1, 1], [], []>} : vector<16x4xf32>, vector<4x64xf32>, vector<16x64xf32> -> vector<16x64xf32>
    %96 = arith.addf %92, %95 : vector<16x64xf32>
    %c0_117 = arith.constant 0 : index
    %c2_118 = arith.constant 2 : index
    %c0_119 = arith.constant 0 : index
    %c0_120 = arith.constant 0 : index
    %97 = vector.load %arg12[%c0_117, %c2_118, %c0_119, %c0_120] : memref<1x3x4x64xf32, #tpu.memory_space<vmem>>, vector<1x1x4x64xf32>
    %98 = vector.shape_cast %97 : vector<1x1x4x64xf32> to vector<4x64xf32>
    %cst_121 = arith.constant dense<0.000000e+00> : vector<16x64xf32>
    %99 = tpu.matmul %81, %98, %cst_121 {dimension_numbers = #tpu.dot_dimension_numbers<[1], [0], [0], [1], [0, 0, 1, 1], [], []>} : vector<16x4xf32>, vector<4x64xf32>, vector<16x64xf32> -> vector<16x64xf32>
    %100 = arith.addf %96, %99 : vector<16x64xf32>
    %101 = vector.broadcast %89 : vector<1x64xf32> to vector<16x64xf32>
    %102 = arith.addf %100, %101 : vector<16x64xf32>
    %c0_122 = arith.constant 0 : index
    %c0_123 = arith.constant 0 : index
    %c0_124 = arith.constant 0 : index
    %c0_125 = arith.constant 0 : index
    %103 = vector.load %arg13[%c0_122, %c0_123, %c0_124, %c0_125] : memref<1x3x32x64xf32, #tpu.memory_space<vmem>>, vector<1x1x32x64xf32>
    %104 = vector.shape_cast %103 : vector<1x1x32x64xf32> to vector<32x64xf32>
    %cst_126 = arith.constant dense<0.000000e+00> : vector<16x64xf32>
    %105 = tpu.matmul %75, %104, %cst_126 {dimension_numbers = #tpu.dot_dimension_numbers<[1], [0], [0], [1], [0, 0, 1, 1], [], []>} : vector<16x32xf32>, vector<32x64xf32>, vector<16x64xf32> -> vector<16x64xf32>
    %c0_127 = arith.constant 0 : index
    %c1_128 = arith.constant 1 : index
    %c0_129 = arith.constant 0 : index
    %c0_130 = arith.constant 0 : index
    %106 = vector.load %arg13[%c0_127, %c1_128, %c0_129, %c0_130] : memref<1x3x32x64xf32, #tpu.memory_space<vmem>>, vector<1x1x32x64xf32>
    %107 = vector.shape_cast %106 : vector<1x1x32x64xf32> to vector<32x64xf32>
    %cst_131 = arith.constant dense<0.000000e+00> : vector<16x64xf32>
    %108 = tpu.matmul %84, %107, %cst_131 {dimension_numbers = #tpu.dot_dimension_numbers<[1], [0], [0], [1], [0, 0, 1, 1], [], []>} : vector<16x32xf32>, vector<32x64xf32>, vector<16x64xf32> -> vector<16x64xf32>
    %109 = arith.addf %105, %108 : vector<16x64xf32>
    %c0_132 = arith.constant 0 : index
    %c2_133 = arith.constant 2 : index
    %c0_134 = arith.constant 0 : index
    %c0_135 = arith.constant 0 : index
    %110 = vector.load %arg13[%c0_132, %c2_133, %c0_134, %c0_135] : memref<1x3x32x64xf32, #tpu.memory_space<vmem>>, vector<1x1x32x64xf32>
    %111 = vector.shape_cast %110 : vector<1x1x32x64xf32> to vector<32x64xf32>
    %cst_136 = arith.constant dense<0.000000e+00> : vector<16x64xf32>
    %112 = tpu.matmul %87, %111, %cst_136 {dimension_numbers = #tpu.dot_dimension_numbers<[1], [0], [0], [1], [0, 0, 1, 1], [], []>} : vector<16x32xf32>, vector<32x64xf32>, vector<16x64xf32> -> vector<16x64xf32>
    %113 = arith.addf %109, %112 : vector<16x64xf32>
    %cst_137 = arith.constant 0.000000e+00 : f32
    %114 = vector.broadcast %cst_137 : f32 to vector<16x64xf32>
    %115 = arith.addf %113, %114 : vector<16x64xf32>
    %116 = arith.addf %102, %115 : vector<16x64xf32>
    %117 = arith.negf %116 : vector<16x64xf32>
    %118 = math.exp %117 : vector<16x64xf32>
    %cst_138 = arith.constant 1.000000e+00 : f32
    %119 = vector.broadcast %cst_138 : f32 to vector<16x64xf32>
    %120 = arith.addf %119, %118 : vector<16x64xf32>
    %121 = arith.divf %119, %120 : vector<16x64xf32>
    %122 = vector.extract_strided_slice %121 {offsets = [0, 0], sizes = [16, 32], strides = [1, 1]} : vector<16x64xf32> to vector<16x32xf32>
    %123 = vector.extract_strided_slice %121 {offsets = [0, 32], sizes = [16, 32], strides = [1, 1]} : vector<16x64xf32> to vector<16x32xf32>
    %c0_139 = arith.constant 0 : index
    %c0_140 = arith.constant 0 : index
    %c0_141 = arith.constant 0 : index
    %124 = vector.load %arg17[%c0_139, %c0_140, %c0_141] : memref<1x1x32xf32, #tpu.memory_space<vmem>>, vector<1x1x32xf32>
    %125 = vector.shape_cast %124 : vector<1x1x32xf32> to vector<1x32xf32>
    %c0_142 = arith.constant 0 : index
    %c0_143 = arith.constant 0 : index
    %c0_144 = arith.constant 0 : index
    %c0_145 = arith.constant 0 : index
    %126 = vector.load %arg15[%c0_142, %c0_143, %c0_144, %c0_145] : memref<1x3x4x32xf32, #tpu.memory_space<vmem>>, vector<1x1x4x32xf32>
    %127 = vector.shape_cast %126 : vector<1x1x4x32xf32> to vector<4x32xf32>
    %cst_146 = arith.constant dense<0.000000e+00> : vector<16x32xf32>
    %128 = tpu.matmul %5, %127, %cst_146 {dimension_numbers = #tpu.dot_dimension_numbers<[1], [0], [0], [1], [0, 0, 1, 1], [], []>} : vector<16x4xf32>, vector<4x32xf32>, vector<16x32xf32> -> vector<16x32xf32>
    %c0_147 = arith.constant 0 : index
    %c1_148 = arith.constant 1 : index
    %c0_149 = arith.constant 0 : index
    %c0_150 = arith.constant 0 : index
    %129 = vector.load %arg15[%c0_147, %c1_148, %c0_149, %c0_150] : memref<1x3x4x32xf32, #tpu.memory_space<vmem>>, vector<1x1x4x32xf32>
    %130 = vector.shape_cast %129 : vector<1x1x4x32xf32> to vector<4x32xf32>
    %cst_151 = arith.constant dense<0.000000e+00> : vector<16x32xf32>
    %131 = tpu.matmul %78, %130, %cst_151 {dimension_numbers = #tpu.dot_dimension_numbers<[1], [0], [0], [1], [0, 0, 1, 1], [], []>} : vector<16x4xf32>, vector<4x32xf32>, vector<16x32xf32> -> vector<16x32xf32>
    %132 = arith.addf %128, %131 : vector<16x32xf32>
    %c0_152 = arith.constant 0 : index
    %c2_153 = arith.constant 2 : index
    %c0_154 = arith.constant 0 : index
    %c0_155 = arith.constant 0 : index
    %133 = vector.load %arg15[%c0_152, %c2_153, %c0_154, %c0_155] : memref<1x3x4x32xf32, #tpu.memory_space<vmem>>, vector<1x1x4x32xf32>
    %134 = vector.shape_cast %133 : vector<1x1x4x32xf32> to vector<4x32xf32>
    %cst_156 = arith.constant dense<0.000000e+00> : vector<16x32xf32>
    %135 = tpu.matmul %81, %134, %cst_156 {dimension_numbers = #tpu.dot_dimension_numbers<[1], [0], [0], [1], [0, 0, 1, 1], [], []>} : vector<16x4xf32>, vector<4x32xf32>, vector<16x32xf32> -> vector<16x32xf32>
    %136 = arith.addf %132, %135 : vector<16x32xf32>
    %137 = vector.broadcast %125 : vector<1x32xf32> to vector<16x32xf32>
    %138 = arith.addf %136, %137 : vector<16x32xf32>
    %139 = arith.mulf %122, %75 : vector<16x32xf32>
    %c0_157 = arith.constant 0 : index
    %c0_158 = arith.constant 0 : index
    %c0_159 = arith.constant 0 : index
    %140 = vector.load %arg5[%c0_157, %c0_158, %c0_159] : memref<2x16x16xf32, #tpu.memory_space<vmem>>, vector<1x16x16xf32>
    %141 = vector.shape_cast %140 : vector<1x16x16xf32> to vector<16x16xf32>
    %cst_160 = arith.constant dense<0.000000e+00> : vector<16x32xf32>
    %142 = tpu.matmul %141, %139, %cst_160 {dimension_numbers = #tpu.dot_dimension_numbers<[1], [0], [0], [1], [0, 0, 1, 1], [], []>} : vector<16x16xf32>, vector<16x32xf32>, vector<16x32xf32> -> vector<16x32xf32>
    %c1_161 = arith.constant 1 : index
    %c0_162 = arith.constant 0 : index
    %c0_163 = arith.constant 0 : index
    %143 = vector.load %arg5[%c1_161, %c0_162, %c0_163] : memref<2x16x16xf32, #tpu.memory_space<vmem>>, vector<1x16x16xf32>
    %144 = vector.shape_cast %143 : vector<1x16x16xf32> to vector<16x16xf32>
    %cst_164 = arith.constant dense<0.000000e+00> : vector<16x32xf32>
    %145 = tpu.matmul %144, %139, %cst_164 {dimension_numbers = #tpu.dot_dimension_numbers<[1], [0], [0], [1], [0, 0, 1, 1], [], []>} : vector<16x16xf32>, vector<16x32xf32>, vector<16x32xf32> -> vector<16x32xf32>
    %c0_165 = arith.constant 0 : index
    %c0_166 = arith.constant 0 : index
    %c0_167 = arith.constant 0 : index
    %c0_168 = arith.constant 0 : index
    %146 = vector.load %arg16[%c0_165, %c0_166, %c0_167, %c0_168] : memref<1x3x32x32xf32, #tpu.memory_space<vmem>>, vector<1x1x32x32xf32>
    %147 = vector.shape_cast %146 : vector<1x1x32x32xf32> to vector<32x32xf32>
    %cst_169 = arith.constant dense<0.000000e+00> : vector<16x32xf32>
    %148 = tpu.matmul %139, %147, %cst_169 {dimension_numbers = #tpu.dot_dimension_numbers<[1], [0], [0], [1], [0, 0, 1, 1], [], []>} : vector<16x32xf32>, vector<32x32xf32>, vector<16x32xf32> -> vector<16x32xf32>
    %c0_170 = arith.constant 0 : index
    %c1_171 = arith.constant 1 : index
    %c0_172 = arith.constant 0 : index
    %c0_173 = arith.constant 0 : index
    %149 = vector.load %arg16[%c0_170, %c1_171, %c0_172, %c0_173] : memref<1x3x32x32xf32, #tpu.memory_space<vmem>>, vector<1x1x32x32xf32>
    %150 = vector.shape_cast %149 : vector<1x1x32x32xf32> to vector<32x32xf32>
    %cst_174 = arith.constant dense<0.000000e+00> : vector<16x32xf32>
    %151 = tpu.matmul %142, %150, %cst_174 {dimension_numbers = #tpu.dot_dimension_numbers<[1], [0], [0], [1], [0, 0, 1, 1], [], []>} : vector<16x32xf32>, vector<32x32xf32>, vector<16x32xf32> -> vector<16x32xf32>
    %152 = arith.addf %148, %151 : vector<16x32xf32>
    %c0_175 = arith.constant 0 : index
    %c2_176 = arith.constant 2 : index
    %c0_177 = arith.constant 0 : index
    %c0_178 = arith.constant 0 : index
    %153 = vector.load %arg16[%c0_175, %c2_176, %c0_177, %c0_178] : memref<1x3x32x32xf32, #tpu.memory_space<vmem>>, vector<1x1x32x32xf32>
    %154 = vector.shape_cast %153 : vector<1x1x32x32xf32> to vector<32x32xf32>
    %cst_179 = arith.constant dense<0.000000e+00> : vector<16x32xf32>
    %155 = tpu.matmul %145, %154, %cst_179 {dimension_numbers = #tpu.dot_dimension_numbers<[1], [0], [0], [1], [0, 0, 1, 1], [], []>} : vector<16x32xf32>, vector<32x32xf32>, vector<16x32xf32> -> vector<16x32xf32>
    %156 = arith.addf %152, %155 : vector<16x32xf32>
    %cst_180 = arith.constant 0.000000e+00 : f32
    %157 = vector.broadcast %cst_180 : f32 to vector<16x32xf32>
    %158 = arith.addf %156, %157 : vector<16x32xf32>
    %159 = arith.addf %138, %158 : vector<16x32xf32>
    %160 = math.tanh %159 : vector<16x32xf32>
    %161 = arith.mulf %123, %75 : vector<16x32xf32>
    %cst_181 = arith.constant 1.000000e+00 : f32
    %162 = vector.broadcast %cst_181 : f32 to vector<16x32xf32>
    %163 = arith.subf %162, %123 : vector<16x32xf32>
    %164 = arith.mulf %163, %160 : vector<16x32xf32>
    %165 = arith.addf %161, %164 : vector<16x32xf32>
    %cst_182 = arith.constant 1.000000e+00 : f32
    %166 = vector.broadcast %cst_182 : f32 to vector<16x1xf32>
    %167 = arith.subf %166, %7 : vector<16x1xf32>
    %168 = vector.broadcast %167 : vector<16x1xf32> to vector<16x32xf32>
    %169 = arith.mulf %75, %168 : vector<16x32xf32>
    %170 = vector.broadcast %7 : vector<16x1xf32> to vector<16x32xf32>
    %171 = arith.mulf %165, %170 : vector<16x32xf32>
    %172 = arith.addf %169, %171 : vector<16x32xf32>
    %c0_183 = arith.constant 0 : index
    %c0_184 = arith.constant 0 : index
    %173 = vector.load %arg19[%c0_183, %c0_184] : memref<16x32xf32, #tpu.memory_space<vmem>>, vector<16x32xf32>
    tpu.vector_store %arg19[%c0_183, %c0_184], %172 {strides = array<i32>} : memref<16x32xf32, #tpu.memory_space<vmem>>, vector<16x32xf32>,
    %cst_185 = arith.constant 0.000000e+00 : f32
    %174 = vector.broadcast %cst_185 : f32 to vector<16x64xf32>
    %175 = tpu.concatenate %75, %172, %174 in 1 : vector<16x32xf32>, vector<16x32xf32>, vector<16x64xf32> -> vector<16x128xf32>
    %c0_186 = arith.constant 0 : index
    %c0_187 = arith.constant 0 : index
    %c0_188 = arith.constant 0 : index
    %c0_189 = arith.constant 0 : index
    %176 = vector.load %arg18[%c0_186, %c0_187, %c0_188, %c0_189] : memref<1x1x16x128xf32, #tpu.memory_space<vmem>>, vector<1x1x16x128xf32>
    %177 = vector.shape_cast %176 : vector<1x1x16x128xf32> to vector<16x128xf32>
    %178 = vector.shape_cast %175 : vector<16x128xf32> to vector<1x1x16x128xf32>
    tpu.vector_store %arg18[%c0_186, %c0_187, %c0_188, %c0_189], %178 {strides = array<i32>} : memref<1x1x16x128xf32, #tpu.memory_space<vmem>>, vector<1x1x16x128xf32>,
    return
  }
  func.func @transform_0(%arg0: i32, %arg1: i32) -> (i32, i32, i32) {
    %c0_i32 = arith.constant 0 : i32
    %c0_i32_0 = arith.constant 0 : i32
    %c0_i32_1 = arith.constant 0 : i32
    return %arg0, %c0_i32, %c0_i32_0 : i32, i32, i32
  }
  func.func @transform_1(%arg0: i32, %arg1: i32) -> (i32, i32, i32) {
    %c0_i32 = arith.constant 0 : i32
    %c0_i32_0 = arith.constant 0 : i32
    %c0_i32_1 = arith.constant 0 : i32
    return %arg1, %c0_i32, %c0_i32_0 : i32, i32, i32
  }
  func.func @transform_2(%arg0: i32, %arg1: i32) -> (i32, i32, i32) {
    %c0_i32 = arith.constant 0 : i32
    %c0_i32_0 = arith.constant 0 : i32
    %c0_i32_1 = arith.constant 0 : i32
    return %arg1, %c0_i32, %c0_i32_0 : i32, i32, i32
  }
  func.func @transform_3(%arg0: i32, %arg1: i32) -> (i32, i32, i32) {
    %c0_i32 = arith.constant 0 : i32
    %c0_i32_0 = arith.constant 0 : i32
    %c0_i32_1 = arith.constant 0 : i32
    %c0_i32_2 = arith.constant 0 : i32
    return %c0_i32, %c0_i32_0, %c0_i32_1 : i32, i32, i32
  }
  func.func @transform_4(%arg0: i32, %arg1: i32) -> (i32, i32, i32, i32) {
    %c0_i32 = arith.constant 0 : i32
    %c0_i32_0 = arith.constant 0 : i32
    %c0_i32_1 = arith.constant 0 : i32
    %c0_i32_2 = arith.constant 0 : i32
    return %arg0, %c0_i32, %c0_i32_0, %c0_i32_1 : i32, i32, i32, i32
  }
  func.func @transform_5(%arg0: i32, %arg1: i32) -> (i32, i32, i32) {
    %c0_i32 = arith.constant 0 : i32
    %c0_i32_0 = arith.constant 0 : i32
    %c0_i32_1 = arith.constant 0 : i32
    return %arg0, %c0_i32, %c0_i32_0 : i32, i32, i32
  }
  func.func @transform_6(%arg0: i32, %arg1: i32) -> (i32, i32, i32, i32, i32) {
    %c0_i32 = arith.constant 0 : i32
    %c0_i32_0 = arith.constant 0 : i32
    %c0_i32_1 = arith.constant 0 : i32
    %c0_i32_2 = arith.constant 0 : i32
    %c0_i32_3 = arith.constant 0 : i32
    return %arg0, %c0_i32, %c0_i32_0, %c0_i32_1, %c0_i32_2 : i32, i32, i32, i32, i32
  }
  func.func @transform_7(%arg0: i32, %arg1: i32) -> (i32, i32, i32, i32) {
    %c0_i32 = arith.constant 0 : i32
    %c0_i32_0 = arith.constant 0 : i32
    %c0_i32_1 = arith.constant 0 : i32
    %c0_i32_2 = arith.constant 0 : i32
    return %arg0, %c0_i32, %c0_i32_0, %c0_i32_1 : i32, i32, i32, i32
  }
  func.func @transform_8(%arg0: i32, %arg1: i32) -> (i32, i32, i32, i32) {
    %c0_i32 = arith.constant 0 : i32
    %c0_i32_0 = arith.constant 0 : i32
    %c0_i32_1 = arith.constant 0 : i32
    %c0_i32_2 = arith.constant 0 : i32
    return %arg0, %c0_i32, %c0_i32_0, %c0_i32_1 : i32, i32, i32, i32
  }
  func.func @transform_9(%arg0: i32, %arg1: i32) -> (i32, i32, i32) {
    %c0_i32 = arith.constant 0 : i32
    %c0_i32_0 = arith.constant 0 : i32
    %c0_i32_1 = arith.constant 0 : i32
    return %arg0, %c0_i32, %c0_i32_0 : i32, i32, i32
  }
  func.func @transform_10(%arg0: i32, %arg1: i32) -> (i32, i32, i32, i32) {
    %c0_i32 = arith.constant 0 : i32
    %c0_i32_0 = arith.constant 0 : i32
    %c0_i32_1 = arith.constant 0 : i32
    %c0_i32_2 = arith.constant 0 : i32
    return %arg0, %c0_i32, %c0_i32_0, %c0_i32_1 : i32, i32, i32, i32
  }
  func.func @transform_11(%arg0: i32, %arg1: i32) -> (i32, i32, i32, i32) {
    %c0_i32 = arith.constant 0 : i32
    %c0_i32_0 = arith.constant 0 : i32
    %c0_i32_1 = arith.constant 0 : i32
    %c0_i32_2 = arith.constant 0 : i32
    return %arg0, %c0_i32, %c0_i32_0, %c0_i32_1 : i32, i32, i32, i32
  }
  func.func @transform_12(%arg0: i32, %arg1: i32) -> (i32, i32, i32) {
    %c0_i32 = arith.constant 0 : i32
    %c0_i32_0 = arith.constant 0 : i32
    %c0_i32_1 = arith.constant 0 : i32
    return %arg0, %c0_i32, %c0_i32_0 : i32, i32, i32
  }
  func.func @transform_13(%arg0: i32, %arg1: i32) -> (i32, i32, i32, i32) {
    %c0_i32 = arith.constant 0 : i32
    %c0_i32_0 = arith.constant 0 : i32
    %c0_i32_1 = arith.constant 0 : i32
    %c0_i32_2 = arith.constant 0 : i32
    return %arg0, %c0_i32, %c0_i32_0, %c0_i32_1 : i32, i32, i32, i32
  }
  func.func @transform_14(%arg0: i32, %arg1: i32) -> (i32, i32, i32, i32) {
    %c0_i32 = arith.constant 0 : i32
    %c0_i32_0 = arith.constant 0 : i32
    %c0_i32_1 = arith.constant 0 : i32
    %c0_i32_2 = arith.constant 0 : i32
    return %arg0, %c0_i32, %c0_i32_0, %c0_i32_1 : i32, i32, i32, i32
  }
  func.func @transform_15(%arg0: i32, %arg1: i32) -> (i32, i32, i32) {
    %c0_i32 = arith.constant 0 : i32
    %c0_i32_0 = arith.constant 0 : i32
    %c0_i32_1 = arith.constant 0 : i32
    return %arg0, %c0_i32, %c0_i32_0 : i32, i32, i32
  }
  func.func @transform_16(%arg0: i32, %arg1: i32) -> (i32, i32, i32, i32) {
    %c0_i32 = arith.constant 0 : i32
    %c0_i32_0 = arith.constant 0 : i32
    %c0_i32_1 = arith.constant 0 : i32
    return %arg0, %arg1, %c0_i32, %c0_i32_0 : i32, i32, i32, i32
  }
}

module attributes {stable_mosaic.version = 11 : i64} {
  func.func @head_kernel(%arg0: i32, %arg1: memref<64x96xf32, #tpu.memory_space<vmem>>, %arg2: memref<32x32xf32, #tpu.memory_space<vmem>>, %arg3: memref<1x32xf32, #tpu.memory_space<vmem>>, %arg4: memref<32x32xf32, #tpu.memory_space<vmem>>, %arg5: memref<1x32xf32, #tpu.memory_space<vmem>>, %arg6: memref<32x32xf32, #tpu.memory_space<vmem>>, %arg7: memref<1x32xf32, #tpu.memory_space<vmem>>, %arg8: memref<32x32xf32, #tpu.memory_space<vmem>>, %arg9: memref<1x32xf32, #tpu.memory_space<vmem>>, %arg10: memref<64x128xf32, #tpu.memory_space<vmem>>) attributes {dimension_semantics = [#tpu.dimension_semantics<parallel>], iteration_bounds = array<i64: 1>, scalar_prefetch = 0 : i64, scratch_operands = 0 : i64, tpu.core_type = #tpu.core_type<tc>, window_params = [{transform_indices = @transform_0, window_bounds = array<i64: 64, 96>}, {pipeline_mode = #tpu.pipeline_mode<synchronous>, transform_indices = @transform_1, window_bounds = array<i64: 32, 32>}, {pipeline_mode = #tpu.pipeline_mode<synchronous>, transform_indices = @transform_2, window_bounds = array<i64: 1, 32>}, {pipeline_mode = #tpu.pipeline_mode<synchronous>, transform_indices = @transform_3, window_bounds = array<i64: 32, 32>}, {pipeline_mode = #tpu.pipeline_mode<synchronous>, transform_indices = @transform_4, window_bounds = array<i64: 1, 32>}, {pipeline_mode = #tpu.pipeline_mode<synchronous>, transform_indices = @transform_5, window_bounds = array<i64: 32, 32>}, {pipeline_mode = #tpu.pipeline_mode<synchronous>, transform_indices = @transform_6, window_bounds = array<i64: 1, 32>}, {pipeline_mode = #tpu.pipeline_mode<synchronous>, transform_indices = @transform_7, window_bounds = array<i64: 32, 32>}, {pipeline_mode = #tpu.pipeline_mode<synchronous>, transform_indices = @transform_8, window_bounds = array<i64: 1, 32>}, {transform_indices = @transform_9, window_bounds = array<i64: 64, 128>}]} {
    %c0 = arith.constant 0 : index
    %c0_0 = arith.constant 0 : index
    %0 = vector.load %arg1[%c0, %c0_0] : memref<64x96xf32, #tpu.memory_space<vmem>>, vector<64x96xf32>
    %1 = vector.extract_strided_slice %0 {offsets = [0, 0], sizes = [64, 32], strides = [1, 1]} : vector<64x96xf32> to vector<64x32xf32>
    %2 = vector.extract_strided_slice %0 {offsets = [0, 32], sizes = [64, 32], strides = [1, 1]} : vector<64x96xf32> to vector<64x32xf32>
    %3 = vector.extract_strided_slice %0 {offsets = [0, 64], sizes = [64, 32], strides = [1, 1]} : vector<64x96xf32> to vector<64x32xf32>
    %c0_1 = arith.constant 0 : index
    %c0_2 = arith.constant 0 : index
    %4 = vector.load %arg2[%c0_1, %c0_2] : memref<32x32xf32, #tpu.memory_space<vmem>>, vector<32x32xf32>
    %cst = arith.constant dense<0.000000e+00> : vector<64x32xf32>
    %5 = tpu.matmul %2, %4, %cst {dimension_numbers = #tpu.dot_dimension_numbers<[1], [0], [0], [1], [0, 0, 1, 1], [], []>} : vector<64x32xf32>, vector<32x32xf32>, vector<64x32xf32> -> vector<64x32xf32>
    %c0_3 = arith.constant 0 : index
    %c0_4 = arith.constant 0 : index
    %6 = vector.load %arg3[%c0_3, %c0_4] : memref<1x32xf32, #tpu.memory_space<vmem>>, vector<1x32xf32>
    %7 = vector.broadcast %6 : vector<1x32xf32> to vector<64x32xf32>
    %8 = arith.addf %5, %7 : vector<64x32xf32>
    %9 = math.tanh %8 : vector<64x32xf32>
    %c0_5 = arith.constant 0 : index
    %c0_6 = arith.constant 0 : index
    %10 = vector.load %arg4[%c0_5, %c0_6] : memref<32x32xf32, #tpu.memory_space<vmem>>, vector<32x32xf32>
    %cst_7 = arith.constant dense<0.000000e+00> : vector<64x32xf32>
    %11 = tpu.matmul %9, %10, %cst_7 {dimension_numbers = #tpu.dot_dimension_numbers<[1], [0], [0], [1], [0, 0, 1, 1], [], []>} : vector<64x32xf32>, vector<32x32xf32>, vector<64x32xf32> -> vector<64x32xf32>
    %c0_8 = arith.constant 0 : index
    %c0_9 = arith.constant 0 : index
    %12 = vector.load %arg5[%c0_8, %c0_9] : memref<1x32xf32, #tpu.memory_space<vmem>>, vector<1x32xf32>
    %13 = vector.broadcast %12 : vector<1x32xf32> to vector<64x32xf32>
    %14 = arith.addf %11, %13 : vector<64x32xf32>
    %15 = math.tanh %14 : vector<64x32xf32>
    %c0_10 = arith.constant 0 : index
    %c0_11 = arith.constant 0 : index
    %16 = vector.load %arg6[%c0_10, %c0_11] : memref<32x32xf32, #tpu.memory_space<vmem>>, vector<32x32xf32>
    %cst_12 = arith.constant dense<0.000000e+00> : vector<64x32xf32>
    %17 = tpu.matmul %15, %16, %cst_12 {dimension_numbers = #tpu.dot_dimension_numbers<[1], [0], [0], [1], [0, 0, 1, 1], [], []>} : vector<64x32xf32>, vector<32x32xf32>, vector<64x32xf32> -> vector<64x32xf32>
    %c0_13 = arith.constant 0 : index
    %c0_14 = arith.constant 0 : index
    %18 = vector.load %arg7[%c0_13, %c0_14] : memref<1x32xf32, #tpu.memory_space<vmem>>, vector<1x32xf32>
    %19 = vector.broadcast %18 : vector<1x32xf32> to vector<64x32xf32>
    %20 = arith.addf %17, %19 : vector<64x32xf32>
    %21 = arith.negf %20 : vector<64x32xf32>
    %22 = math.exp %21 : vector<64x32xf32>
    %cst_15 = arith.constant 1.000000e+00 : f32
    %23 = vector.broadcast %cst_15 : f32 to vector<64x32xf32>
    %24 = arith.addf %23, %22 : vector<64x32xf32>
    %25 = arith.divf %23, %24 : vector<64x32xf32>
    %26 = arith.mulf %1, %25 : vector<64x32xf32>
    %27 = arith.mulf %3, %25 : vector<64x32xf32>
    %c0_16 = arith.constant 0 : index
    %c0_17 = arith.constant 0 : index
    %28 = vector.load %arg8[%c0_16, %c0_17] : memref<32x32xf32, #tpu.memory_space<vmem>>, vector<32x32xf32>
    %cst_18 = arith.constant dense<0.000000e+00> : vector<64x32xf32>
    %29 = tpu.matmul %26, %28, %cst_18 {dimension_numbers = #tpu.dot_dimension_numbers<[1], [0], [0], [1], [0, 0, 1, 1], [], []>} : vector<64x32xf32>, vector<32x32xf32>, vector<64x32xf32> -> vector<64x32xf32>
    %c0_19 = arith.constant 0 : index
    %c0_20 = arith.constant 0 : index
    %30 = vector.load %arg9[%c0_19, %c0_20] : memref<1x32xf32, #tpu.memory_space<vmem>>, vector<1x32xf32>
    %31 = vector.broadcast %30 : vector<1x32xf32> to vector<64x32xf32>
    %32 = arith.addf %29, %31 : vector<64x32xf32>
    %33 = tpu.concatenate %26, %25, %27, %32 in 1 : vector<64x32xf32>, vector<64x32xf32>, vector<64x32xf32>, vector<64x32xf32> -> vector<64x128xf32>
    %c0_21 = arith.constant 0 : index
    %c0_22 = arith.constant 0 : index
    %34 = vector.load %arg10[%c0_21, %c0_22] : memref<64x128xf32, #tpu.memory_space<vmem>>, vector<64x128xf32>
    tpu.vector_store %arg10[%c0_21, %c0_22], %33 {strides = array<i32>} : memref<64x128xf32, #tpu.memory_space<vmem>>, vector<64x128xf32>,
    return
  }
  func.func @transform_0(%arg0: i32) -> (i32, i32) {
    %c0_i32 = arith.constant 0 : i32
    %c0_i32_0 = arith.constant 0 : i32
    return %arg0, %c0_i32 : i32, i32
  }
  func.func @transform_1(%arg0: i32) -> (i32, i32) {
    %c0_i32 = arith.constant 0 : i32
    %c0_i32_0 = arith.constant 0 : i32
    %c0_i32_1 = arith.constant 0 : i32
    return %c0_i32, %c0_i32_0 : i32, i32
  }
  func.func @transform_2(%arg0: i32) -> (i32, i32) {
    %c0_i32 = arith.constant 0 : i32
    %c0_i32_0 = arith.constant 0 : i32
    %c0_i32_1 = arith.constant 0 : i32
    return %c0_i32, %c0_i32_0 : i32, i32
  }
  func.func @transform_3(%arg0: i32) -> (i32, i32) {
    %c0_i32 = arith.constant 0 : i32
    %c0_i32_0 = arith.constant 0 : i32
    %c0_i32_1 = arith.constant 0 : i32
    return %c0_i32, %c0_i32_0 : i32, i32
  }
  func.func @transform_4(%arg0: i32) -> (i32, i32) {
    %c0_i32 = arith.constant 0 : i32
    %c0_i32_0 = arith.constant 0 : i32
    %c0_i32_1 = arith.constant 0 : i32
    return %c0_i32, %c0_i32_0 : i32, i32
  }
  func.func @transform_5(%arg0: i32) -> (i32, i32) {
    %c0_i32 = arith.constant 0 : i32
    %c0_i32_0 = arith.constant 0 : i32
    %c0_i32_1 = arith.constant 0 : i32
    return %c0_i32, %c0_i32_0 : i32, i32
  }
  func.func @transform_6(%arg0: i32) -> (i32, i32) {
    %c0_i32 = arith.constant 0 : i32
    %c0_i32_0 = arith.constant 0 : i32
    %c0_i32_1 = arith.constant 0 : i32
    return %c0_i32, %c0_i32_0 : i32, i32
  }
  func.func @transform_7(%arg0: i32) -> (i32, i32) {
    %c0_i32 = arith.constant 0 : i32
    %c0_i32_0 = arith.constant 0 : i32
    %c0_i32_1 = arith.constant 0 : i32
    return %c0_i32, %c0_i32_0 : i32, i32
  }
  func.func @transform_8(%arg0: i32) -> (i32, i32) {
    %c0_i32 = arith.constant 0 : i32
    %c0_i32_0 = arith.constant 0 : i32
    %c0_i32_1 = arith.constant 0 : i32
    return %c0_i32, %c0_i32_0 : i32, i32
  }
  func.func @transform_9(%arg0: i32) -> (i32, i32) {
    %c0_i32 = arith.constant 0 : i32
    %c0_i32_0 = arith.constant 0 : i32
    return %arg0, %c0_i32 : i32, i32
  }
}

</mosaic_0001>

<llo_original>
// kernel: _device_forward.3
$region0: #{_device_forward.3}
  #allocation0 [shape = 'u32[]', space=smem, size = 0x4, offset = 0x4, fixed_abs, tag = 'smem constant byte address 0x4 - core index']
  #allocation1 [shape = 'u32[72,128]{1,0:T(1,128)}', space=vmem, size = 0x9000, scoped, tag = 'internal scratch']
  %s0 = inlined_call_operand.vmem [shape: f32[64,96], index: 0, kind: input, shape index: {}]
  %s1 = inlined_call_operand.vmem [shape: f32[32,32], index: 1, kind: input, shape index: {}]
  %s2 = inlined_call_operand.vmem [shape: f32[1,32], index: 2, kind: input, shape index: {}]
  %s3 = inlined_call_operand.vmem [shape: f32[32,32], index: 3, kind: input, shape index: {}]
  %s4 = inlined_call_operand.vmem [shape: f32[1,32], index: 4, kind: input, shape index: {}]
  %s5 = inlined_call_operand.vmem [shape: f32[32,32], index: 5, kind: input, shape index: {}]
  %s6 = inlined_call_operand.vmem [shape: f32[1,32], index: 6, kind: input, shape index: {}]
  %s7 = inlined_call_operand.vmem [shape: f32[32,32], index: 7, kind: input, shape index: {}]
  %s8 = inlined_call_operand.vmem [shape: f32[1,32], index: 8, kind: input, shape index: {}]
  %s9 = inlined_call_operand.vmem [shape: f32[64,128], index: 9, kind: output, shape index: {}]
  %s10 = sld [smem:[#allocation0]]
  $region46: #{_device_forward.3} parent=0
    _
  %s12 = ssub.s32 1, %s10
  %s13 = scalar_select 0, %s12, %s10
  // Predicated region
  $region2: #{_device_forward.3} parent=0 // pred_check
    _
  $region3: #{_device_forward.3} parent=0 // pred_check_branch
    %15 = sbr.rel (0) target = $region5
  $region4: #{_device_forward.3} parent=0 // pred_region
    _
  $region5: #{_device_forward.3} parent=0 // pred_fallthru
    _
  // Predicated region
  $region6: #{_device_forward.3} parent=0 // pred_check
    _
  $region7: #{_device_forward.3} parent=0 // pred_check_branch
    %17 = sbr.rel (0) target = $region9
  $region8: #{_device_forward.3} parent=0 // pred_region
    _
  $region9: #{_device_forward.3} parent=0 // pred_fallthru
    _
  // Predicated region
  $region10: #{_device_forward.3} parent=0 // pred_check
    _
  $region11: #{_device_forward.3} parent=0 // pred_check_branch
    %19 = sbr.rel (0) target = $region13
  $region12: #{_device_forward.3} parent=0 // pred_region
    _
  $region13: #{_device_forward.3} parent=0 // pred_fallthru
    _
  // Predicated region
  $region14: #{_device_forward.3} parent=0 // pred_check
    _
  $region15: #{_device_forward.3} parent=0 // pred_check_branch
    %21 = sbr.rel (0) target = $region17
  $region16: #{_device_forward.3} parent=0 // pred_region
    _
  $region17: #{_device_forward.3} parent=0 // pred_fallthru
    _
  // Predicated region
  $region18: #{_device_forward.3} parent=0 // pred_check
    _
  $region19: #{_device_forward.3} parent=0 // pred_check_branch
    %23 = sbr.rel (0) target = $region21
  $region20: #{_device_forward.3} parent=0 // pred_region
    _
  $region21: #{_device_forward.3} parent=0 // pred_fallthru
    _
  // Predicated region
  $region22: #{_device_forward.3} parent=0 // pred_check
    _
  $region23: #{_device_forward.3} parent=0 // pred_check_branch
    %25 = sbr.rel (0) target = $region25
  $region24: #{_device_forward.3} parent=0 // pred_region
    _
  $region25: #{_device_forward.3} parent=0 // pred_fallthru
    _
  // Predicated region
  $region26: #{_device_forward.3} parent=0 // pred_check
    _
  $region27: #{_device_forward.3} parent=0 // pred_check_branch
    %27 = sbr.rel (0) target = $region29
  $region28: #{_device_forward.3} parent=0 // pred_region
    _
  $region29: #{_device_forward.3} parent=0 // pred_fallthru
    _
  // Predicated region
  $region30: #{_device_forward.3} parent=0 // pred_check
    _
  $region31: #{_device_forward.3} parent=0 // pred_check_branch
    %29 = sbr.rel (0) target = $region33
  $region32: #{_device_forward.3} parent=0 // pred_region
    _
  $region33: #{_device_forward.3} parent=0 // pred_fallthru
    _
  // Predicated region
  $region34: #{_device_forward.3} parent=0 // pred_check
    _
  $region35: #{_device_forward.3} parent=0 // pred_check_branch
    %31 = sbr.rel (0) target = $region37
  $region36: #{_device_forward.3} parent=0 // pred_region
    _
  $region37: #{_device_forward.3} parent=0 // pred_fallthru
    _
  %v32 = vld [vmem:[%s0] sm:$0xff]
  %v33 = vld [vmem:[%s0 + $0x8] sm:$0xff]
  %v34 = vld [vmem:[%s0 + $0x10] sm:$0xff]
  %v35 = vld [vmem:[%s0 + $0x18] sm:$0xff]
  %v36 = vld [vmem:[%s0 + $0x20] sm:$0xff]
  %v37 = vld [vmem:[%s0 + $0x28] sm:$0xff]
  %v38 = vld [vmem:[%s0 + $0x30] sm:$0xff]
  %v39 = vld [vmem:[%s0 + $0x38] sm:$0xff]
  %v40 = vld [vmem:[%s1] sm:$0xff]
  %v41 = vld [vmem:[%s1 + $0x8] sm:$0xff]
  %v42 = vld [vmem:[%s1 + $0x10] sm:$0xff]
  %v43 = vld [vmem:[%s1 + $0x18] sm:$0xff]
  %v44 = vld [vmem:[%s2] sm:$0x1]
  %v46 = vperm.slane %v44, 0
  %56 = vrot.lane.b32.xlu0 %v32, 96
  %v57 = vpop.permute.xlu0 %56
  %58 = vrot.lane.b32.xlu0 %v33, 96
  %v59 = vpop.permute.xlu0 %58
  %60 = vrot.lane.b32.xlu0 %v34, 96
  %v61 = vpop.permute.xlu0 %60
  %62 = vrot.lane.b32.xlu0 %v35, 96
  %v63 = vpop.permute.xlu0 %62
  %64 = vrot.lane.b32.xlu0 %v36, 96
  %v65 = vpop.permute.xlu0 %64
  %66 = vrot.lane.b32.xlu0 %v37, 96
  %v67 = vpop.permute.xlu0 %66
  %68 = vrot.lane.b32.xlu0 %v38, 96
  %v69 = vpop.permute.xlu0 %68
  %70 = vrot.lane.b32.xlu0 %v39, 96
  %v71 = vpop.permute.xlu0 %70
  %vm72 = vcmask 261120
  %v73 = vsel %vm72, %v57, 0
  %v75 = vsel %vm72, %v59, 0
  %v77 = vsel %vm72, %v61, 0
  %v79 = vsel %vm72, %v63, 0
  %v81 = vsel %vm72, %v65, 0
  %v83 = vsel %vm72, %v67, 0
  %v85 = vsel %vm72, %v69, 0
  %v87 = vsel %vm72, %v71, 0
  %89 = vmatpush.msra.mxu0 0.0
  %90 = vmatpush.msra.mxu0 0.0
  %91 = vmatpush.msra.mxu0 0.0
  %92 = vmatpush.msra.mxu0 0.0
  %93 = vmatpush.msra.mxu0 0.0
  %94 = vmatpush.msra.mxu0 0.0
  %95 = vmatpush.msra.mxu0 0.0
  %96 = vmatpush.msra.mxu0 0.0
  %97 = vmatpush.msra.mxu0 0.0
  %98 = vmatpush.msra.mxu0 0.0
  %99 = vmatpush.msra.mxu0 0.0
  %100 = vmatpush.msra.mxu0 0.0
  %101 = vmatpush.msra.mxu0 %v43
  %102 = vmatpush.msra.mxu0 %v42
  %103 = vmatpush.msra.mxu0 %v41
  %104 = vmatpush.msra.mxu0 %v40
  %105 = vmatmul.f32.gmra.mxu0 %v73
  %v106 = vpop.f32.mrf.mxu0
  %v107 = vadd.f32 %v46, %v106
  %108 = vmatmul.f32.gmra.mxu0 %v75
  %v109 = vpop.f32.mrf.mxu0
  %v110 = vadd.f32 %v46, %v109
  %111 = vmatmul.f32.gmra.mxu0 %v77
  %v112 = vpop.f32.mrf.mxu0
  %v113 = vadd.f32 %v46, %v112
  %114 = vmatmul.f32.gmra.mxu0 %v79
  %v115 = vpop.f32.mrf.mxu0
  %v116 = vadd.f32 %v46, %v115
  %117 = vmatmul.f32.gmra.mxu0 %v81
  %v118 = vpop.f32.mrf.mxu0
  %v119 = vadd.f32 %v46, %v118
  %120 = vmatmul.f32.gmra.mxu0 %v83
  %v121 = vpop.f32.mrf.mxu0
  %v122 = vadd.f32 %v46, %v121
  %123 = vmatmul.f32.gmra.mxu0 %v85
  %v124 = vpop.f32.mrf.mxu0
  %v125 = vadd.f32 %v46, %v124
  %126 = vmatmul.f32.gmra.mxu0 %v87
  %v127 = vpop.f32.mrf.mxu0
  %v128 = vadd.f32 %v46, %v127
  %129 = vdwg.mxu0
  %v130 = vtanh.pop %v107
  %v131 = vtanh.pop %v110
  %v132 = vtanh.pop %v113
  %v133 = vtanh.pop %v116
  %v134 = vtanh.pop %v119
  %v135 = vtanh.pop %v122
  %v136 = vtanh.pop %v125
  %v137 = vtanh.pop %v128
  %v138 = vld [vmem:[%s3] sm:$0xff]
  %v139 = vld [vmem:[%s3 + $0x8] sm:$0xff]
  %v140 = vld [vmem:[%s3 + $0x10] sm:$0xff]
  %v141 = vld [vmem:[%s3 + $0x18] sm:$0xff]
  %v142 = vld [vmem:[%s4] sm:$0x1]
  %v144 = vperm.slane %v142, 0
  %v147 = vsel %vm72, %v130, 0
  %v150 = vsel %vm72, %v131, 0
  %v153 = vsel %vm72, %v132, 0
  %v156 = vsel %vm72, %v133, 0
  %v159 = vsel %vm72, %v134, 0
  %v162 = vsel %vm72, %v135, 0
  %v165 = vsel %vm72, %v136, 0
  %v168 = vsel %vm72, %v137, 0
  %170 = vmatpush.msra.mxu0 0.0
  %171 = vmatpush.msra.mxu0 0.0
  %172 = vmatpush.msra.mxu0 0.0
  %173 = vmatpush.msra.mxu0 0.0
  %174 = vmatpush.msra.mxu0 0.0
  %175 = vmatpush.msra.mxu0 0.0
  %176 = vmatpush.msra.mxu0 0.0
  %177 = vmatpush.msra.mxu0 0.0
  %178 = vmatpush.msra.mxu0 0.0
  %179 = vmatpush.msra.mxu0 0.0
  %180 = vmatpush.msra.mxu0 0.0
  %181 = vmatpush.msra.mxu0 0.0
  %182 = vmatpush.msra.mxu0 %v141
  %183 = vmatpush.msra.mxu0 %v140
  %184 = vmatpush.msra.mxu0 %v139
  %185 = vmatpush.msra.mxu0 %v138
  %186 = vmatmul.f32.gmra.mxu0 %v147
  %v187 = vpop.f32.mrf.mxu0
  %v188 = vadd.f32 %v144, %v187
  %189 = vmatmul.f32.gmra.mxu0 %v150
  %v190 = vpop.f32.mrf.mxu0
  %v191 = vadd.f32 %v144, %v190
  %192 = vmatmul.f32.gmra.mxu0 %v153
  %v193 = vpop.f32.mrf.mxu0
  %v194 = vadd.f32 %v144, %v193
  %195 = vmatmul.f32.gmra.mxu0 %v156
  %v196 = vpop.f32.mrf.mxu0
  %v197 = vadd.f32 %v144, %v196
  %198 = vmatmul.f32.gmra.mxu0 %v159
  %v199 = vpop.f32.mrf.mxu0
  %v200 = vadd.f32 %v144, %v199
  %201 = vmatmul.f32.gmra.mxu0 %v162
  %v202 = vpop.f32.mrf.mxu0
  %v203 = vadd.f32 %v144, %v202
  %204 = vmatmul.f32.gmra.mxu0 %v165
  %v205 = vpop.f32.mrf.mxu0
  %v206 = vadd.f32 %v144, %v205
  %207 = vmatmul.f32.gmra.mxu0 %v168
  %v208 = vpop.f32.mrf.mxu0
  %v209 = vadd.f32 %v144, %v208
  %210 = vdwg.mxu0
  %v211 = vtanh.pop %v188
  %v212 = vtanh.pop %v191
  %v213 = vtanh.pop %v194
  %v214 = vtanh.pop %v197
  %v215 = vtanh.pop %v200
  %v216 = vtanh.pop %v203
  %v217 = vtanh.pop %v206
  %v218 = vtanh.pop %v209
  %v219 = vld [vmem:[%s5] sm:$0xff]
  %v220 = vld [vmem:[%s5 + $0x8] sm:$0xff]
  %v221 = vld [vmem:[%s5 + $0x10] sm:$0xff]
  %v222 = vld [vmem:[%s5 + $0x18] sm:$0xff]
  %v223 = vld [vmem:[%s6] sm:$0x1]
  %v225 = vperm.slane %v223, 0
  %v228 = vsel %vm72, %v211, 0
  %v231 = vsel %vm72, %v212, 0
  %v234 = vsel %vm72, %v213, 0
  %v237 = vsel %vm72, %v214, 0
  %v240 = vsel %vm72, %v215, 0
  %v243 = vsel %vm72, %v216, 0
  %v246 = vsel %vm72, %v217, 0
  %v249 = vsel %vm72, %v218, 0
  %251 = vmatpush.msra.mxu0 0.0
  %252 = vmatpush.msra.mxu0 0.0
  %253 = vmatpush.msra.mxu0 0.0
  %254 = vmatpush.msra.mxu0 0.0
  %255 = vmatpush.msra.mxu0 0.0
  %256 = vmatpush.msra.mxu0 0.0
  %257 = vmatpush.msra.mxu0 0.0
  %258 = vmatpush.msra.mxu0 0.0
  %259 = vmatpush.msra.mxu0 0.0
  %260 = vmatpush.msra.mxu0 0.0
  %261 = vmatpush.msra.mxu0 0.0
  %262 = vmatpush.msra.mxu0 0.0
  %263 = vmatpush.msra.mxu0 %v222
  %264 = vmatpush.msra.mxu0 %v221
  %265 = vmatpush.msra.mxu0 %v220
  %266 = vmatpush.msra.mxu0 %v219
  %267 = vmatmul.f32.gmra.mxu0 %v228
  %v268 = vpop.f32.mrf.mxu0
  %v269 = vadd.f32 %v225, %v268
  %270 = vmatmul.f32.gmra.mxu0 %v231
  %v271 = vpop.f32.mrf.mxu0
  %v272 = vadd.f32 %v225, %v271
  %273 = vmatmul.f32.gmra.mxu0 %v234
  %v274 = vpop.f32.mrf.mxu0
  %v275 = vadd.f32 %v225, %v274
  %276 = vmatmul.f32.gmra.mxu0 %v237
  %v277 = vpop.f32.mrf.mxu0
  %v278 = vadd.f32 %v225, %v277
  %279 = vmatmul.f32.gmra.mxu0 %v240
  %v280 = vpop.f32.mrf.mxu0
  %v281 = vadd.f32 %v225, %v280
  %282 = vmatmul.f32.gmra.mxu0 %v243
  %v283 = vpop.f32.mrf.mxu0
  %v284 = vadd.f32 %v225, %v283
  %285 = vmatmul.f32.gmra.mxu0 %v246
  %v286 = vpop.f32.mrf.mxu0
  %v287 = vadd.f32 %v225, %v286
  %288 = vmatmul.f32.gmra.mxu0 %v249
  %v289 = vpop.f32.mrf.mxu0
  %v290 = vadd.f32 %v225, %v289
  %291 = vdwg.mxu0
  %v292 = vxor.u32 %v269, 2147483648
  %v293 = vxor.u32 %v272, 2147483648
  %v294 = vxor.u32 %v275, 2147483648
  %v295 = vxor.u32 %v278, 2147483648
  %v296 = vxor.u32 %v281, 2147483648
  %v297 = vxor.u32 %v284, 2147483648
  %v298 = vxor.u32 %v287, 2147483648
  %v299 = vxor.u32 %v290, 2147483648
  %v300 = vmul.f32 %v292, 1.442695
  %v301 = vpow.pop %v300
  %v302 = vmul.f32 %v293, 1.442695
  %v303 = vpow.pop %v302
  %v304 = vmul.f32 %v294, 1.442695
  %v305 = vpow.pop %v304
  %v306 = vmul.f32 %v295, 1.442695
  %v307 = vpow.pop %v306
  %v308 = vmul.f32 %v296, 1.442695
  %v309 = vpow.pop %v308
  %v310 = vmul.f32 %v297, 1.442695
  %v311 = vpow.pop %v310
  %v312 = vmul.f32 %v298, 1.442695
  %v313 = vpow.pop %v312
  %v314 = vmul.f32 %v299, 1.442695
  %v315 = vpow.pop %v314
  %v316 = vadd.f32 %v301, 1.0
  %v317 = vadd.f32 %v303, 1.0
  %v318 = vadd.f32 %v305, 1.0
  %v319 = vadd.f32 %v307, 1.0
  %v320 = vadd.f32 %v309, 1.0
  %v321 = vadd.f32 %v311, 1.0
  %v322 = vadd.f32 %v313, 1.0
  %v323 = vadd.f32 %v315, 1.0
  %v324 = vrcp.pop %v316
  %v325 = vmul.f32 %v316, %v324
  %v326 = vsub.f32 1.0, %v325
  %v327 = vmul.f32 %v324, %v326
  %v328 = vadd.f32 %v324, %v327
  %vm329 = vweird.f32 %v316
  %vm330 = vweird.f32 %v324
  %vm331 = vmor %vm329, %vm330
  %v332 = vsel %vm331, %v324, %v328
  %v333 = vand.u32 2147483647, %v316
  %vm334 = vcmp.eq.f32.partialorder %v333, 8.507059e+37
  %v335 = vand.u32 %v316, 2147483648
  %v336 = vor.u32 1.1754944e-38, %v335
  %v337 = vsel %vm334, %v336, %v332
  %v338 = vmul.f32 1.0, %v337
  %v339 = vrcp.pop %v317
  %v340 = vmul.f32 %v317, %v339
  %v341 = vsub.f32 1.0, %v340
  %v342 = vmul.f32 %v339, %v341
  %v343 = vadd.f32 %v339, %v342
  %vm344 = vweird.f32 %v317
  %vm345 = vweird.f32 %v339
  %vm346 = vmor %vm344, %vm345
  %v347 = vsel %vm346, %v339, %v343
  %v348 = vand.u32 2147483647, %v317
  %vm349 = vcmp.eq.f32.partialorder %v348, 8.507059e+37
  %v350 = vand.u32 %v317, 2147483648
  %v351 = vor.u32 1.1754944e-38, %v350
  %v352 = vsel %vm349, %v351, %v347
  %v353 = vmul.f32 1.0, %v352
  %v354 = vrcp.pop %v318
  %v355 = vmul.f32 %v318, %v354
  %v356 = vsub.f32 1.0, %v355
  %v357 = vmul.f32 %v354, %v356
  %v358 = vadd.f32 %v354, %v357
  %vm359 = vweird.f32 %v318
  %vm360 = vweird.f32 %v354
  %vm361 = vmor %vm359, %vm360
  %v362 = vsel %vm361, %v354, %v358
  %v363 = vand.u32 2147483647, %v318
  %vm364 = vcmp.eq.f32.partialorder %v363, 8.507059e+37
  %v365 = vand.u32 %v318, 2147483648
  %v366 = vor.u32 1.1754944e-38, %v365
  %v367 = vsel %vm364, %v366, %v362
  %v368 = vmul.f32 1.0, %v367
  %v369 = vrcp.pop %v319
  %v370 = vmul.f32 %v319, %v369
  %v371 = vsub.f32 1.0, %v370
  %v372 = vmul.f32 %v369, %v371
  %v373 = vadd.f32 %v369, %v372
  %vm374 = vweird.f32 %v319
  %vm375 = vweird.f32 %v369
  %vm376 = vmor %vm374, %vm375
  %v377 = vsel %vm376, %v369, %v373
  %v378 = vand.u32 2147483647, %v319
  %vm379 = vcmp.eq.f32.partialorder %v378, 8.507059e+37
  %v380 = vand.u32 %v319, 2147483648
  %v381 = vor.u32 1.1754944e-38, %v380
  %v382 = vsel %vm379, %v381, %v377
  %v383 = vmul.f32 1.0, %v382
  %v384 = vrcp.pop %v320
  %v385 = vmul.f32 %v320, %v384
  %v386 = vsub.f32 1.0, %v385
  %v387 = vmul.f32 %v384, %v386
  %v388 = vadd.f32 %v384, %v387
  %vm389 = vweird.f32 %v320
  %vm390 = vweird.f32 %v384
  %vm391 = vmor %vm389, %vm390
  %v392 = vsel %vm391, %v384, %v388
  %v393 = vand.u32 2147483647, %v320
  %vm394 = vcmp.eq.f32.partialorder %v393, 8.507059e+37
  %v395 = vand.u32 %v320, 2147483648
  %v396 = vor.u32 1.1754944e-38, %v395
  %v397 = vsel %vm394, %v396, %v392
  %v398 = vmul.f32 1.0, %v397
  %v399 = vrcp.pop %v321
  %v400 = vmul.f32 %v321, %v399
  %v401 = vsub.f32 1.0, %v400
  %v402 = vmul.f32 %v399, %v401
  %v403 = vadd.f32 %v399, %v402
  %vm404 = vweird.f32 %v321
  %vm405 = vweird.f32 %v399
  %vm406 = vmor %vm404, %vm405
  %v407 = vsel %vm406, %v399, %v403
  %v408 = vand.u32 2147483647, %v321
  %vm409 = vcmp.eq.f32.partialorder %v408, 8.507059e+37
  %v410 = vand.u32 %v321, 2147483648
  %v411 = vor.u32 1.1754944e-38, %v410
  %v412 = vsel %vm409, %v411, %v407
  %v413 = vmul.f32 1.0, %v412
  %v414 = vrcp.pop %v322
  %v415 = vmul.f32 %v322, %v414
  %v416 = vsub.f32 1.0, %v415
  %v417 = vmul.f32 %v414, %v416
  %v418 = vadd.f32 %v414, %v417
  %vm419 = vweird.f32 %v322
  %vm420 = vweird.f32 %v414
  %vm421 = vmor %vm419, %vm420
  %v422 = vsel %vm421, %v414, %v418
  %v423 = vand.u32 2147483647, %v322
  %vm424 = vcmp.eq.f32.partialorder %v423, 8.507059e+37
  %v425 = vand.u32 %v322, 2147483648
  %v426 = vor.u32 1.1754944e-38, %v425
  %v427 = vsel %vm424, %v426, %v422
  %v428 = vmul.f32 1.0, %v427
  %v429 = vrcp.pop %v323
  %v430 = vmul.f32 %v323, %v429
  %v431 = vsub.f32 1.0, %v430
  %v432 = vmul.f32 %v429, %v431
  %v433 = vadd.f32 %v429, %v432
  %vm434 = vweird.f32 %v323
  %vm435 = vweird.f32 %v429
  %vm436 = vmor %vm434, %vm435
  %v437 = vsel %vm436, %v429, %v433
  %v438 = vand.u32 2147483647, %v323
  %vm439 = vcmp.eq.f32.partialorder %v438, 8.507059e+37
  %v440 = vand.u32 %v323, 2147483648
  %v441 = vor.u32 1.1754944e-38, %v440
  %v442 = vsel %vm439, %v441, %v437
  %v443 = vmul.f32 1.0, %v442
  %v444 = vmul.f32 %v32, %v338
  %v445 = vmul.f32 %v33, %v353
  %v446 = vmul.f32 %v34, %v368
  %v447 = vmul.f32 %v35, %v383
  %v448 = vmul.f32 %v36, %v398
  %v449 = vmul.f32 %v37, %v413
  %v450 = vmul.f32 %v38, %v428
  %v451 = vmul.f32 %v39, %v443
  %460 = vrot.lane.b32.xlu0 %v338, 64
  %v461 = vpop.permute.xlu0 %460
  %462 = vrot.lane.b32.xlu0 %v353, 64
  %v463 = vpop.permute.xlu0 %462
  %464 = vrot.lane.b32.xlu0 %v368, 64
  %v465 = vpop.permute.xlu0 %464
  %466 = vrot.lane.b32.xlu0 %v383, 64
  %v467 = vpop.permute.xlu0 %466
  %468 = vrot.lane.b32.xlu0 %v398, 64
  %v469 = vpop.permute.xlu0 %468
  %470 = vrot.lane.b32.xlu0 %v413, 64
  %v471 = vpop.permute.xlu0 %470
  %472 = vrot.lane.b32.xlu0 %v428, 64
  %v473 = vpop.permute.xlu0 %472
  %474 = vrot.lane.b32.xlu0 %v443, 64
  %v475 = vpop.permute.xlu0 %474
  %v484 = vmul.f32 %v32, %v461
  %v485 = vmul.f32 %v33, %v463
  %v486 = vmul.f32 %v34, %v465
  %v487 = vmul.f32 %v35, %v467
  %v488 = vmul.f32 %v36, %v469
  %v489 = vmul.f32 %v37, %v471
  %v490 = vmul.f32 %v38, %v473
  %v491 = vmul.f32 %v39, %v475
  %v492 = vld [vmem:[%s7] sm:$0xff]
  %v493 = vld [vmem:[%s7 + $0x8] sm:$0xff]
  %v494 = vld [vmem:[%s7 + $0x10] sm:$0xff]
  %v495 = vld [vmem:[%s7 + $0x18] sm:$0xff]
  %v496 = vld [vmem:[%s8] sm:$0x1]
  %v498 = vperm.slane %v496, 0
  %v501 = vsel %vm72, %v444, 0
  %v504 = vsel %vm72, %v445, 0
  %v507 = vsel %vm72, %v446, 0
  %v510 = vsel %vm72, %v447, 0
  %v513 = vsel %vm72, %v448, 0
  %v516 = vsel %vm72, %v449, 0
  %v519 = vsel %vm72, %v450, 0
  %v522 = vsel %vm72, %v451, 0
  %524 = vmatpush.msra.mxu0 0.0
  %525 = vmatpush.msra.mxu0 0.0
  %526 = vmatpush.msra.mxu0 0.0
  %527 = vmatpush.msra.mxu0 0.0
  %528 = vmatpush.msra.mxu0 0.0
  %529 = vmatpush.msra.mxu0 0.0
  %530 = vmatpush.msra.mxu0 0.0
  %531 = vmatpush.msra.mxu0 0.0
  %532 = vmatpush.msra.mxu0 0.0
  %533 = vmatpush.msra.mxu0 0.0
  %534 = vmatpush.msra.mxu0 0.0
  %535 = vmatpush.msra.mxu0 0.0
  %536 = vmatpush.msra.mxu0 %v495
  %537 = vmatpush.msra.mxu0 %v494
  %538 = vmatpush.msra.mxu0 %v493
  %539 = vmatpush.msra.mxu0 %v492
  %540 = vmatmul.f32.gmra.mxu0 %v501
  %v541 = vpop.f32.mrf.mxu0
  %v542 = vadd.f32 %v498, %v541
  %543 = vmatmul.f32.gmra.mxu0 %v504
  %v544 = vpop.f32.mrf.mxu0
  %v545 = vadd.f32 %v498, %v544
  %546 = vmatmul.f32.gmra.mxu0 %v507
  %v547 = vpop.f32.mrf.mxu0
  %v548 = vadd.f32 %v498, %v547
  %549 = vmatmul.f32.gmra.mxu0 %v510
  %v550 = vpop.f32.mrf.mxu0
  %v551 = vadd.f32 %v498, %v550
  %552 = vmatmul.f32.gmra.mxu0 %v513
  %v553 = vpop.f32.mrf.mxu0
  %v554 = vadd.f32 %v498, %v553
  %555 = vmatmul.f32.gmra.mxu0 %v516
  %v556 = vpop.f32.mrf.mxu0
  %v557 = vadd.f32 %v498, %v556
  %558 = vmatmul.f32.gmra.mxu0 %v519
  %v559 = vpop.f32.mrf.mxu0
  %v560 = vadd.f32 %v498, %v559
  %561 = vmatmul.f32.gmra.mxu0 %v522
  %v562 = vpop.f32.mrf.mxu0
  %v563 = vadd.f32 %v498, %v562
  %564 = vdwg.mxu0
  %565 = vrot.lane.b32.xlu0 %v338, 32
  %v566 = vpop.permute.xlu0 %565
  %567 = vrot.lane.b32.xlu0 %v353, 32
  %v568 = vpop.permute.xlu0 %567
  %569 = vrot.lane.b32.xlu0 %v368, 32
  %v570 = vpop.permute.xlu0 %569
  %571 = vrot.lane.b32.xlu0 %v383, 32
  %v572 = vpop.permute.xlu0 %571
  %573 = vrot.lane.b32.xlu0 %v398, 32
  %v574 = vpop.permute.xlu0 %573
  %575 = vrot.lane.b32.xlu0 %v413, 32
  %v576 = vpop.permute.xlu0 %575
  %577 = vrot.lane.b32.xlu0 %v428, 32
  %v578 = vpop.permute.xlu0 %577
  %579 = vrot.lane.b32.xlu0 %v443, 32
  %v580 = vpop.permute.xlu0 %579
  %597 = vrot.lane.b32.xlu0 %v542, 96
  %v598 = vpop.permute.xlu0 %597
  %599 = vrot.lane.b32.xlu0 %v545, 96
  %v600 = vpop.permute.xlu0 %599
  %601 = vrot.lane.b32.xlu0 %v548, 96
  %v602 = vpop.permute.xlu0 %601
  %603 = vrot.lane.b32.xlu0 %v551, 96
  %v604 = vpop.permute.xlu0 %603
  %605 = vrot.lane.b32.xlu0 %v554, 96
  %v606 = vpop.permute.xlu0 %605
  %607 = vrot.lane.b32.xlu0 %v557, 96
  %v608 = vpop.permute.xlu0 %607
  %609 = vrot.lane.b32.xlu0 %v560, 96
  %v610 = vpop.permute.xlu0 %609
  %611 = vrot.lane.b32.xlu0 %v563, 96
  %v612 = vpop.permute.xlu0 %611
  %v621 = vsel %vm72, %v444, %v566
  %v622 = vsel %vm72, %v445, %v568
  %v623 = vsel %vm72, %v446, %v570
  %v624 = vsel %vm72, %v447, %v572
  %v625 = vsel %vm72, %v448, %v574
  %v626 = vsel %vm72, %v449, %v576
  %v627 = vsel %vm72, %v450, %v578
  %v628 = vsel %vm72, %v451, %v580
  %vm629 = vcmask 523264
  %v630 = vsel %vm629, %v621, %v484
  %v631 = vsel %vm629, %v622, %v485
  %v632 = vsel %vm629, %v623, %v486
  %v633 = vsel %vm629, %v624, %v487
  %v634 = vsel %vm629, %v625, %v488
  %v635 = vsel %vm629, %v626, %v489
  %v636 = vsel %vm629, %v627, %v490
  %v637 = vsel %vm629, %v628, %v491
  %vm638 = vcmask 785408
  %v639 = vsel %vm638, %v630, %v598
  %v640 = vsel %vm638, %v631, %v600
  %v641 = vsel %vm638, %v632, %v602
  %v642 = vsel %vm638, %v633, %v604
  %v643 = vsel %vm638, %v634, %v606
  %v644 = vsel %vm638, %v635, %v608
  %v645 = vsel %vm638, %v636, %v610
  %v646 = vsel %vm638, %v637, %v612
  %647 = vst [vmem:[%s9] sm:$0xff] %v639
  %648 = vst [vmem:[%s9 + $0x8] sm:$0xff] %v640
  %649 = vst [vmem:[%s9 + $0x10] sm:$0xff] %v641
  %650 = vst [vmem:[%s9 + $0x18] sm:$0xff] %v642
  %651 = vst [vmem:[%s9 + $0x20] sm:$0xff] %v643
  %652 = vst [vmem:[%s9 + $0x28] sm:$0xff] %v644
  %653 = vst [vmem:[%s9 + $0x30] sm:$0xff] %v645
  %654 = vst [vmem:[%s9 + $0x38] sm:$0xff] %v646
  // Predicated region
  $region38: #{_device_forward.3} parent=0 // pred_check
    _
  $region39: #{_device_forward.3} parent=0 // pred_check_branch
    %656 = sbr.rel (0) target = $region41
  $region40: #{_device_forward.3} parent=0 // pred_region
    _
  $region41: #{_device_forward.3} parent=0 // pred_fallthru
    _
  // Predicated region
  $region42: #{_device_forward.3} parent=0 // pred_check
    _
  $region43: #{_device_forward.3} parent=0 // pred_check_branch
    %658 = sbr.rel (0) target = $region45
  $region44: #{_device_forward.3} parent=0 // pred_region
    _
  $region45: #{_device_forward.3} parent=0 // pred_fallthru
    _

// kernel: _device_forward.2
$region0: #{_device_forward.2}
  #allocation0 [shape = 'u32[]', space=smem, size = 0x4, offset = 0x4, fixed_abs, tag = 'smem constant byte address 0x4 - core index']
  #allocation1 [shape = 'u32[72,128]{1,0:T(1,128)}', space=vmem, size = 0x9000, scoped, tag = 'internal scratch']
  #allocation2 [shape = 'f32[16,32]{1,0:T(8,128)}', space=vmem, size = 0x2000, scoped, tag = 'scratch operand']
  %s0 = inlined_call_operand.vmem [shape: f32[2,16,32], index: 0, kind: input, shape index: {}]
  %s1 = inlined_call_operand.vmem [shape: f32[7,16,4], index: 1, kind: input, shape index: {}]
  %s2 = inlined_call_operand.vmem [shape: f32[7,16,1], index: 2, kind: input, shape index: {}]
  %s3 = inlined_call_operand.vmem [shape: f32[2,16,16], index: 3, kind: input, shape index: {}]
  %s4 = inlined_call_operand.vmem [shape: f32[2,3,32,16], index: 4, kind: input, shape index: {}]
  %s5 = inlined_call_operand.vmem [shape: f32[2,1,16], index: 5, kind: input, shape index: {}]
  %s6 = inlined_call_operand.vmem [shape: f32[2,1,3,16,16], index: 6, kind: input, shape index: {}]
  %s7 = inlined_call_operand.vmem [shape: f32[2,1,1,16], index: 7, kind: input, shape index: {}]
  %s8 = inlined_call_operand.vmem [shape: f32[2,3,16,32], index: 8, kind: input, shape index: {}]
  %s9 = inlined_call_operand.vmem [shape: f32[2,1,32], index: 9, kind: input, shape index: {}]
  %s10 = inlined_call_operand.vmem [shape: f32[2,3,4,64], index: 10, kind: input, shape index: {}]
  %s11 = inlined_call_operand.vmem [shape: f32[2,3,32,64], index: 11, kind: input, shape index: {}]
  %s12 = inlined_call_operand.vmem [shape: f32[2,1,64], index: 12, kind: input, shape index: {}]
  %s13 = inlined_call_operand.vmem [shape: f32[2,3,4,32], index: 13, kind: input, shape index: {}]
  %s14 = inlined_call_operand.vmem [shape: f32[2,3,32,32], index: 14, kind: input, shape index: {}]
  %s15 = inlined_call_operand.vmem [shape: f32[2,1,32], index: 15, kind: input, shape index: {}]
  %s16 = inlined_call_operand.vmem [shape: f32[2,7,16,128], index: 16, kind: output, shape index: {}]
  %s17 = sld [smem:[#allocation0]]
  $region101: #{_device_forward.2} parent=0
    _
  %s19 = ssub.s32 1, %s17
  %s20 = scalar_select 0, %s19, %s17
  loop: start=0, step=1, limit=16
  $region2: #{_device_forward.2} parent=0 // loop_pre_header
    _
  $region3: #{_device_forward.2} parent=0 // loop_header
    %s22 = sphi 0, %s26
    %p23 = scmp.ge.s32.totalorder %s22, 16
    %s29 = sphi 0, %s41
    %s30 = sphi 0, %s37
    %s31 = sphi 0, %s29
    %s32 = sphi 0, %s30
    %s33 = sphi 0, %s31
    %s34 = sphi 0, %s32
    %s44 = sphi 0, %s46
    %s47 = sphi 0, %s44
    %s48 = sphi 0, %s47
    %s64 = sphi 0, %s48
    %s70 = sphi 0, %s72
    %s73 = sphi 0, %s70
    %s74 = sphi 0, %s73
    %s90 = sphi 0, %s74
    %s96 = sphi 0, %s98
    %s99 = sphi 0, %s96
    %s100 = sphi 0, %s99
    %s116 = sphi 0, %s100
    %s120 = sphi 0, %s120
    %s122 = sphi 0, %s120
    %s123 = sphi 0, %s122
    %s137 = sphi 0, %s123
    %s143 = sphi 0, %s145
    %s146 = sphi 0, %s143
    %s147 = sphi 0, %s146
    %s163 = sphi 0, %s147
    %s169 = sphi 0, %s171
    %s172 = sphi 0, %s169
    %s173 = sphi 0, %s172
    %s189 = sphi 0, %s173
    %s195 = sphi 0, %s197
    %s198 = sphi 0, %s195
    %s199 = sphi 0, %s198
    %s215 = sphi 0, %s199
    %s221 = sphi 0, %s223
    %s224 = sphi 0, %s221
    %s225 = sphi 0, %s224
    %s241 = sphi 0, %s225
    %s247 = sphi 0, %s249
    %s250 = sphi 0, %s247
    %s251 = sphi 0, %s250
    %s267 = sphi 0, %s251
    %s273 = sphi 0, %s275
    %s276 = sphi 0, %s273
    %s277 = sphi 0, %s276
    %s293 = sphi 0, %s277
    %s299 = sphi 0, %s301
    %s302 = sphi 0, %s299
    %s303 = sphi 0, %s302
    %s319 = sphi 0, %s303
    %s325 = sphi 0, %s327
    %s328 = sphi 0, %s325
    %s329 = sphi 0, %s328
    %s345 = sphi 0, %s329
    %s351 = sphi 0, %s353
    %s354 = sphi 0, %s351
    %s355 = sphi 0, %s354
    %s371 = sphi 0, %s355
    %s377 = sphi 0, %s379
    %s380 = sphi 0, %s377
    %s381 = sphi 0, %s380
    %s397 = sphi 0, %s381
    %s403 = sphi 0, %s405
    %s406 = sphi 0, %s403
    %s407 = sphi 0, %s406
    %s423 = sphi 0, %s407
    %s429 = sphi 0, %s431
    %s432 = sphi 0, %s429
    %s433 = sphi 0, %s432
    %s449 = sphi 0, %s433
    %s457 = sphi 0, %s459
    %s460 = sphi 0, %s457
    %s461 = sphi 0, %s460
    %s477 = sphi 0, %s461
  $region4: #{_device_forward.2} parent=0 // loop_header_branch
    %25 = sbr.rel (%p23) target = $region8
  $region5: #{_device_forward.2} parent=0 // loop_body
    %s27 = ssub.s32 %s22, 1
    %s28 = ssub.s32 %s22, 2
    %s35 = sadd.s32 1, %s30
    %p36 = scmp.ge.s32.totalorder %s35, 7
    %s37 = scalar_select %p36, 0, %s35
    %s38 = sadd.s32 1, %s29
    %s39 = scalar_select %p36, %s38, %s29
    %p40 = scmp.ge.s32.totalorder %s39, 2
    %s41 = scalar_select %p40, 0, %s39
    %s42 = ssub.s32 %s29, %s41
    %p43 = scmp.eq.s32.totalorder %s42, 0
    %s45 = sadd.s32 %s44, 1
    %s46 = scalar_select %p43, %s44, %s45
    %p49 = pneg %p43
    %p50 = scmp.eq.s32.totalorder %s22, 13
    %p51 = por %p49, %p50
    %p52 = scmp.ne.s32.totalorder %s44, %s47
    %p53 = scmp.eq.s32.totalorder %s22, 0
    %p54 = por %p52, %p53
    %p55 = scmp.ne.s32.totalorder %s44, %s47
    %p56 = scmp.eq.s32.totalorder %s27, 13
    %p57 = por %p55, %p56
    %p58 = scmp.ne.s32.totalorder %s47, %s48
    %p59 = scmp.eq.s32.totalorder %s27, 0
    %p60 = por %p58, %p59
    %p61 = scmp.ne.s32.totalorder %s47, %s48
    %p62 = scmp.eq.s32.totalorder %s28, 13
    %p63 = por %p61, %p62
    %p65 = scmp.ne.s32.totalorder %s48, %s64
    %p66 = scmp.eq.s32.totalorder %s28, 0
    %p67 = por %p65, %p66
    %s68 = ssub.s32 %s30, %s37
    %p69 = scmp.eq.s32.totalorder %s68, 0
    %s71 = sadd.s32 %s70, 1
    %s72 = scalar_select %p69, %s70, %s71
    %p75 = pneg %p69
    %p76 = scmp.eq.s32.totalorder %s22, 13
    %p77 = por %p75, %p76
    %p78 = scmp.ne.s32.totalorder %s70, %s73
    %p79 = scmp.eq.s32.totalorder %s22, 0
    %p80 = por %p78, %p79
    %p81 = scmp.ne.s32.totalorder %s70, %s73
    %p82 = scmp.eq.s32.totalorder %s27, 13
    %p83 = por %p81, %p82
    %p84 = scmp.ne.s32.totalorder %s73, %s74
    %p85 = scmp.eq.s32.totalorder %s27, 0
    %p86 = por %p84, %p85
    %p87 = scmp.ne.s32.totalorder %s73, %s74
    %p88 = scmp.eq.s32.totalorder %s28, 13
    %p89 = por %p87, %p88
    %p91 = scmp.ne.s32.totalorder %s74, %s90
    %p92 = scmp.eq.s32.totalorder %s28, 0
    %p93 = por %p91, %p92
    %s94 = ssub.s32 %s30, %s37
    %p95 = scmp.eq.s32.totalorder %s94, 0
    %s97 = sadd.s32 %s96, 1
    %s98 = scalar_select %p95, %s96, %s97
    %p101 = pneg %p95
    %p102 = scmp.eq.s32.totalorder %s22, 13
    %p103 = por %p101, %p102
    %p104 = scmp.ne.s32.totalorder %s96, %s99
    %p105 = scmp.eq.s32.totalorder %s22, 0
    %p106 = por %p104, %p105
    %p107 = scmp.ne.s32.totalorder %s96, %s99
    %p108 = scmp.eq.s32.totalorder %s27, 13
    %p109 = por %p107, %p108
    %p110 = scmp.ne.s32.totalorder %s99, %s100
    %p111 = scmp.eq.s32.totalorder %s27, 0
    %p112 = por %p110, %p111
    %p113 = scmp.ne.s32.totalorder %s99, %s100
    %p114 = scmp.eq.s32.totalorder %s28, 13
    %p115 = por %p113, %p114
    %p117 = scmp.ne.s32.totalorder %s100, %s116
    %p118 = scmp.eq.s32.totalorder %s28, 0
    %p119 = por %p117, %p118
    %s121 = sadd.s32 %s120, 1
    %p124 = scmp.eq.s32.totalorder %s22, 13
    %p125 = scmp.ne.s32.totalorder %s120, %s122
    %p126 = scmp.eq.s32.totalorder %s22, 0
    %p127 = por %p125, %p126
    %p128 = scmp.ne.s32.totalorder %s120, %s122
    %p129 = scmp.eq.s32.totalorder %s27, 13
    %p130 = por %p128, %p129
    %p131 = scmp.ne.s32.totalorder %s122, %s123
    %p132 = scmp.eq.s32.totalorder %s27, 0
    %p133 = por %p131, %p132
    %p134 = scmp.ne.s32.totalorder %s122, %s123
    %p135 = scmp.eq.s32.totalorder %s28, 13
    %p136 = por %p134, %p135
    %p138 = scmp.ne.s32.totalorder %s123, %s137
    %p139 = scmp.eq.s32.totalorder %s28, 0
    %p140 = por %p138, %p139
    %s141 = ssub.s32 %s29, %s41
    %p142 = scmp.eq.s32.totalorder %s141, 0
    %s144 = sadd.s32 %s143, 1
    %s145 = scalar_select %p142, %s143, %s144
    %p148 = pneg %p142
    %p149 = scmp.eq.s32.totalorder %s22, 13
    %p150 = por %p148, %p149
    %p151 = scmp.ne.s32.totalorder %s143, %s146
    %p152 = scmp.eq.s32.totalorder %s22, 0
    %p153 = por %p151, %p152
    %p154 = scmp.ne.s32.totalorder %s143, %s146
    %p155 = scmp.eq.s32.totalorder %s27, 13
    %p156 = por %p154, %p155
    %p157 = scmp.ne.s32.totalorder %s146, %s147
    %p158 = scmp.eq.s32.totalorder %s27, 0
    %p159 = por %p157, %p158
    %p160 = scmp.ne.s32.totalorder %s146, %s147
    %p161 = scmp.eq.s32.totalorder %s28, 13
    %p162 = por %p160, %p161
    %p164 = scmp.ne.s32.totalorder %s147, %s163
    %p165 = scmp.eq.s32.totalorder %s28, 0
    %p166 = por %p164, %p165
    %s167 = ssub.s32 %s29, %s41
    %p168 = scmp.eq.s32.totalorder %s167, 0
    %s170 = sadd.s32 %s169, 1
    %s171 = scalar_select %p168, %s169, %s170
    %p174 = pneg %p168
    %p175 = scmp.eq.s32.totalorder %s22, 13
    %p176 = por %p174, %p175
    %p177 = scmp.ne.s32.totalorder %s169, %s172
    %p178 = scmp.eq.s32.totalorder %s22, 0
    %p179 = por %p177, %p178
    %p180 = scmp.ne.s32.totalorder %s169, %s172
    %p181 = scmp.eq.s32.totalorder %s27, 13
    %p182 = por %p180, %p181
    %p183 = scmp.ne.s32.totalorder %s172, %s173
    %p184 = scmp.eq.s32.totalorder %s27, 0
    %p185 = por %p183, %p184
    %p186 = scmp.ne.s32.totalorder %s172, %s173
    %p187 = scmp.eq.s32.totalorder %s28, 13
    %p188 = por %p186, %p187
    %p190 = scmp.ne.s32.totalorder %s173, %s189
    %p191 = scmp.eq.s32.totalorder %s28, 0
    %p192 = por %p190, %p191
    %s193 = ssub.s32 %s29, %s41
    %p194 = scmp.eq.s32.totalorder %s193, 0
    %s196 = sadd.s32 %s195, 1
    %s197 = scalar_select %p194, %s195, %s196
    %p200 = pneg %p194
    %p201 = scmp.eq.s32.totalorder %s22, 13
    %p202 = por %p200, %p201
    %p203 = scmp.ne.s32.totalorder %s195, %s198
    %p204 = scmp.eq.s32.totalorder %s22, 0
    %p205 = por %p203, %p204
    %p206 = scmp.ne.s32.totalorder %s195, %s198
    %p207 = scmp.eq.s32.totalorder %s27, 13
    %p208 = por %p206, %p207
    %p209 = scmp.ne.s32.totalorder %s198, %s199
    %p210 = scmp.eq.s32.totalorder %s27, 0
    %p211 = por %p209, %p210
    %p212 = scmp.ne.s32.totalorder %s198, %s199
    %p213 = scmp.eq.s32.totalorder %s28, 13
    %p214 = por %p212, %p213
    %p216 = scmp.ne.s32.totalorder %s199, %s215
    %p217 = scmp.eq.s32.totalorder %s28, 0
    %p218 = por %p216, %p217
    %s219 = ssub.s32 %s29, %s41
    %p220 = scmp.eq.s32.totalorder %s219, 0
    %s222 = sadd.s32 %s221, 1
    %s223 = scalar_select %p220, %s221, %s222
    %p226 = pneg %p220
    %p227 = scmp.eq.s32.totalorder %s22, 13
    %p228 = por %p226, %p227
    %p229 = scmp.ne.s32.totalorder %s221, %s224
    %p230 = scmp.eq.s32.totalorder %s22, 0
    %p231 = por %p229, %p230
    %p232 = scmp.ne.s32.totalorder %s221, %s224
    %p233 = scmp.eq.s32.totalorder %s27, 13
    %p234 = por %p232, %p233
    %p235 = scmp.ne.s32.totalorder %s224, %s225
    %p236 = scmp.eq.s32.totalorder %s27, 0
    %p237 = por %p235, %p236
    %p238 = scmp.ne.s32.totalorder %s224, %s225
    %p239 = scmp.eq.s32.totalorder %s28, 13
    %p240 = por %p238, %p239
    %p242 = scmp.ne.s32.totalorder %s225, %s241
    %p243 = scmp.eq.s32.totalorder %s28, 0
    %p244 = por %p242, %p243
    %s245 = ssub.s32 %s29, %s41
    %p246 = scmp.eq.s32.totalorder %s245, 0
    %s248 = sadd.s32 %s247, 1
    %s249 = scalar_select %p246, %s247, %s248
    %p252 = pneg %p246
    %p253 = scmp.eq.s32.totalorder %s22, 13
    %p254 = por %p252, %p253
    %p255 = scmp.ne.s32.totalorder %s247, %s250
    %p256 = scmp.eq.s32.totalorder %s22, 0
    %p257 = por %p255, %p256
    %p258 = scmp.ne.s32.totalorder %s247, %s250
    %p259 = scmp.eq.s32.totalorder %s27, 13
    %p260 = por %p258, %p259
    %p261 = scmp.ne.s32.totalorder %s250, %s251
    %p262 = scmp.eq.s32.totalorder %s27, 0
    %p263 = por %p261, %p262
    %p264 = scmp.ne.s32.totalorder %s250, %s251
    %p265 = scmp.eq.s32.totalorder %s28, 13
    %p266 = por %p264, %p265
    %p268 = scmp.ne.s32.totalorder %s251, %s267
    %p269 = scmp.eq.s32.totalorder %s28, 0
    %p270 = por %p268, %p269
    %s271 = ssub.s32 %s29, %s41
    %p272 = scmp.eq.s32.totalorder %s271, 0
    %s274 = sadd.s32 %s273, 1
    %s275 = scalar_select %p272, %s273, %s274
    %p278 = pneg %p272
    %p279 = scmp.eq.s32.totalorder %s22, 13
    %p280 = por %p278, %p279
    %p281 = scmp.ne.s32.totalorder %s273, %s276
    %p282 = scmp.eq.s32.totalorder %s22, 0
    %p283 = por %p281, %p282
    %p284 = scmp.ne.s32.totalorder %s273, %s276
    %p285 = scmp.eq.s32.totalorder %s27, 13
    %p286 = por %p284, %p285
    %p287 = scmp.ne.s32.totalorder %s276, %s277
    %p288 = scmp.eq.s32.totalorder %s27, 0
    %p289 = por %p287, %p288
    %p290 = scmp.ne.s32.totalorder %s276, %s277
    %p291 = scmp.eq.s32.totalorder %s28, 13
    %p292 = por %p290, %p291
    %p294 = scmp.ne.s32.totalorder %s277, %s293
    %p295 = scmp.eq.s32.totalorder %s28, 0
    %p296 = por %p294, %p295
    %s297 = ssub.s32 %s29, %s41
    %p298 = scmp.eq.s32.totalorder %s297, 0
    %s300 = sadd.s32 %s299, 1
    %s301 = scalar_select %p298, %s299, %s300
    %p304 = pneg %p298
    %p305 = scmp.eq.s32.totalorder %s22, 13
    %p306 = por %p304, %p305
    %p307 = scmp.ne.s32.totalorder %s299, %s302
    %p308 = scmp.eq.s32.totalorder %s22, 0
    %p309 = por %p307, %p308
    %p310 = scmp.ne.s32.totalorder %s299, %s302
    %p311 = scmp.eq.s32.totalorder %s27, 13
    %p312 = por %p310, %p311
    %p313 = scmp.ne.s32.totalorder %s302, %s303
    %p314 = scmp.eq.s32.totalorder %s27, 0
    %p315 = por %p313, %p314
    %p316 = scmp.ne.s32.totalorder %s302, %s303
    %p317 = scmp.eq.s32.totalorder %s28, 13
    %p318 = por %p316, %p317
    %p320 = scmp.ne.s32.totalorder %s303, %s319
    %p321 = scmp.eq.s32.totalorder %s28, 0
    %p322 = por %p320, %p321
    %s323 = ssub.s32 %s29, %s41
    %p324 = scmp.eq.s32.totalorder %s323, 0
    %s326 = sadd.s32 %s325, 1
    %s327 = scalar_select %p324, %s325, %s326
    %p330 = pneg %p324
    %p331 = scmp.eq.s32.totalorder %s22, 13
    %p332 = por %p330, %p331
    %p333 = scmp.ne.s32.totalorder %s325, %s328
    %p334 = scmp.eq.s32.totalorder %s22, 0
    %p335 = por %p333, %p334
    %p336 = scmp.ne.s32.totalorder %s325, %s328
    %p337 = scmp.eq.s32.totalorder %s27, 13
    %p338 = por %p336, %p337
    %p339 = scmp.ne.s32.totalorder %s328, %s329
    %p340 = scmp.eq.s32.totalorder %s27, 0
    %p341 = por %p339, %p340
    %p342 = scmp.ne.s32.totalorder %s328, %s329
    %p343 = scmp.eq.s32.totalorder %s28, 13
    %p344 = por %p342, %p343
    %p346 = scmp.ne.s32.totalorder %s329, %s345
    %p347 = scmp.eq.s32.totalorder %s28, 0
    %p348 = por %p346, %p347
    %s349 = ssub.s32 %s29, %s41
    %p350 = scmp.eq.s32.totalorder %s349, 0
    %s352 = sadd.s32 %s351, 1
    %s353 = scalar_select %p350, %s351, %s352
    %p356 = pneg %p350
    %p357 = scmp.eq.s32.totalorder %s22, 13
    %p358 = por %p356, %p357
    %p359 = scmp.ne.s32.totalorder %s351, %s354
    %p360 = scmp.eq.s32.totalorder %s22, 0
    %p361 = por %p359, %p360
    %p362 = scmp.ne.s32.totalorder %s351, %s354
    %p363 = scmp.eq.s32.totalorder %s27, 13
    %p364 = por %p362, %p363
    %p365 = scmp.ne.s32.totalorder %s354, %s355
    %p366 = scmp.eq.s32.totalorder %s27, 0
    %p367 = por %p365, %p366
    %p368 = scmp.ne.s32.totalorder %s354, %s355
    %p369 = scmp.eq.s32.totalorder %s28, 13
    %p370 = por %p368, %p369
    %p372 = scmp.ne.s32.totalorder %s355, %s371
    %p373 = scmp.eq.s32.totalorder %s28, 0
    %p374 = por %p372, %p373
    %s375 = ssub.s32 %s29, %s41
    %p376 = scmp.eq.s32.totalorder %s375, 0
    %s378 = sadd.s32 %s377, 1
    %s379 = scalar_select %p376, %s377, %s378
    %p382 = pneg %p376
    %p383 = scmp.eq.s32.totalorder %s22, 13
    %p384 = por %p382, %p383
    %p385 = scmp.ne.s32.totalorder %s377, %s380
    %p386 = scmp.eq.s32.totalorder %s22, 0
    %p387 = por %p385, %p386
    %p388 = scmp.ne.s32.totalorder %s377, %s380
    %p389 = scmp.eq.s32.totalorder %s27, 13
    %p390 = por %p388, %p389
    %p391 = scmp.ne.s32.totalorder %s380, %s381
    %p392 = scmp.eq.s32.totalorder %s27, 0
    %p393 = por %p391, %p392
    %p394 = scmp.ne.s32.totalorder %s380, %s381
    %p395 = scmp.eq.s32.totalorder %s28, 13
    %p396 = por %p394, %p395
    %p398 = scmp.ne.s32.totalorder %s381, %s397
    %p399 = scmp.eq.s32.totalorder %s28, 0
    %p400 = por %p398, %p399
    %s401 = ssub.s32 %s29, %s41
    %p402 = scmp.eq.s32.totalorder %s401, 0
    %s404 = sadd.s32 %s403, 1
    %s405 = scalar_select %p402, %s403, %s404
    %p408 = pneg %p402
    %p409 = scmp.eq.s32.totalorder %s22, 13
    %p410 = por %p408, %p409
    %p411 = scmp.ne.s32.totalorder %s403, %s406
    %p412 = scmp.eq.s32.totalorder %s22, 0
    %p413 = por %p411, %p412
    %p414 = scmp.ne.s32.totalorder %s403, %s406
    %p415 = scmp.eq.s32.totalorder %s27, 13
    %p416 = por %p414, %p415
    %p417 = scmp.ne.s32.totalorder %s406, %s407
    %p418 = scmp.eq.s32.totalorder %s27, 0
    %p419 = por %p417, %p418
    %p420 = scmp.ne.s32.totalorder %s406, %s407
    %p421 = scmp.eq.s32.totalorder %s28, 13
    %p422 = por %p420, %p421
    %p424 = scmp.ne.s32.totalorder %s407, %s423
    %p425 = scmp.eq.s32.totalorder %s28, 0
    %p426 = por %p424, %p425
    %s427 = ssub.s32 %s29, %s41
    %p428 = scmp.eq.s32.totalorder %s427, 0
    %s430 = sadd.s32 %s429, 1
    %s431 = scalar_select %p428, %s429, %s430
    %p434 = pneg %p428
    %p435 = scmp.eq.s32.totalorder %s22, 13
    %p436 = por %p434, %p435
    %p437 = scmp.ne.s32.totalorder %s429, %s432
    %p438 = scmp.eq.s32.totalorder %s22, 0
    %p439 = por %p437, %p438
    %p440 = scmp.ne.s32.totalorder %s429, %s432
    %p441 = scmp.eq.s32.totalorder %s27, 13
    %p442 = por %p440, %p441
    %p443 = scmp.ne.s32.totalorder %s432, %s433
    %p444 = scmp.eq.s32.totalorder %s27, 0
    %p445 = por %p443, %p444
    %p446 = scmp.ne.s32.totalorder %s432, %s433
    %p447 = scmp.eq.s32.totalorder %s28, 13
    %p448 = por %p446, %p447
    %p450 = scmp.ne.s32.totalorder %s433, %s449
    %p451 = scmp.eq.s32.totalorder %s28, 0
    %p452 = por %p450, %p451
    %s453 = ssub.s32 %s29, %s41
    %s454 = ssub.s32 %s30, %s37
    %s455 = sor.u32 %s453, %s454
    %p456 = scmp.eq.s32.totalorder %s455, 0
    %s458 = sadd.s32 %s457, 1
    %s459 = scalar_select %p456, %s457, %s458
    %p462 = pneg %p456
    %p463 = scmp.eq.s32.totalorder %s22, 13
    %p464 = por %p462, %p463
    %p465 = scmp.ne.s32.totalorder %s457, %s460
    %p466 = scmp.eq.s32.totalorder %s22, 0
    %p467 = por %p465, %p466
    %p468 = scmp.ne.s32.totalorder %s457, %s460
    %p469 = scmp.eq.s32.totalorder %s27, 13
    %p470 = por %p468, %p469
    %p471 = scmp.ne.s32.totalorder %s460, %s461
    %p472 = scmp.eq.s32.totalorder %s27, 0
    %p473 = por %p471, %p472
    %p474 = scmp.ne.s32.totalorder %s460, %s461
    %p475 = scmp.eq.s32.totalorder %s28, 13
    %p476 = por %p474, %p475
    %p478 = scmp.ne.s32.totalorder %s461, %s477
    %p479 = scmp.eq.s32.totalorder %s28, 0
    %p480 = por %p478, %p479
    %p481 = scmp.le.s32.totalorder 1, %s22
    %p482 = scmp.lt.s32.totalorder %s22, 15
    %p483 = pnand %p481, %p482
    %p484 = pneg %p483
    // Predicated region
    $region9: #{_device_forward.2} parent=5 // pred_check
      _
    $region10: #{_device_forward.2} parent=5 // pred_check_branch
      %486 = sbr.rel (%p483) target = $region12
    $region11: #{_device_forward.2} parent=5 // pred_region
      %s487 = ssub.s32 %s22, 1
      // Predicated region
      $region13: #{_device_forward.2} parent=11 // pred_check
        %p488 = pneg %p133
      $region14: #{_device_forward.2} parent=11 // pred_check_branch
        %490 = sbr.rel (%p488) target = $region16
      $region15: #{_device_forward.2} parent=11 // pred_region
        _
      $region16: #{_device_forward.2} parent=11 // pred_fallthru
        _
    $region12: #{_device_forward.2} parent=5 // pred_fallthru
      _
    %p491 = scmp.lt.s32.totalorder %s22, 14
    // Predicated region
    $region17: #{_device_forward.2} parent=5 // pred_check
      %p492 = pneg %p491
    $region18: #{_device_forward.2} parent=5 // pred_check_branch
      %494 = sbr.rel (%p492) target = $region20
    $region19: #{_device_forward.2} parent=5 // pred_region
      // Predicated region
      $region21: #{_device_forward.2} parent=19 // pred_check
        %p495 = pneg %p54
      $region22: #{_device_forward.2} parent=19 // pred_check_branch
        %497 = sbr.rel (%p495) target = $region24
      $region23: #{_device_forward.2} parent=19 // pred_region
        %p498 = scmp.lt.s32.totalorder %s29, 1
        %s499 = scalar_select %p498, %s29, 1
        %s500 = smul.addr %s499, 2
        %s501 = smul.addr %s500, 8
        %s502 = scalar_lea.vmem %s0, %s501
      $region24: #{_device_forward.2} parent=19 // pred_fallthru
        _
      // Predicated region
      $region25: #{_device_forward.2} parent=19 // pred_check
        %p503 = pneg %p80
      $region26: #{_device_forward.2} parent=19 // pred_check_branch
        %505 = sbr.rel (%p503) target = $region28
      $region27: #{_device_forward.2} parent=19 // pred_region
        %p506 = scmp.lt.s32.totalorder %s30, 6
        %s507 = scalar_select %p506, %s30, 6
        %s508 = smul.addr %s507, 2
        %s509 = smul.addr %s508, 8
        %s510 = scalar_lea.vmem %s1, %s509
      $region28: #{_device_forward.2} parent=19 // pred_fallthru
        _
      // Predicated region
      $region29: #{_device_forward.2} parent=19 // pred_check
        %p511 = pneg %p106
      $region30: #{_device_forward.2} parent=19 // pred_check_branch
        %513 = sbr.rel (%p511) target = $region32
      $region31: #{_device_forward.2} parent=19 // pred_region
        %p514 = scmp.lt.s32.totalorder %s30, 6
        %s515 = scalar_select %p514, %s30, 6
        %s516 = smul.addr %s515, 2
        %s517 = smul.addr %s516, 8
        %s518 = scalar_lea.vmem %s2, %s517
      $region32: #{_device_forward.2} parent=19 // pred_fallthru
        _
      // Predicated region
      $region33: #{_device_forward.2} parent=19 // pred_check
        %p519 = pneg %p153
      $region34: #{_device_forward.2} parent=19 // pred_check_branch
        %521 = sbr.rel (%p519) target = $region36
      $region35: #{_device_forward.2} parent=19 // pred_region
        %p522 = scmp.lt.s32.totalorder %s29, 1
        %s523 = scalar_select %p522, %s29, 1
        %s524 = smul.addr %s523, 12
        %s525 = smul.addr %s524, 8
        %s526 = scalar_lea.vmem %s4, %s525
      $region36: #{_device_forward.2} parent=19 // pred_fallthru
        _
      // Predicated region
      $region37: #{_device_forward.2} parent=19 // pred_check
        %p527 = pneg %p179
      $region38: #{_device_forward.2} parent=19 // pred_check_branch
        %529 = sbr.rel (%p527) target = $region40
      $region39: #{_device_forward.2} parent=19 // pred_region
        %p530 = scmp.lt.s32.totalorder %s29, 1
        %s531 = scalar_select %p530, %s29, 1
        %s532 = scalar_lea.vmem %s5, %s531
      $region40: #{_device_forward.2} parent=19 // pred_fallthru
        _
      // Predicated region
      $region41: #{_device_forward.2} parent=19 // pred_check
        %p533 = pneg %p205
      $region42: #{_device_forward.2} parent=19 // pred_check_branch
        %535 = sbr.rel (%p533) target = $region44
      $region43: #{_device_forward.2} parent=19 // pred_region
        %p536 = scmp.lt.s32.totalorder %s29, 1
        %s537 = scalar_select %p536, %s29, 1
        %s538 = smul.addr %s537, 6
        %s539 = smul.addr %s538, 8
        %s540 = scalar_lea.vmem %s6, %s539
      $region44: #{_device_forward.2} parent=19 // pred_fallthru
        _
      // Predicated region
      $region45: #{_device_forward.2} parent=19 // pred_check
        %p541 = pneg %p231
      $region46: #{_device_forward.2} parent=19 // pred_check_branch
        %543 = sbr.rel (%p541) target = $region48
      $region47: #{_device_forward.2} parent=19 // pred_region
        %p544 = scmp.lt.s32.totalorder %s29, 1
        %s545 = scalar_select %p544, %s29, 1
        %s546 = scalar_lea.vmem %s7, %s545
      $region48: #{_device_forward.2} parent=19 // pred_fallthru
        _
      // Predicated region
      $region49: #{_device_forward.2} parent=19 // pred_check
        %p547 = pneg %p257
      $region50: #{_device_forward.2} parent=19 // pred_check_branch
        %549 = sbr.rel (%p547) target = $region52
      $region51: #{_device_forward.2} parent=19 // pred_region
        %p550 = scmp.lt.s32.totalorder %s29, 1
        %s551 = scalar_select %p550, %s29, 1
        %s552 = smul.addr %s551, 6
        %s553 = smul.addr %s552, 8
        %s554 = scalar_lea.vmem %s8, %s553
      $region52: #{_device_forward.2} parent=19 // pred_fallthru
        _
      // Predicated region
      $region53: #{_device_forward.2} parent=19 // pred_check
        %p555 = pneg %p283
      $region54: #{_device_forward.2} parent=19 // pred_check_branch
        %557 = sbr.rel (%p555) target = $region56
      $region55: #{_device_forward.2} parent=19 // pred_region
        %p558 = scmp.lt.s32.totalorder %s29, 1
        %s559 = scalar_select %p558, %s29, 1
        %s560 = scalar_lea.vmem %s9, %s559
      $region56: #{_device_forward.2} parent=19 // pred_fallthru
        _
      // Predicated region
      $region57: #{_device_forward.2} parent=19 // pred_check
        %p561 = pneg %p309
      $region58: #{_device_forward.2} parent=19 // pred_check_branch
        %563 = sbr.rel (%p561) target = $region60
      $region59: #{_device_forward.2} parent=19 // pred_region
        %p564 = scmp.lt.s32.totalorder %s29, 1
        %s565 = scalar_select %p564, %s29, 1
        %s566 = smul.addr %s565, 3
        %s567 = smul.addr %s566, 4
        %s568 = scalar_lea.vmem %s10, %s567
      $region60: #{_device_forward.2} parent=19 // pred_fallthru
        _
      // Predicated region
      $region61: #{_device_forward.2} parent=19 // pred_check
        %p569 = pneg %p335
      $region62: #{_device_forward.2} parent=19 // pred_check_branch
        %571 = sbr.rel (%p569) target = $region64
      $region63: #{_device_forward.2} parent=19 // pred_region
        %p572 = scmp.lt.s32.totalorder %s29, 1
        %s573 = scalar_select %p572, %s29, 1
        %s574 = smul.addr %s573, 12
        %s575 = smul.addr %s574, 8
        %s576 = scalar_lea.vmem %s11, %s575
      $region64: #{_device_forward.2} parent=19 // pred_fallthru
        _
      // Predicated region
      $region65: #{_device_forward.2} parent=19 // pred_check
        %p577 = pneg %p361
      $region66: #{_device_forward.2} parent=19 // pred_check_branch
        %579 = sbr.rel (%p577) target = $region68
      $region67: #{_device_forward.2} parent=19 // pred_region
        %p580 = scmp.lt.s32.totalorder %s29, 1
        %s581 = scalar_select %p580, %s29, 1
        %s582 = scalar_lea.vmem %s12, %s581
      $region68: #{_device_forward.2} parent=19 // pred_fallthru
        _
      // Predicated region
      $region69: #{_device_forward.2} parent=19 // pred_check
        %p583 = pneg %p387
      $region70: #{_device_forward.2} parent=19 // pred_check_branch
        %585 = sbr.rel (%p583) target = $region72
      $region71: #{_device_forward.2} parent=19 // pred_region
        %p586 = scmp.lt.s32.totalorder %s29, 1
        %s587 = scalar_select %p586, %s29, 1
        %s588 = smul.addr %s587, 3
        %s589 = smul.addr %s588, 4
        %s590 = scalar_lea.vmem %s13, %s589
      $region72: #{_device_forward.2} parent=19 // pred_fallthru
        _
      // Predicated region
      $region73: #{_device_forward.2} parent=19 // pred_check
        %p591 = pneg %p413
      $region74: #{_device_forward.2} parent=19 // pred_check_branch
        %593 = sbr.rel (%p591) target = $region76
      $region75: #{_device_forward.2} parent=19 // pred_region
        %p594 = scmp.lt.s32.totalorder %s29, 1
        %s595 = scalar_select %p594, %s29, 1
        %s596 = smul.addr %s595, 12
        %s597 = smul.addr %s596, 8
        %s598 = scalar_lea.vmem %s14, %s597
      $region76: #{_device_forward.2} parent=19 // pred_fallthru
        _
      // Predicated region
      $region77: #{_device_forward.2} parent=19 // pred_check
        %p599 = pneg %p439
      $region78: #{_device_forward.2} parent=19 // pred_check_branch
        %601 = sbr.rel (%p599) target = $region80
      $region79: #{_device_forward.2} parent=19 // pred_region
        %p602 = scmp.lt.s32.totalorder %s29, 1
        %s603 = scalar_select %p602, %s29, 1
        %s604 = scalar_lea.vmem %s15, %s603
      $region80: #{_device_forward.2} parent=19 // pred_fallthru
        _
    $region20: #{_device_forward.2} parent=5 // pred_fallthru
      _
    %p605 = scmp.le.s32.totalorder 1, %s22
    %p606 = scmp.lt.s32.totalorder %s22, 15
    %p607 = pnand %p605, %p606
    %p608 = pneg %p607
    // Predicated region
    $region81: #{_device_forward.2} parent=5 // pred_check
      _
    $region82: #{_device_forward.2} parent=5 // pred_check_branch
      %610 = sbr.rel (%p607) target = $region84
    $region83: #{_device_forward.2} parent=5 // pred_region
      %s611 = ssub.s32 %s22, 1
      %p612 = scmp.lt.s32.totalorder %s31, 1
      %s613 = scalar_select %p612, %s31, 1
      %s614 = smul.addr %s613, 2
      %s615 = smul.addr %s614, 8
      %s616 = scalar_lea.vmem %s0, %s615
      %p617 = pneg %p60
      %p618 = pneg %p57
      %p619 = scmp.lt.s32.totalorder %s32, 6
      %s620 = scalar_select %p619, %s32, 6
      %s621 = smul.addr %s620, 2
      %s622 = smul.addr %s621, 8
      %s623 = scalar_lea.vmem %s1, %s622
      %p624 = pneg %p86
      %p625 = pneg %p83
      %p626 = scmp.lt.s32.totalorder %s32, 6
      %s627 = scalar_select %p626, %s32, 6
      %s628 = smul.addr %s627, 2
      %s629 = smul.addr %s628, 8
      %s630 = scalar_lea.vmem %s2, %s629
      %p631 = pneg %p112
      %p632 = pneg %p109
      %p633 = pneg %p133
      %p634 = pneg %p130
      %p635 = scmp.lt.s32.totalorder %s31, 1
      %s636 = scalar_select %p635, %s31, 1
      %s637 = smul.addr %s636, 12
      %s638 = smul.addr %s637, 8
      %s639 = scalar_lea.vmem %s4, %s638
      %p640 = pneg %p159
      %p641 = pneg %p156
      %p642 = scmp.lt.s32.totalorder %s31, 1
      %s643 = scalar_select %p642, %s31, 1
      %s644 = scalar_lea.vmem %s5, %s643
      %p645 = pneg %p185
      %p646 = pneg %p182
      %p647 = scmp.lt.s32.totalorder %s31, 1
      %s648 = scalar_select %p647, %s31, 1
      %s649 = smul.addr %s648, 6
      %s650 = smul.addr %s649, 8
      %s651 = scalar_lea.vmem %s6, %s650
      %p652 = pneg %p211
      %p653 = pneg %p208
      %p654 = scmp.lt.s32.totalorder %s31, 1
      %s655 = scalar_select %p654, %s31, 1
      %s656 = scalar_lea.vmem %s7, %s655
      %p657 = pneg %p237
      %p658 = pneg %p234
      %p659 = scmp.lt.s32.totalorder %s31, 1
      %s660 = scalar_select %p659, %s31, 1
      %s661 = smul.addr %s660, 6
      %s662 = smul.addr %s661, 8
      %s663 = scalar_lea.vmem %s8, %s662
      %p664 = pneg %p263
      %p665 = pneg %p260
      %p666 = scmp.lt.s32.totalorder %s31, 1
      %s667 = scalar_select %p666, %s31, 1
      %s668 = scalar_lea.vmem %s9, %s667
      %p669 = pneg %p289
      %p670 = pneg %p286
      %p671 = scmp.lt.s32.totalorder %s31, 1
      %s672 = scalar_select %p671, %s31, 1
      %s673 = smul.addr %s672, 3
      %s674 = smul.addr %s673, 4
      %s675 = scalar_lea.vmem %s10, %s674
      %p676 = pneg %p315
      %p677 = pneg %p312
      %p678 = scmp.lt.s32.totalorder %s31, 1
      %s679 = scalar_select %p678, %s31, 1
      %s680 = smul.addr %s679, 12
      %s681 = smul.addr %s680, 8
      %s682 = scalar_lea.vmem %s11, %s681
      %p683 = pneg %p341
      %p684 = pneg %p338
      %p685 = scmp.lt.s32.totalorder %s31, 1
      %s686 = scalar_select %p685, %s31, 1
      %s687 = scalar_lea.vmem %s12, %s686
      %p688 = pneg %p367
      %p689 = pneg %p364
      %p690 = scmp.lt.s32.totalorder %s31, 1
      %s691 = scalar_select %p690, %s31, 1
      %s692 = smul.addr %s691, 3
      %s693 = smul.addr %s692, 4
      %s694 = scalar_lea.vmem %s13, %s693
      %p695 = pneg %p393
      %p696 = pneg %p390
      %p697 = scmp.lt.s32.totalorder %s31, 1
      %s698 = scalar_select %p697, %s31, 1
      %s699 = smul.addr %s698, 12
      %s700 = smul.addr %s699, 8
      %s701 = scalar_lea.vmem %s14, %s700
      %p702 = pneg %p419
      %p703 = pneg %p416
      %p704 = scmp.lt.s32.totalorder %s31, 1
      %s705 = scalar_select %p704, %s31, 1
      %s706 = scalar_lea.vmem %s15, %s705
      %p707 = pneg %p445
      %p708 = pneg %p442
      %p709 = pneg %p473
      %p710 = pneg %p470
      %p711 = scmp.lt.s32.totalorder %s31, 1
      %s712 = scalar_select %p711, %s31, 1
      %p713 = scmp.lt.s32.totalorder %s32, 6
      %s714 = scalar_select %p713, %s32, 6
      %s715 = smul.addr %s714, 2
      %s716 = smul.addr %s712, 14
      %s717 = sadd.s32 %s715, %s716
      %s718 = smul.addr %s717, 8
      %s719 = scalar_lea.vmem %s16, %s718
      %p720 = scmp.lt.s32.totalorder %s31, 1
      %s721 = scalar_select %p720, %s31, 1
      %s722 = smul.addr %s721, 2
      %s723 = smul.addr %s722, 8
      %s724 = scalar_lea.vmem %s0, %s723
      %p725 = scmp.lt.s32.totalorder %s32, 6
      %s726 = scalar_select %p725, %s32, 6
      %s727 = smul.addr %s726, 2
      %s728 = smul.addr %s727, 8
      %s729 = scalar_lea.vmem %s1, %s728
      %p730 = scmp.lt.s32.totalorder %s32, 6
      %s731 = scalar_select %p730, %s32, 6
      %s732 = smul.addr %s731, 2
      %s733 = smul.addr %s732, 8
      %s734 = scalar_lea.vmem %s2, %s733
      %p735 = scmp.lt.s32.totalorder %s31, 1
      %s736 = scalar_select %p735, %s31, 1
      %s737 = smul.addr %s736, 12
      %s738 = smul.addr %s737, 8
      %s739 = scalar_lea.vmem %s4, %s738
      %p740 = scmp.lt.s32.totalorder %s31, 1
      %s741 = scalar_select %p740, %s31, 1
      %s742 = scalar_lea.vmem %s5, %s741
      %p743 = scmp.lt.s32.totalorder %s31, 1
      %s744 = scalar_select %p743, %s31, 1
      %s745 = smul.addr %s744, 6
      %s746 = smul.addr %s745, 8
      %s747 = scalar_lea.vmem %s6, %s746
      %p748 = scmp.lt.s32.totalorder %s31, 1
      %s749 = scalar_select %p748, %s31, 1
      %s750 = scalar_lea.vmem %s7, %s749
      %p751 = scmp.lt.s32.totalorder %s31, 1
      %s752 = scalar_select %p751, %s31, 1
      %s753 = smul.addr %s752, 6
      %s754 = smul.addr %s753, 8
      %s755 = scalar_lea.vmem %s8, %s754
      %p756 = scmp.lt.s32.totalorder %s31, 1
      %s757 = scalar_select %p756, %s31, 1
      %s758 = scalar_lea.vmem %s9, %s757
      %p759 = scmp.lt.s32.totalorder %s31, 1
      %s760 = scalar_select %p759, %s31, 1
      %s761 = smul.addr %s760, 3
      %s762 = smul.addr %s761, 4
      %s763 = scalar_lea.vmem %s10, %s762
      %p764 = scmp.lt.s32.totalorder %s31, 1
      %s765 = scalar_select %p764, %s31, 1
      %s766 = smul.addr %s765, 12
      %s767 = smul.addr %s766, 8
      %s768 = scalar_lea.vmem %s11, %s767
      %p769 = scmp.lt.s32.totalorder %s31, 1
      %s770 = scalar_select %p769, %s31, 1
      %s771 = scalar_lea.vmem %s12, %s770
      %p772 = scmp.lt.s32.totalorder %s31, 1
      %s773 = scalar_select %p772, %s31, 1
      %s774 = smul.addr %s773, 3
      %s775 = smul.addr %s774, 4
      %s776 = scalar_lea.vmem %s13, %s775
      %p777 = scmp.lt.s32.totalorder %s31, 1
      %s778 = scalar_select %p777, %s31, 1
      %s779 = smul.addr %s778, 12
      %s780 = smul.addr %s779, 8
      %s781 = scalar_lea.vmem %s14, %s780
      %p782 = scmp.lt.s32.totalorder %s31, 1
      %s783 = scalar_select %p782, %s31, 1
      %s784 = scalar_lea.vmem %s15, %s783
      %p785 = scmp.lt.s32.totalorder %s31, 1
      %s786 = scalar_select %p785, %s31, 1
      %p787 = scmp.lt.s32.totalorder %s32, 6
      %s788 = scalar_select %p787, %s32, 6
      %s789 = smul.addr %s788, 2
      %s790 = smul.addr %s786, 14
      %s791 = sadd.s32 %s789, %s790
      %s792 = smul.addr %s791, 8
      %s793 = scalar_lea.vmem %s16, %s792
      %p794 = scmp.eq.s32.totalorder %s32, 0
      // Predicated region
      $region85: #{_device_forward.2} parent=83 // pred_check
        %p795 = pneg %p794
      $region86: #{_device_forward.2} parent=83 // pred_check_branch
        %797 = sbr.rel (%p795) target = $region88
      $region87: #{_device_forward.2} parent=83 // pred_region
        %v798 = vld [vmem:[%s724] sm:$0xff]
        %v799 = vld [vmem:[%s724 + $0x8] sm:$0xff]
        %vm800 = vcmask 261120
        %801 = vst.msk [vmem:[#allocation2] sm:$0xff] %vm800, %v798
        %802 = vst.msk [vmem:[#allocation2 + $0x8] sm:$0xff] %vm800, %v799
      $region88: #{_device_forward.2} parent=83 // pred_fallthru
        _
      %v803 = vld [vmem:[#allocation2] sm:$0xff]
      %v804 = vld [vmem:[#allocation2 + $0x8] sm:$0xff]
      %v805 = vld [vmem:[%s729] sm:$0xff]
      %v806 = vld [vmem:[%s729 + $0x8] sm:$0xff]
      %v807 = vld [vmem:[%s734] sm:$0xff]
      %v808 = vld [vmem:[%s734 + $0x8] sm:$0xff]
      %v809 = vld [vmem:[%s3] sm:$0xff]
      %v810 = vld [vmem:[%s3 + $0x8] sm:$0xff]
      %vm811 = vcmask 130048
      %v813 = vsel %vm811, %v809, 0
      %v816 = vsel %vm811, %v810, 0
      %818 = vmatpush.msra.mxu0 0.0
      %819 = vmatpush.msra.mxu0 0.0
      %820 = vmatpush.msra.mxu0 0.0
      %821 = vmatpush.msra.mxu0 0.0
      %822 = vmatpush.msra.mxu0 0.0
      %823 = vmatpush.msra.mxu0 0.0
      %824 = vmatpush.msra.mxu0 0.0
      %825 = vmatpush.msra.mxu0 0.0
      %826 = vmatpush.msra.mxu0 0.0
      %827 = vmatpush.msra.mxu0 0.0
      %828 = vmatpush.msra.mxu0 0.0
      %829 = vmatpush.msra.mxu0 0.0
      %830 = vmatpush.msra.mxu0 0.0
      %831 = vmatpush.msra.mxu0 0.0
      %832 = vmatpush.msra.mxu0 %v804
      %833 = vmatpush.msra.mxu0 %v803
      %834 = vmatmul.f32.gmra.mxu0 %v813
      %v835 = vpop.f32.mrf.mxu0
      %v836 = vadd.f32 0.0, %v835
      %837 = vmatmul.f32.gmra.mxu0 %v816
      %v838 = vpop.f32.mrf.mxu0
      %v839 = vadd.f32 0.0, %v838
      %840 = vdwg.mxu0
      %s841 = scalar_lea.vmem %s3, 16
      %v842 = vld [vmem:[%s841] sm:$0xff]
      %v843 = vld [vmem:[%s841 + $0x8] sm:$0xff]
      %v845 = vsel %vm811, %v842, 0
      %v848 = vsel %vm811, %v843, 0
      %850 = vmatpush.msra.mxu0 0.0
      %851 = vmatpush.msra.mxu0 0.0
      %852 = vmatpush.msra.mxu0 0.0
      %853 = vmatpush.msra.mxu0 0.0
      %854 = vmatpush.msra.mxu0 0.0
      %855 = vmatpush.msra.mxu0 0.0
      %856 = vmatpush.msra.mxu0 0.0
      %857 = vmatpush.msra.mxu0 0.0
      %858 = vmatpush.msra.mxu0 0.0
      %859 = vmatpush.msra.mxu0 0.0
      %860 = vmatpush.msra.mxu0 0.0
      %861 = vmatpush.msra.mxu0 0.0
      %862 = vmatpush.msra.mxu0 0.0
      %863 = vmatpush.msra.mxu0 0.0
      %864 = vmatpush.msra.mxu0 %v804
      %865 = vmatpush.msra.mxu0 %v803
      %866 = vmatmul.f32.gmra.mxu0 %v845
      %v867 = vpop.f32.mrf.mxu0
      %v868 = vadd.f32 0.0, %v867
      %869 = vmatmul.f32.gmra.mxu0 %v848
      %v870 = vpop.f32.mrf.mxu0
      %v871 = vadd.f32 0.0, %v870
      %872 = vdwg.mxu0
      %v873 = vld [vmem:[%s742] sm:$0x1]
      %v874 = vld [vmem:[%s739] sm:$0xff]
      %v875 = vld [vmem:[%s739 + $0x8] sm:$0xff]
      %v876 = vld [vmem:[%s739 + $0x10] sm:$0xff]
      %v877 = vld [vmem:[%s739 + $0x18] sm:$0xff]
      %s878 = scalar_lea.vmem %s739, 32
      %v879 = vld [vmem:[%s878] sm:$0xff]
      %v880 = vld [vmem:[%s878 + $0x8] sm:$0xff]
      %v881 = vld [vmem:[%s878 + $0x10] sm:$0xff]
      %v882 = vld [vmem:[%s878 + $0x18] sm:$0xff]
      %vm883 = vcmask 261120
      %v885 = vsel %vm883, %v836, 0
      %v888 = vsel %vm883, %v839, 0
      %890 = vmatpush.msra.mxu0 0.0
      %891 = vmatpush.msra.mxu0 0.0
      %892 = vmatpush.msra.mxu0 0.0
      %893 = vmatpush.msra.mxu0 0.0
      %894 = vmatpush.msra.mxu0 0.0
      %895 = vmatpush.msra.mxu0 0.0
      %896 = vmatpush.msra.mxu0 0.0
      %897 = vmatpush.msra.mxu0 0.0
      %898 = vmatpush.msra.mxu0 0.0
      %899 = vmatpush.msra.mxu0 0.0
      %900 = vmatpush.msra.mxu0 0.0
      %901 = vmatpush.msra.mxu0 0.0
      %902 = vmatpush.msra.mxu0 %v882
      %903 = vmatpush.msra.mxu0 %v881
      %904 = vmatpush.msra.mxu0 %v880
      %905 = vmatpush.msra.mxu0 %v879
      %906 = vmatmul.f32.gmra.mxu0 %v885
      %v907 = vpop.f32.mrf.mxu0
      %v908 = vadd.f32 0.0, %v907
      %909 = vmatmul.f32.gmra.mxu0 %v888
      %v910 = vpop.f32.mrf.mxu0
      %v911 = vadd.f32 0.0, %v910
      %912 = vdwg.mxu0
      %v914 = vsel %vm883, %v803, 0
      %v917 = vsel %vm883, %v804, 0
      %919 = vmatpush.msra.mxu0 0.0
      %920 = vmatpush.msra.mxu0 0.0
      %921 = vmatpush.msra.mxu0 0.0
      %922 = vmatpush.msra.mxu0 0.0
      %923 = vmatpush.msra.mxu0 0.0
      %924 = vmatpush.msra.mxu0 0.0
      %925 = vmatpush.msra.mxu0 0.0
      %926 = vmatpush.msra.mxu0 0.0
      %927 = vmatpush.msra.mxu0 0.0
      %928 = vmatpush.msra.mxu0 0.0
      %929 = vmatpush.msra.mxu0 0.0
      %930 = vmatpush.msra.mxu0 0.0
      %931 = vmatpush.msra.mxu0 %v877
      %932 = vmatpush.msra.mxu0 %v876
      %933 = vmatpush.msra.mxu0 %v875
      %934 = vmatpush.msra.mxu0 %v874
      %935 = vmatmul.f32.gmra.mxu0 %v914
      %v936 = vpop.f32.mrf.mxu0
      %v937 = vadd.f32 %v908, %v936
      %938 = vmatmul.f32.gmra.mxu0 %v917
      %v939 = vpop.f32.mrf.mxu0
      %v940 = vadd.f32 %v911, %v939
      %941 = vdwg.mxu0
      %s942 = scalar_lea.vmem %s739, 64
      %v943 = vld [vmem:[%s942] sm:$0xff]
      %v944 = vld [vmem:[%s942 + $0x8] sm:$0xff]
      %v945 = vld [vmem:[%s942 + $0x10] sm:$0xff]
      %v946 = vld [vmem:[%s942 + $0x18] sm:$0xff]
      %v948 = vsel %vm883, %v868, 0
      %v951 = vsel %vm883, %v871, 0
      %953 = vmatpush.msra.mxu0 0.0
      %954 = vmatpush.msra.mxu0 0.0
      %955 = vmatpush.msra.mxu0 0.0
      %956 = vmatpush.msra.mxu0 0.0
      %957 = vmatpush.msra.mxu0 0.0
      %958 = vmatpush.msra.mxu0 0.0
      %959 = vmatpush.msra.mxu0 0.0
      %960 = vmatpush.msra.mxu0 0.0
      %961 = vmatpush.msra.mxu0 0.0
      %962 = vmatpush.msra.mxu0 0.0
      %963 = vmatpush.msra.mxu0 0.0
      %964 = vmatpush.msra.mxu0 0.0
      %965 = vmatpush.msra.mxu0 %v946
      %966 = vmatpush.msra.mxu0 %v945
      %967 = vmatpush.msra.mxu0 %v944
      %968 = vmatpush.msra.mxu0 %v943
      %969 = vmatmul.f32.gmra.mxu0 %v948
      %v970 = vpop.f32.mrf.mxu0
      %v971 = vadd.f32 0.0, %v970
      %972 = vmatmul.f32.gmra.mxu0 %v951
      %v973 = vpop.f32.mrf.mxu0
      %v974 = vadd.f32 0.0, %v973
      %975 = vdwg.mxu0
      %v976 = vadd.f32 %v937, %v971
      %v977 = vadd.f32 %v940, %v974
      %v979 = vperm.slane %v873, 0
      %v981 = vadd.f32 %v976, %v979
      %v982 = vadd.f32 %v977, %v979
      %v983 = vtanh.pop %v981
      %v984 = vtanh.pop %v982
      %985 = vmatpush.msra.mxu0 0.0
      %986 = vmatpush.msra.mxu0 0.0
      %987 = vmatpush.msra.mxu0 0.0
      %988 = vmatpush.msra.mxu0 0.0
      %989 = vmatpush.msra.mxu0 0.0
      %990 = vmatpush.msra.mxu0 0.0
      %991 = vmatpush.msra.mxu0 0.0
      %992 = vmatpush.msra.mxu0 0.0
      %993 = vmatpush.msra.mxu0 0.0
      %994 = vmatpush.msra.mxu0 0.0
      %995 = vmatpush.msra.mxu0 0.0
      %996 = vmatpush.msra.mxu0 0.0
      %997 = vmatpush.msra.mxu0 0.0
      %998 = vmatpush.msra.mxu0 0.0
      %999 = vmatpush.msra.mxu0 %v984
      %1000 = vmatpush.msra.mxu0 %v983
      %1001 = vmatmul.f32.gmra.mxu0 %v813
      %v1002 = vpop.f32.mrf.mxu0
      %v1003 = vadd.f32 0.0, %v1002
      %1004 = vmatmul.f32.gmra.mxu0 %v816
      %v1005 = vpop.f32.mrf.mxu0
      %v1006 = vadd.f32 0.0, %v1005
      %1007 = vdwg.mxu0
      %1008 = vmatpush.msra.mxu0 0.0
      %1009 = vmatpush.msra.mxu0 0.0
      %1010 = vmatpush.msra.mxu0 0.0
      %1011 = vmatpush.msra.mxu0 0.0
      %1012 = vmatpush.msra.mxu0 0.0
      %1013 = vmatpush.msra.mxu0 0.0
      %1014 = vmatpush.msra.mxu0 0.0
      %1015 = vmatpush.msra.mxu0 0.0
      %1016 = vmatpush.msra.mxu0 0.0
      %1017 = vmatpush.msra.mxu0 0.0
      %1018 = vmatpush.msra.mxu0 0.0
      %1019 = vmatpush.msra.mxu0 0.0
      %1020 = vmatpush.msra.mxu0 0.0
      %1021 = vmatpush.msra.mxu0 0.0
      %1022 = vmatpush.msra.mxu0 %v984
      %1023 = vmatpush.msra.mxu0 %v983
      %1024 = vmatmul.f32.gmra.mxu0 %v845
      %v1025 = vpop.f32.mrf.mxu0
      %v1026 = vadd.f32 0.0, %v1025
      %1027 = vmatmul.f32.gmra.mxu0 %v848
      %v1028 = vpop.f32.mrf.mxu0
      %v1029 = vadd.f32 0.0, %v1028
      %1030 = vdwg.mxu0
      %v1031 = vld [vmem:[%s750] sm:$0x1]
      %v1032 = vld [vmem:[%s747] sm:$0xff]
      %v1033 = vld [vmem:[%s747 + $0x8] sm:$0xff]
      %s1034 = scalar_lea.vmem %s747, 16
      %v1035 = vld [vmem:[%s1034] sm:$0xff]
      %v1036 = vld [vmem:[%s1034 + $0x8] sm:$0xff]
      %v1038 = vsel %vm811, %v1003, 0
      %v1041 = vsel %vm811, %v1006, 0
      %1043 = vmatpush.msra.mxu0 0.0
      %1044 = vmatpush.msra.mxu0 0.0
      %1045 = vmatpush.msra.mxu0 0.0
      %1046 = vmatpush.msra.mxu0 0.0
      %1047 = vmatpush.msra.mxu0 0.0
      %1048 = vmatpush.msra.mxu0 0.0
      %1049 = vmatpush.msra.mxu0 0.0
      %1050 = vmatpush.msra.mxu0 0.0
      %1051 = vmatpush.msra.mxu0 0.0
      %1052 = vmatpush.msra.mxu0 0.0
      %1053 = vmatpush.msra.mxu0 0.0
      %1054 = vmatpush.msra.mxu0 0.0
      %1055 = vmatpush.msra.mxu0 0.0
      %1056 = vmatpush.msra.mxu0 0.0
      %1057 = vmatpush.msra.mxu0 %v1036
      %1058 = vmatpush.msra.mxu0 %v1035
      %1059 = vmatmul.f32.gmra.mxu0 %v1038
      %v1060 = vpop.f32.mrf.mxu0
      %v1061 = vadd.f32 0.0, %v1060
      %1062 = vmatmul.f32.gmra.mxu0 %v1041
      %v1063 = vpop.f32.mrf.mxu0
      %v1064 = vadd.f32 0.0, %v1063
      %1065 = vdwg.mxu0
      %v1067 = vsel %vm811, %v983, 0
      %v1070 = vsel %vm811, %v984, 0
      %1072 = vmatpush.msra.mxu0 0.0
      %1073 = vmatpush.msra.mxu0 0.0
      %1074 = vmatpush.msra.mxu0 0.0
      %1075 = vmatpush.msra.mxu0 0.0
      %1076 = vmatpush.msra.mxu0 0.0
      %1077 = vmatpush.msra.mxu0 0.0
      %1078 = vmatpush.msra.mxu0 0.0
      %1079 = vmatpush.msra.mxu0 0.0
      %1080 = vmatpush.msra.mxu0 0.0
      %1081 = vmatpush.msra.mxu0 0.0
      %1082 = vmatpush.msra.mxu0 0.0
      %1083 = vmatpush.msra.mxu0 0.0
      %1084 = vmatpush.msra.mxu0 0.0
      %1085 = vmatpush.msra.mxu0 0.0
      %1086 = vmatpush.msra.mxu0 %v1033
      %1087 = vmatpush.msra.mxu0 %v1032
      %1088 = vmatmul.f32.gmra.mxu0 %v1067
      %v1089 = vpop.f32.mrf.mxu0
      %v1090 = vadd.f32 %v1061, %v1089
      %1091 = vmatmul.f32.gmra.mxu0 %v1070
      %v1092 = vpop.f32.mrf.mxu0
      %v1093 = vadd.f32 %v1064, %v1092
      %1094 = vdwg.mxu0
      %s1095 = scalar_lea.vmem %s747, 32
      %v1096 = vld [vmem:[%s1095] sm:$0xff]
      %v1097 = vld [vmem:[%s1095 + $0x8] sm:$0xff]
      %v1099 = vsel %vm811, %v1026, 0
      %v1102 = vsel %vm811, %v1029, 0
      %1104 = vmatpush.msra.mxu0 0.0
      %1105 = vmatpush.msra.mxu0 0.0
      %1106 = vmatpush.msra.mxu0 0.0
      %1107 = vmatpush.msra.mxu0 0.0
      %1108 = vmatpush.msra.mxu0 0.0
      %1109 = vmatpush.msra.mxu0 0.0
      %1110 = vmatpush.msra.mxu0 0.0
      %1111 = vmatpush.msra.mxu0 0.0
      %1112 = vmatpush.msra.mxu0 0.0
      %1113 = vmatpush.msra.mxu0 0.0
      %1114 = vmatpush.msra.mxu0 0.0
      %1115 = vmatpush.msra.mxu0 0.0
      %1116 = vmatpush.msra.mxu0 0.0
      %1117 = vmatpush.msra.mxu0 0.0
      %1118 = vmatpush.msra.mxu0 %v1097
      %1119 = vmatpush.msra.mxu0 %v1096
      %1120 = vmatmul.f32.gmra.mxu0 %v1099
      %v1121 = vpop.f32.mrf.mxu0
      %v1122 = vadd.f32 0.0, %v1121
      %1123 = vmatmul.f32.gmra.mxu0 %v1102
      %v1124 = vpop.f32.mrf.mxu0
      %v1125 = vadd.f32 0.0, %v1124
      %1126 = vdwg.mxu0
      %v1127 = vadd.f32 %v1090, %v1122
      %v1128 = vadd.f32 %v1093, %v1125
      %v1130 = vperm.slane %v1031, 0
      %v1132 = vadd.f32 %v1127, %v1130
      %v1133 = vadd.f32 %v1128, %v1130
      %v1134 = vtanh.pop %v1132
      %v1135 = vtanh.pop %v1133
      %1136 = vmatpush.msra.mxu0 0.0
      %1137 = vmatpush.msra.mxu0 0.0
      %1138 = vmatpush.msra.mxu0 0.0
      %1139 = vmatpush.msra.mxu0 0.0
      %1140 = vmatpush.msra.mxu0 0.0
      %1141 = vmatpush.msra.mxu0 0.0
      %1142 = vmatpush.msra.mxu0 0.0
      %1143 = vmatpush.msra.mxu0 0.0
      %1144 = vmatpush.msra.mxu0 0.0
      %1145 = vmatpush.msra.mxu0 0.0
      %1146 = vmatpush.msra.mxu0 0.0
      %1147 = vmatpush.msra.mxu0 0.0
      %1148 = vmatpush.msra.mxu0 0.0
      %1149 = vmatpush.msra.mxu0 0.0
      %1150 = vmatpush.msra.mxu0 %v1135
      %1151 = vmatpush.msra.mxu0 %v1134
      %1152 = vmatmul.f32.gmra.mxu0 %v813
      %v1153 = vpop.f32.mrf.mxu0
      %v1154 = vadd.f32 0.0, %v1153
      %1155 = vmatmul.f32.gmra.mxu0 %v816
      %v1156 = vpop.f32.mrf.mxu0
      %v1157 = vadd.f32 0.0, %v1156
      %1158 = vdwg.mxu0
      %1159 = vmatpush.msra.mxu0 0.0
      %1160 = vmatpush.msra.mxu0 0.0
      %1161 = vmatpush.msra.mxu0 0.0
      %1162 = vmatpush.msra.mxu0 0.0
      %1163 = vmatpush.msra.mxu0 0.0
      %1164 = vmatpush.msra.mxu0 0.0
      %1165 = vmatpush.msra.mxu0 0.0
      %1166 = vmatpush.msra.mxu0 0.0
      %1167 = vmatpush.msra.mxu0 0.0
      %1168 = vmatpush.msra.mxu0 0.0
      %1169 = vmatpush.msra.mxu0 0.0
      %1170 = vmatpush.msra.mxu0 0.0
      %1171 = vmatpush.msra.mxu0 0.0
      %1172 = vmatpush.msra.mxu0 0.0
      %1173 = vmatpush.msra.mxu0 %v1135
      %1174 = vmatpush.msra.mxu0 %v1134
      %1175 = vmatmul.f32.gmra.mxu0 %v845
      %v1176 = vpop.f32.mrf.mxu0
      %v1177 = vadd.f32 0.0, %v1176
      %1178 = vmatmul.f32.gmra.mxu0 %v848
      %v1179 = vpop.f32.mrf.mxu0
      %v1180 = vadd.f32 0.0, %v1179
      %1181 = vdwg.mxu0
      %v1182 = vld [vmem:[%s758] sm:$0x1]
      %v1183 = vld [vmem:[%s755] sm:$0xff]
      %v1184 = vld [vmem:[%s755 + $0x8] sm:$0xff]
      %s1185 = scalar_lea.vmem %s755, 16
      %v1186 = vld [vmem:[%s1185] sm:$0xff]
      %v1187 = vld [vmem:[%s1185 + $0x8] sm:$0xff]
      %v1189 = vsel %vm811, %v1154, 0
      %v1192 = vsel %vm811, %v1157, 0
      %1194 = vmatpush.msra.mxu0 0.0
      %1195 = vmatpush.msra.mxu0 0.0
      %1196 = vmatpush.msra.mxu0 0.0
      %1197 = vmatpush.msra.mxu0 0.0
      %1198 = vmatpush.msra.mxu0 0.0
      %1199 = vmatpush.msra.mxu0 0.0
      %1200 = vmatpush.msra.mxu0 0.0
      %1201 = vmatpush.msra.mxu0 0.0
      %1202 = vmatpush.msra.mxu0 0.0
      %1203 = vmatpush.msra.mxu0 0.0
      %1204 = vmatpush.msra.mxu0 0.0
      %1205 = vmatpush.msra.mxu0 0.0
      %1206 = vmatpush.msra.mxu0 0.0
      %1207 = vmatpush.msra.mxu0 0.0
      %1208 = vmatpush.msra.mxu0 %v1187
      %1209 = vmatpush.msra.mxu0 %v1186
      %1210 = vmatmul.f32.gmra.mxu0 %v1189
      %v1211 = vpop.f32.mrf.mxu0
      %v1212 = vadd.f32 0.0, %v1211
      %1213 = vmatmul.f32.gmra.mxu0 %v1192
      %v1214 = vpop.f32.mrf.mxu0
      %v1215 = vadd.f32 0.0, %v1214
      %1216 = vdwg.mxu0
      %v1218 = vsel %vm811, %v1134, 0
      %v1221 = vsel %vm811, %v1135, 0
      %1223 = vmatpush.msra.mxu0 0.0
      %1224 = vmatpush.msra.mxu0 0.0
      %1225 = vmatpush.msra.mxu0 0.0
      %1226 = vmatpush.msra.mxu0 0.0
      %1227 = vmatpush.msra.mxu0 0.0
      %1228 = vmatpush.msra.mxu0 0.0
      %1229 = vmatpush.msra.mxu0 0.0
      %1230 = vmatpush.msra.mxu0 0.0
      %1231 = vmatpush.msra.mxu0 0.0
      %1232 = vmatpush.msra.mxu0 0.0
      %1233 = vmatpush.msra.mxu0 0.0
      %1234 = vmatpush.msra.mxu0 0.0
      %1235 = vmatpush.msra.mxu0 0.0
      %1236 = vmatpush.msra.mxu0 0.0
      %1237 = vmatpush.msra.mxu0 %v1184
      %1238 = vmatpush.msra.mxu0 %v1183
      %1239 = vmatmul.f32.gmra.mxu0 %v1218
      %v1240 = vpop.f32.mrf.mxu0
      %v1241 = vadd.f32 %v1212, %v1240
      %1242 = vmatmul.f32.gmra.mxu0 %v1221
      %v1243 = vpop.f32.mrf.mxu0
      %v1244 = vadd.f32 %v1215, %v1243
      %1245 = vdwg.mxu0
      %s1246 = scalar_lea.vmem %s755, 32
      %v1247 = vld [vmem:[%s1246] sm:$0xff]
      %v1248 = vld [vmem:[%s1246 + $0x8] sm:$0xff]
      %v1250 = vsel %vm811, %v1177, 0
      %v1253 = vsel %vm811, %v1180, 0
      %1255 = vmatpush.msra.mxu0 0.0
      %1256 = vmatpush.msra.mxu0 0.0
      %1257 = vmatpush.msra.mxu0 0.0
      %1258 = vmatpush.msra.mxu0 0.0
      %1259 = vmatpush.msra.mxu0 0.0
      %1260 = vmatpush.msra.mxu0 0.0
      %1261 = vmatpush.msra.mxu0 0.0
      %1262 = vmatpush.msra.mxu0 0.0
      %1263 = vmatpush.msra.mxu0 0.0
      %1264 = vmatpush.msra.mxu0 0.0
      %1265 = vmatpush.msra.mxu0 0.0
      %1266 = vmatpush.msra.mxu0 0.0
      %1267 = vmatpush.msra.mxu0 0.0
      %1268 = vmatpush.msra.mxu0 0.0
      %1269 = vmatpush.msra.mxu0 %v1248
      %1270 = vmatpush.msra.mxu0 %v1247
      %1271 = vmatmul.f32.gmra.mxu0 %v1250
      %v1272 = vpop.f32.mrf.mxu0
      %v1273 = vadd.f32 0.0, %v1272
      %1274 = vmatmul.f32.gmra.mxu0 %v1253
      %v1275 = vpop.f32.mrf.mxu0
      %v1276 = vadd.f32 0.0, %v1275
      %1277 = vdwg.mxu0
      %v1278 = vadd.f32 %v1241, %v1273
      %v1279 = vadd.f32 %v1244, %v1276
      %v1281 = vperm.slane %v1182, 0
      %v1283 = vadd.f32 %v1278, %v1281
      %v1284 = vadd.f32 %v1279, %v1281
      %v1285 = vmul.f32 %v1283, 0.5
      %v1286 = vmul.f32 %v1284, 0.5
      %v1287 = vadd.f32 %v803, %v1285
      %v1288 = vadd.f32 %v804, %v1286
      %1289 = vmatpush.msra.mxu0 0.0
      %1290 = vmatpush.msra.mxu0 0.0
      %1291 = vmatpush.msra.mxu0 0.0
      %1292 = vmatpush.msra.mxu0 0.0
      %1293 = vmatpush.msra.mxu0 0.0
      %1294 = vmatpush.msra.mxu0 0.0
      %1295 = vmatpush.msra.mxu0 0.0
      %1296 = vmatpush.msra.mxu0 0.0
      %1297 = vmatpush.msra.mxu0 0.0
      %1298 = vmatpush.msra.mxu0 0.0
      %1299 = vmatpush.msra.mxu0 0.0
      %1300 = vmatpush.msra.mxu0 0.0
      %1301 = vmatpush.msra.mxu0 0.0
      %1302 = vmatpush.msra.mxu0 0.0
      %1303 = vmatpush.msra.mxu0 %v806
      %1304 = vmatpush.msra.mxu0 %v805
      %1305 = vmatmul.f32.gmra.mxu0 %v813
      %v1306 = vpop.f32.mrf.mxu0
      %v1307 = vadd.f32 0.0, %v1306
      %1308 = vmatmul.f32.gmra.mxu0 %v816
      %v1309 = vpop.f32.mrf.mxu0
      %v1310 = vadd.f32 0.0, %v1309
      %1311 = vdwg.mxu0
      %1312 = vmatpush.msra.mxu0 0.0
      %1313 = vmatpush.msra.mxu0 0.0
      %1314 = vmatpush.msra.mxu0 0.0
      %1315 = vmatpush.msra.mxu0 0.0
      %1316 = vmatpush.msra.mxu0 0.0
      %1317 = vmatpush.msra.mxu0 0.0
      %1318 = vmatpush.msra.mxu0 0.0
      %1319 = vmatpush.msra.mxu0 0.0
      %1320 = vmatpush.msra.mxu0 0.0
      %1321 = vmatpush.msra.mxu0 0.0
      %1322 = vmatpush.msra.mxu0 0.0
      %1323 = vmatpush.msra.mxu0 0.0
      %1324 = vmatpush.msra.mxu0 0.0
      %1325 = vmatpush.msra.mxu0 0.0
      %1326 = vmatpush.msra.mxu0 %v806
      %1327 = vmatpush.msra.mxu0 %v805
      %1328 = vmatmul.f32.gmra.mxu0 %v845
      %v1329 = vpop.f32.mrf.mxu0
      %v1330 = vadd.f32 0.0, %v1329
      %1331 = vmatmul.f32.gmra.mxu0 %v848
      %v1332 = vpop.f32.mrf.mxu0
      %v1333 = vadd.f32 0.0, %v1332
      %1334 = vdwg.mxu0
      %1335 = vmatpush.msra.mxu0 0.0
      %1336 = vmatpush.msra.mxu0 0.0
      %1337 = vmatpush.msra.mxu0 0.0
      %1338 = vmatpush.msra.mxu0 0.0
      %1339 = vmatpush.msra.mxu0 0.0
      %1340 = vmatpush.msra.mxu0 0.0
      %1341 = vmatpush.msra.mxu0 0.0
      %1342 = vmatpush.msra.mxu0 0.0
      %1343 = vmatpush.msra.mxu0 0.0
      %1344 = vmatpush.msra.mxu0 0.0
      %1345 = vmatpush.msra.mxu0 0.0
      %1346 = vmatpush.msra.mxu0 0.0
      %1347 = vmatpush.msra.mxu0 0.0
      %1348 = vmatpush.msra.mxu0 0.0
      %1349 = vmatpush.msra.mxu0 %v1288
      %1350 = vmatpush.msra.mxu0 %v1287
      %1351 = vmatmul.f32.gmra.mxu0 %v813
      %v1352 = vpop.f32.mrf.mxu0
      %v1353 = vadd.f32 0.0, %v1352
      %1354 = vmatmul.f32.gmra.mxu0 %v816
      %v1355 = vpop.f32.mrf.mxu0
      %v1356 = vadd.f32 0.0, %v1355
      %1357 = vdwg.mxu0
      %1358 = vmatpush.msra.mxu0 0.0
      %1359 = vmatpush.msra.mxu0 0.0
      %1360 = vmatpush.msra.mxu0 0.0
      %1361 = vmatpush.msra.mxu0 0.0
      %1362 = vmatpush.msra.mxu0 0.0
      %1363 = vmatpush.msra.mxu0 0.0
      %1364 = vmatpush.msra.mxu0 0.0
      %1365 = vmatpush.msra.mxu0 0.0
      %1366 = vmatpush.msra.mxu0 0.0
      %1367 = vmatpush.msra.mxu0 0.0
      %1368 = vmatpush.msra.mxu0 0.0
      %1369 = vmatpush.msra.mxu0 0.0
      %1370 = vmatpush.msra.mxu0 0.0
      %1371 = vmatpush.msra.mxu0 0.0
      %1372 = vmatpush.msra.mxu0 %v1288
      %1373 = vmatpush.msra.mxu0 %v1287
      %1374 = vmatmul.f32.gmra.mxu0 %v845
      %v1375 = vpop.f32.mrf.mxu0
      %v1376 = vadd.f32 0.0, %v1375
      %1377 = vmatmul.f32.gmra.mxu0 %v848
      %v1378 = vpop.f32.mrf.mxu0
      %v1379 = vadd.f32 0.0, %v1378
      %1380 = vdwg.mxu0
      %v1381 = vld [vmem:[%s771] sm:$0x1]
      %v1382 = vld [vmem:[%s763] sm:$0xf]
      %s1383 = scalar_lea.vmem %s763, 4
      %v1384 = vld [vmem:[%s1383] sm:$0xf]
      %vm1385 = vcmask 31744
      %v1387 = vsel %vm1385, %v1307, 0
      %v1390 = vsel %vm1385, %v1310, 0
      %vm1392 = vcmask 1043456
      %v1394 = vsel %vm1392, %v1384, 0
      %1396 = vmatpush.msra.mxu0 0.0
      %1397 = vmatpush.msra.mxu0 0.0
      %1398 = vmatpush.msra.mxu0 0.0
      %1399 = vmatpush.msra.mxu0 0.0
      %1400 = vmatpush.msra.mxu0 0.0
      %1401 = vmatpush.msra.mxu0 0.0
      %1402 = vmatpush.msra.mxu0 0.0
      %1403 = vmatpush.msra.mxu0 0.0
      %1404 = vmatpush.msra.mxu0 0.0
      %1405 = vmatpush.msra.mxu0 0.0
      %1406 = vmatpush.msra.mxu0 0.0
      %1407 = vmatpush.msra.mxu0 0.0
      %1408 = vmatpush.msra.mxu0 0.0
      %1409 = vmatpush.msra.mxu0 0.0
      %1410 = vmatpush.msra.mxu0 0.0
      %1411 = vmatpush.msra.mxu0 %v1394
      %1412 = vmatmul.f32.gmra.mxu0 %v1387
      %v1413 = vpop.f32.mrf.mxu0
      %v1414 = vadd.f32 0.0, %v1413
      %1415 = vmatmul.f32.gmra.mxu0 %v1390
      %v1416 = vpop.f32.mrf.mxu0
      %v1417 = vadd.f32 0.0, %v1416
      %1418 = vdwg.mxu0
      %v1420 = vsel %vm1385, %v805, 0
      %v1423 = vsel %vm1385, %v806, 0
      %v1426 = vsel %vm1392, %v1382, 0
      %1428 = vmatpush.msra.mxu0 0.0
      %1429 = vmatpush.msra.mxu0 0.0
      %1430 = vmatpush.msra.mxu0 0.0
      %1431 = vmatpush.msra.mxu0 0.0
      %1432 = vmatpush.msra.mxu0 0.0
      %1433 = vmatpush.msra.mxu0 0.0
      %1434 = vmatpush.msra.mxu0 0.0
      %1435 = vmatpush.msra.mxu0 0.0
      %1436 = vmatpush.msra.mxu0 0.0
      %1437 = vmatpush.msra.mxu0 0.0
      %1438 = vmatpush.msra.mxu0 0.0
      %1439 = vmatpush.msra.mxu0 0.0
      %1440 = vmatpush.msra.mxu0 0.0
      %1441 = vmatpush.msra.mxu0 0.0
      %1442 = vmatpush.msra.mxu0 0.0
      %1443 = vmatpush.msra.mxu0 %v1426
      %1444 = vmatmul.f32.gmra.mxu0 %v1420
      %v1445 = vpop.f32.mrf.mxu0
      %v1446 = vadd.f32 %v1414, %v1445
      %1447 = vmatmul.f32.gmra.mxu0 %v1423
      %v1448 = vpop.f32.mrf.mxu0
      %v1449 = vadd.f32 %v1417, %v1448
      %1450 = vdwg.mxu0
      %s1451 = scalar_lea.vmem %s763, 8
      %v1452 = vld [vmem:[%s1451] sm:$0xf]
      %v1454 = vsel %vm1385, %v1330, 0
      %v1457 = vsel %vm1385, %v1333, 0
      %v1460 = vsel %vm1392, %v1452, 0
      %1462 = vmatpush.msra.mxu0 0.0
      %1463 = vmatpush.msra.mxu0 0.0
      %1464 = vmatpush.msra.mxu0 0.0
      %1465 = vmatpush.msra.mxu0 0.0
      %1466 = vmatpush.msra.mxu0 0.0
      %1467 = vmatpush.msra.mxu0 0.0
      %1468 = vmatpush.msra.mxu0 0.0
      %1469 = vmatpush.msra.mxu0 0.0
      %1470 = vmatpush.msra.mxu0 0.0
      %1471 = vmatpush.msra.mxu0 0.0
      %1472 = vmatpush.msra.mxu0 0.0
      %1473 = vmatpush.msra.mxu0 0.0
      %1474 = vmatpush.msra.mxu0 0.0
      %1475 = vmatpush.msra.mxu0 0.0
      %1476 = vmatpush.msra.mxu0 0.0
      %1477 = vmatpush.msra.mxu0 %v1460
      %1478 = vmatmul.f32.gmra.mxu0 %v1454
      %v1479 = vpop.f32.mrf.mxu0
      %v1480 = vadd.f32 0.0, %v1479
      %1481 = vmatmul.f32.gmra.mxu0 %v1457
      %v1482 = vpop.f32.mrf.mxu0
      %v1483 = vadd.f32 0.0, %v1482
      %1484 = vdwg.mxu0
      %v1485 = vadd.f32 %v1446, %v1480
      %v1486 = vadd.f32 %v1449, %v1483
      %v1488 = vperm.slane %v1381, 0
      %v1490 = vadd.f32 %v1485, %v1488
      %v1491 = vadd.f32 %v1486, %v1488
      %v1492 = vld [vmem:[%s768] sm:$0xff]
      %v1493 = vld [vmem:[%s768 + $0x8] sm:$0xff]
      %v1494 = vld [vmem:[%s768 + $0x10] sm:$0xff]
      %v1495 = vld [vmem:[%s768 + $0x18] sm:$0xff]
      %s1496 = scalar_lea.vmem %s768, 32
      %v1497 = vld [vmem:[%s1496] sm:$0xff]
      %v1498 = vld [vmem:[%s1496 + $0x8] sm:$0xff]
      %v1499 = vld [vmem:[%s1496 + $0x10] sm:$0xff]
      %v1500 = vld [vmem:[%s1496 + $0x18] sm:$0xff]
      %v1502 = vsel %vm883, %v1353, 0
      %v1505 = vsel %vm883, %v1356, 0
      %1507 = vmatpush.msra.mxu0 0.0
      %1508 = vmatpush.msra.mxu0 0.0
      %1509 = vmatpush.msra.mxu0 0.0
      %1510 = vmatpush.msra.mxu0 0.0
      %1511 = vmatpush.msra.mxu0 0.0
      %1512 = vmatpush.msra.mxu0 0.0
      %1513 = vmatpush.msra.mxu0 0.0
      %1514 = vmatpush.msra.mxu0 0.0
      %1515 = vmatpush.msra.mxu0 0.0
      %1516 = vmatpush.msra.mxu0 0.0
      %1517 = vmatpush.msra.mxu0 0.0
      %1518 = vmatpush.msra.mxu0 0.0
      %1519 = vmatpush.msra.mxu0 %v1500
      %1520 = vmatpush.msra.mxu0 %v1499
      %1521 = vmatpush.msra.mxu0 %v1498
      %1522 = vmatpush.msra.mxu0 %v1497
      %1523 = vmatmul.f32.gmra.mxu0 %v1502
      %v1524 = vpop.f32.mrf.mxu0
      %v1525 = vadd.f32 0.0, %v1524
      %1526 = vmatmul.f32.gmra.mxu0 %v1505
      %v1527 = vpop.f32.mrf.mxu0
      %v1528 = vadd.f32 0.0, %v1527
      %1529 = vdwg.mxu0
      %v1531 = vsel %vm883, %v1287, 0
      %v1534 = vsel %vm883, %v1288, 0
      %1536 = vmatpush.msra.mxu0 0.0
      %1537 = vmatpush.msra.mxu0 0.0
      %1538 = vmatpush.msra.mxu0 0.0
      %1539 = vmatpush.msra.mxu0 0.0
      %1540 = vmatpush.msra.mxu0 0.0
      %1541 = vmatpush.msra.mxu0 0.0
      %1542 = vmatpush.msra.mxu0 0.0
      %1543 = vmatpush.msra.mxu0 0.0
      %1544 = vmatpush.msra.mxu0 0.0
      %1545 = vmatpush.msra.mxu0 0.0
      %1546 = vmatpush.msra.mxu0 0.0
      %1547 = vmatpush.msra.mxu0 0.0
      %1548 = vmatpush.msra.mxu0 %v1495
      %1549 = vmatpush.msra.mxu0 %v1494
      %1550 = vmatpush.msra.mxu0 %v1493
      %1551 = vmatpush.msra.mxu0 %v1492
      %1552 = vmatmul.f32.gmra.mxu0 %v1531
      %v1553 = vpop.f32.mrf.mxu0
      %v1554 = vadd.f32 %v1525, %v1553
      %1555 = vmatmul.f32.gmra.mxu0 %v1534
      %v1556 = vpop.f32.mrf.mxu0
      %v1557 = vadd.f32 %v1528, %v1556
      %1558 = vdwg.mxu0
      %s1559 = scalar_lea.vmem %s768, 64
      %v1560 = vld [vmem:[%s1559] sm:$0xff]
      %v1561 = vld [vmem:[%s1559 + $0x8] sm:$0xff]
      %v1562 = vld [vmem:[%s1559 + $0x10] sm:$0xff]
      %v1563 = vld [vmem:[%s1559 + $0x18] sm:$0xff]
      %v1565 = vsel %vm883, %v1376, 0
      %v1568 = vsel %vm883, %v1379, 0
      %1570 = vmatpush.msra.mxu0 0.0
      %1571 = vmatpush.msra.mxu0 0.0
      %1572 = vmatpush.msra.mxu0 0.0
      %1573 = vmatpush.msra.mxu0 0.0
      %1574 = vmatpush.msra.mxu0 0.0
      %1575 = vmatpush.msra.mxu0 0.0
      %1576 = vmatpush.msra.mxu0 0.0
      %1577 = vmatpush.msra.mxu0 0.0
      %1578 = vmatpush.msra.mxu0 0.0
      %1579 = vmatpush.msra.mxu0 0.0
      %1580 = vmatpush.msra.mxu0 0.0
      %1581 = vmatpush.msra.mxu0 0.0
      %1582 = vmatpush.msra.mxu0 %v1563
      %1583 = vmatpush.msra.mxu0 %v1562
      %1584 = vmatpush.msra.mxu0 %v1561
      %1585 = vmatpush.msra.mxu0 %v1560
      %1586 = vmatmul.f32.gmra.mxu0 %v1565
      %v1587 = vpop.f32.mrf.mxu0
      %v1588 = vadd.f32 0.0, %v1587
      %1589 = vmatmul.f32.gmra.mxu0 %v1568
      %v1590 = vpop.f32.mrf.mxu0
      %v1591 = vadd.f32 0.0, %v1590
      %1592 = vdwg.mxu0
      %v1593 = vadd.f32 %v1554, %v1588
      %v1594 = vadd.f32 %v1557, %v1591
      %v1595 = vadd.f32 %v1593, 0.0
      %v1596 = vadd.f32 %v1594, 0.0
      %v1597 = vadd.f32 %v1490, %v1595
      %v1598 = vadd.f32 %v1491, %v1596
      %v1599 = vxor.u32 %v1597, 2147483648
      %v1600 = vxor.u32 %v1598, 2147483648
      %v1601 = vmul.f32 %v1599, 1.442695
      %v1602 = vpow.pop %v1601
      %v1603 = vmul.f32 %v1600, 1.442695
      %v1604 = vpow.pop %v1603
      %v1605 = vadd.f32 %v1602, 1.0
      %v1606 = vadd.f32 %v1604, 1.0
      %v1607 = vrcp.pop %v1605
      %v1608 = vmul.f32 %v1605, %v1607
      %v1609 = vsub.f32 1.0, %v1608
      %v1610 = vmul.f32 %v1607, %v1609
      %v1611 = vadd.f32 %v1607, %v1610
      %vm1612 = vweird.f32 %v1605
      %vm1613 = vweird.f32 %v1607
      %vm1614 = vmor %vm1612, %vm1613
      %v1615 = vsel %vm1614, %v1607, %v1611
      %v1616 = vand.u32 2147483647, %v1605
      %vm1617 = vcmp.eq.f32.partialorder %v1616, 8.507059e+37
      %v1618 = vand.u32 %v1605, 2147483648
      %v1619 = vor.u32 1.1754944e-38, %v1618
      %v1620 = vsel %vm1617, %v1619, %v1615
      %v1621 = vmul.f32 1.0, %v1620
      %v1622 = vrcp.pop %v1606
      %v1623 = vmul.f32 %v1606, %v1622
      %v1624 = vsub.f32 1.0, %v1623
      %v1625 = vmul.f32 %v1622, %v1624
      %v1626 = vadd.f32 %v1622, %v1625
      %vm1627 = vweird.f32 %v1606
      %vm1628 = vweird.f32 %v1622
      %vm1629 = vmor %vm1627, %vm1628
      %v1630 = vsel %vm1629, %v1622, %v1626
      %v1631 = vand.u32 2147483647, %v1606
      %vm1632 = vcmp.eq.f32.partialorder %v1631, 8.507059e+37
      %v1633 = vand.u32 %v1606, 2147483648
      %v1634 = vor.u32 1.1754944e-38, %v1633
      %v1635 = vsel %vm1632, %v1634, %v1630
      %v1636 = vmul.f32 1.0, %v1635
      %v1637 = vld [vmem:[%s784] sm:$0x1]
      %v1638 = vld [vmem:[%s776] sm:$0xf]
      %s1639 = scalar_lea.vmem %s776, 4
      %v1640 = vld [vmem:[%s1639] sm:$0xf]
      %v1642 = vsel %vm1392, %v1640, 0
      %1644 = vmatpush.msra.mxu0 0.0
      %1645 = vmatpush.msra.mxu0 0.0
      %1646 = vmatpush.msra.mxu0 0.0
      %1647 = vmatpush.msra.mxu0 0.0
      %1648 = vmatpush.msra.mxu0 0.0
      %1649 = vmatpush.msra.mxu0 0.0
      %1650 = vmatpush.msra.mxu0 0.0
      %1651 = vmatpush.msra.mxu0 0.0
      %1652 = vmatpush.msra.mxu0 0.0
      %1653 = vmatpush.msra.mxu0 0.0
      %1654 = vmatpush.msra.mxu0 0.0
      %1655 = vmatpush.msra.mxu0 0.0
      %1656 = vmatpush.msra.mxu0 0.0
      %1657 = vmatpush.msra.mxu0 0.0
      %1658 = vmatpush.msra.mxu0 0.0
      %1659 = vmatpush.msra.mxu0 %v1642
      %1660 = vmatmul.f32.gmra.mxu0 %v1387
      %v1661 = vpop.f32.mrf.mxu0
      %v1662 = vadd.f32 0.0, %v1661
      %1663 = vmatmul.f32.gmra.mxu0 %v1390
      %v1664 = vpop.f32.mrf.mxu0
      %v1665 = vadd.f32 0.0, %v1664
      %1666 = vdwg.mxu0
      %v1668 = vsel %vm1392, %v1638, 0
      %1670 = vmatpush.msra.mxu0 0.0
      %1671 = vmatpush.msra.mxu0 0.0
      %1672 = vmatpush.msra.mxu0 0.0
      %1673 = vmatpush.msra.mxu0 0.0
      %1674 = vmatpush.msra.mxu0 0.0
      %1675 = vmatpush.msra.mxu0 0.0
      %1676 = vmatpush.msra.mxu0 0.0
      %1677 = vmatpush.msra.mxu0 0.0
      %1678 = vmatpush.msra.mxu0 0.0
      %1679 = vmatpush.msra.mxu0 0.0
      %1680 = vmatpush.msra.mxu0 0.0
      %1681 = vmatpush.msra.mxu0 0.0
      %1682 = vmatpush.msra.mxu0 0.0
      %1683 = vmatpush.msra.mxu0 0.0
      %1684 = vmatpush.msra.mxu0 0.0
      %1685 = vmatpush.msra.mxu0 %v1668
      %1686 = vmatmul.f32.gmra.mxu0 %v1420
      %v1687 = vpop.f32.mrf.mxu0
      %v1688 = vadd.f32 %v1662, %v1687
      %1689 = vmatmul.f32.gmra.mxu0 %v1423
      %v1690 = vpop.f32.mrf.mxu0
      %v1691 = vadd.f32 %v1665, %v1690
      %1692 = vdwg.mxu0
      %s1693 = scalar_lea.vmem %s776, 8
      %v1694 = vld [vmem:[%s1693] sm:$0xf]
      %v1696 = vsel %vm1392, %v1694, 0
      %1698 = vmatpush.msra.mxu0 0.0
      %1699 = vmatpush.msra.mxu0 0.0
      %1700 = vmatpush.msra.mxu0 0.0
      %1701 = vmatpush.msra.mxu0 0.0
      %1702 = vmatpush.msra.mxu0 0.0
      %1703 = vmatpush.msra.mxu0 0.0
      %1704 = vmatpush.msra.mxu0 0.0
      %1705 = vmatpush.msra.mxu0 0.0
      %1706 = vmatpush.msra.mxu0 0.0
      %1707 = vmatpush.msra.mxu0 0.0
      %1708 = vmatpush.msra.mxu0 0.0
      %1709 = vmatpush.msra.mxu0 0.0
      %1710 = vmatpush.msra.mxu0 0.0
      %1711 = vmatpush.msra.mxu0 0.0
      %1712 = vmatpush.msra.mxu0 0.0
      %1713 = vmatpush.msra.mxu0 %v1696
      %1714 = vmatmul.f32.gmra.mxu0 %v1454
      %v1715 = vpop.f32.mrf.mxu0
      %v1716 = vadd.f32 0.0, %v1715
      %1717 = vmatmul.f32.gmra.mxu0 %v1457
      %v1718 = vpop.f32.mrf.mxu0
      %v1719 = vadd.f32 0.0, %v1718
      %1720 = vdwg.mxu0
      %v1721 = vadd.f32 %v1688, %v1716
      %v1722 = vadd.f32 %v1691, %v1719
      %v1724 = vperm.slane %v1637, 0
      %v1726 = vadd.f32 %v1721, %v1724
      %v1727 = vadd.f32 %v1722, %v1724
      %v1728 = vmul.f32 %v1621, %v1287
      %v1729 = vmul.f32 %v1636, %v1288
      %1730 = vmatpush.msra.mxu0 0.0
      %1731 = vmatpush.msra.mxu0 0.0
      %1732 = vmatpush.msra.mxu0 0.0
      %1733 = vmatpush.msra.mxu0 0.0
      %1734 = vmatpush.msra.mxu0 0.0
      %1735 = vmatpush.msra.mxu0 0.0
      %1736 = vmatpush.msra.mxu0 0.0
      %1737 = vmatpush.msra.mxu0 0.0
      %1738 = vmatpush.msra.mxu0 0.0
      %1739 = vmatpush.msra.mxu0 0.0
      %1740 = vmatpush.msra.mxu0 0.0
      %1741 = vmatpush.msra.mxu0 0.0
      %1742 = vmatpush.msra.mxu0 0.0
      %1743 = vmatpush.msra.mxu0 0.0
      %1744 = vmatpush.msra.mxu0 %v1729
      %1745 = vmatpush.msra.mxu0 %v1728
      %1746 = vmatmul.f32.gmra.mxu0 %v813
      %v1747 = vpop.f32.mrf.mxu0
      %v1748 = vadd.f32 0.0, %v1747
      %1749 = vmatmul.f32.gmra.mxu0 %v816
      %v1750 = vpop.f32.mrf.mxu0
      %v1751 = vadd.f32 0.0, %v1750
      %1752 = vdwg.mxu0
      %1753 = vmatpush.msra.mxu0 0.0
      %1754 = vmatpush.msra.mxu0 0.0
      %1755 = vmatpush.msra.mxu0 0.0
      %1756 = vmatpush.msra.mxu0 0.0
      %1757 = vmatpush.msra.mxu0 0.0
      %1758 = vmatpush.msra.mxu0 0.0
      %1759 = vmatpush.msra.mxu0 0.0
      %1760 = vmatpush.msra.mxu0 0.0
      %1761 = vmatpush.msra.mxu0 0.0
      %1762 = vmatpush.msra.mxu0 0.0
      %1763 = vmatpush.msra.mxu0 0.0
      %1764 = vmatpush.msra.mxu0 0.0
      %1765 = vmatpush.msra.mxu0 0.0
      %1766 = vmatpush.msra.mxu0 0.0
      %1767 = vmatpush.msra.mxu0 %v1729
      %1768 = vmatpush.msra.mxu0 %v1728
      %1769 = vmatmul.f32.gmra.mxu0 %v845
      %v1770 = vpop.f32.mrf.mxu0
      %v1771 = vadd.f32 0.0, %v1770
      %1772 = vmatmul.f32.gmra.mxu0 %v848
      %v1773 = vpop.f32.mrf.mxu0
      %v1774 = vadd.f32 0.0, %v1773
      %1775 = vdwg.mxu0
      %v1776 = vld [vmem:[%s781] sm:$0xff]
      %v1777 = vld [vmem:[%s781 + $0x8] sm:$0xff]
      %v1778 = vld [vmem:[%s781 + $0x10] sm:$0xff]
      %v1779 = vld [vmem:[%s781 + $0x18] sm:$0xff]
      %s1780 = scalar_lea.vmem %s781, 32
      %v1781 = vld [vmem:[%s1780] sm:$0xff]
      %v1782 = vld [vmem:[%s1780 + $0x8] sm:$0xff]
      %v1783 = vld [vmem:[%s1780 + $0x10] sm:$0xff]
      %v1784 = vld [vmem:[%s1780 + $0x18] sm:$0xff]
      %v1786 = vsel %vm883, %v1748, 0
      %v1789 = vsel %vm883, %v1751, 0
      %1791 = vmatpush.msra.mxu0 0.0
      %1792 = vmatpush.msra.mxu0 0.0
      %1793 = vmatpush.msra.mxu0 0.0
      %1794 = vmatpush.msra.mxu0 0.0
      %1795 = vmatpush.msra.mxu0 0.0
      %1796 = vmatpush.msra.mxu0 0.0
      %1797 = vmatpush.msra.mxu0 0.0
      %1798 = vmatpush.msra.mxu0 0.0
      %1799 = vmatpush.msra.mxu0 0.0
      %1800 = vmatpush.msra.mxu0 0.0
      %1801 = vmatpush.msra.mxu0 0.0
      %1802 = vmatpush.msra.mxu0 0.0
      %1803 = vmatpush.msra.mxu0 %v1784
      %1804 = vmatpush.msra.mxu0 %v1783
      %1805 = vmatpush.msra.mxu0 %v1782
      %1806 = vmatpush.msra.mxu0 %v1781
      %1807 = vmatmul.f32.gmra.mxu0 %v1786
      %v1808 = vpop.f32.mrf.mxu0
      %v1809 = vadd.f32 0.0, %v1808
      %1810 = vmatmul.f32.gmra.mxu0 %v1789
      %v1811 = vpop.f32.mrf.mxu0
      %v1812 = vadd.f32 0.0, %v1811
      %1813 = vdwg.mxu0
      %v1815 = vsel %vm883, %v1728, 0
      %v1818 = vsel %vm883, %v1729, 0
      %1820 = vmatpush.msra.mxu0 0.0
      %1821 = vmatpush.msra.mxu0 0.0
      %1822 = vmatpush.msra.mxu0 0.0
      %1823 = vmatpush.msra.mxu0 0.0
      %1824 = vmatpush.msra.mxu0 0.0
      %1825 = vmatpush.msra.mxu0 0.0
      %1826 = vmatpush.msra.mxu0 0.0
      %1827 = vmatpush.msra.mxu0 0.0
      %1828 = vmatpush.msra.mxu0 0.0
      %1829 = vmatpush.msra.mxu0 0.0
      %1830 = vmatpush.msra.mxu0 0.0
      %1831 = vmatpush.msra.mxu0 0.0
      %1832 = vmatpush.msra.mxu0 %v1779
      %1833 = vmatpush.msra.mxu0 %v1778
      %1834 = vmatpush.msra.mxu0 %v1777
      %1835 = vmatpush.msra.mxu0 %v1776
      %1836 = vmatmul.f32.gmra.mxu0 %v1815
      %v1837 = vpop.f32.mrf.mxu0
      %v1838 = vadd.f32 %v1809, %v1837
      %1839 = vmatmul.f32.gmra.mxu0 %v1818
      %v1840 = vpop.f32.mrf.mxu0
      %v1841 = vadd.f32 %v1812, %v1840
      %1842 = vdwg.mxu0
      %s1843 = scalar_lea.vmem %s781, 64
      %v1844 = vld [vmem:[%s1843] sm:$0xff]
      %v1845 = vld [vmem:[%s1843 + $0x8] sm:$0xff]
      %v1846 = vld [vmem:[%s1843 + $0x10] sm:$0xff]
      %v1847 = vld [vmem:[%s1843 + $0x18] sm:$0xff]
      %v1849 = vsel %vm883, %v1771, 0
      %v1852 = vsel %vm883, %v1774, 0
      %1854 = vmatpush.msra.mxu0 0.0
      %1855 = vmatpush.msra.mxu0 0.0
      %1856 = vmatpush.msra.mxu0 0.0
      %1857 = vmatpush.msra.mxu0 0.0
      %1858 = vmatpush.msra.mxu0 0.0
      %1859 = vmatpush.msra.mxu0 0.0
      %1860 = vmatpush.msra.mxu0 0.0
      %1861 = vmatpush.msra.mxu0 0.0
      %1862 = vmatpush.msra.mxu0 0.0
      %1863 = vmatpush.msra.mxu0 0.0
      %1864 = vmatpush.msra.mxu0 0.0
      %1865 = vmatpush.msra.mxu0 0.0
      %1866 = vmatpush.msra.mxu0 %v1847
      %1867 = vmatpush.msra.mxu0 %v1846
      %1868 = vmatpush.msra.mxu0 %v1845
      %1869 = vmatpush.msra.mxu0 %v1844
      %1870 = vmatmul.f32.gmra.mxu0 %v1849
      %v1871 = vpop.f32.mrf.mxu0
      %v1872 = vadd.f32 0.0, %v1871
      %1873 = vmatmul.f32.gmra.mxu0 %v1852
      %v1874 = vpop.f32.mrf.mxu0
      %v1875 = vadd.f32 0.0, %v1874
      %1876 = vdwg.mxu0
      %v1877 = vadd.f32 %v1838, %v1872
      %v1878 = vadd.f32 %v1841, %v1875
      %v1879 = vadd.f32 %v1877, 0.0
      %v1880 = vadd.f32 %v1878, 0.0
      %v1881 = vadd.f32 %v1726, %v1879
      %v1882 = vadd.f32 %v1727, %v1880
      %v1883 = vtanh.pop %v1881
      %v1884 = vtanh.pop %v1882
      %1885 = vrot.lane.b32.xlu0 %v1287, 32
      %v1886 = vpop.permute.xlu0 %1885
      %1887 = vrot.lane.b32.xlu0 %v1288, 32
      %v1888 = vpop.permute.xlu0 %1887
      %v1891 = vmul.f32 %v1621, %v1886
      %v1892 = vmul.f32 %v1636, %v1888
      %v1893 = vsub.f32 1.0, %v1621
      %v1894 = vsub.f32 1.0, %v1636
      %1897 = vrot.lane.b32.xlu0 %v1883, 32
      %v1898 = vpop.permute.xlu0 %1897
      %1899 = vrot.lane.b32.xlu0 %v1884, 32
      %v1900 = vpop.permute.xlu0 %1899
      %v1903 = vmul.f32 %v1893, %v1898
      %v1904 = vmul.f32 %v1894, %v1900
      %v1905 = vadd.f32 %v1891, %v1903
      %v1906 = vadd.f32 %v1892, %v1904
      %v1907 = vsub.f32 1.0, %v807
      %v1908 = vsub.f32 1.0, %v808
      %1910 = vset.pattern.permute.xlu0 0
      %1911 = vperm.xlu0 %1910, %v1907
      %v1912 = vpop.permute.xlu0 %1911
      %1915 = vset.pattern.permute.xlu0 0
      %1916 = vperm.xlu0 %1915, %v1908
      %v1917 = vpop.permute.xlu0 %1916
      %v1919 = vmul.f32 %v1287, %v1912
      %v1920 = vmul.f32 %v1288, %v1917
      %1922 = vset.pattern.permute.xlu0 0
      %1923 = vperm.xlu0 %1922, %v807
      %v1924 = vpop.permute.xlu0 %1923
      %1927 = vset.pattern.permute.xlu0 0
      %1928 = vperm.xlu0 %1927, %v808
      %v1929 = vpop.permute.xlu0 %1928
      %v1931 = vmul.f32 %v1905, %v1924
      %v1932 = vmul.f32 %v1906, %v1929
      %1935 = vrot.lane.b32.xlu0 %v1931, 96
      %v1936 = vpop.permute.xlu0 %1935
      %1937 = vrot.lane.b32.xlu0 %v1932, 96
      %v1938 = vpop.permute.xlu0 %1937
      %v1941 = vadd.f32 %v1919, %v1936
      %v1942 = vadd.f32 %v1920, %v1938
      %1943 = vst.msk [vmem:[#allocation2] sm:$0xff] %vm883, %v1941
      %1944 = vst.msk [vmem:[#allocation2 + $0x8] sm:$0xff] %vm883, %v1942
      %1947 = vrot.lane.b32.xlu0 %v1941, 32
      %v1948 = vpop.permute.xlu0 %1947
      %1949 = vrot.lane.b32.xlu0 %v1942, 32
      %v1950 = vpop.permute.xlu0 %1949
      %v1953 = vsel %vm883, %v1287, %v1948
      %v1954 = vsel %vm883, %v1288, %v1950
      %vm1955 = vcmask 523264
      %v1956 = vsel %vm1955, %v1953, 0.0
      %v1957 = vsel %vm1955, %v1954, 0.0
      %1958 = vst [vmem:[%s793] sm:$0xff] %v1956
      %1959 = vst [vmem:[%s793 + $0x8] sm:$0xff] %v1957
      %p1960 = scmp.lt.s32.totalorder %s31, 1
      %s1961 = scalar_select %p1960, %s31, 1
      %p1962 = scmp.lt.s32.totalorder %s32, 6
      %s1963 = scalar_select %p1962, %s32, 6
      %s1964 = smul.addr %s1963, 2
      %s1965 = smul.addr %s1961, 14
      %s1966 = sadd.s32 %s1964, %s1965
      %s1967 = smul.addr %s1966, 8
      %s1968 = scalar_lea.vmem %s16, %s1967
      // Predicated region
      $region89: #{_device_forward.2} parent=83 // pred_check
        %p1969 = pneg %p470
      $region90: #{_device_forward.2} parent=83 // pred_check_branch
        %1971 = sbr.rel (%p1969) target = $region92
      $region91: #{_device_forward.2} parent=83 // pred_region
        _
      $region92: #{_device_forward.2} parent=83 // pred_fallthru
        _
    $region84: #{_device_forward.2} parent=5 // pred_fallthru
      _
    %p1972 = scmp.le.s32.totalorder 2, %s22
    // Predicated region
    $region93: #{_device_forward.2} parent=5 // pred_check
      %p1973 = pneg %p1972
    $region94: #{_device_forward.2} parent=5 // pred_check_branch
      %1975 = sbr.rel (%p1973) target = $region96
    $region95: #{_device_forward.2} parent=5 // pred_region
      %s1976 = ssub.s32 %s22, 2
      // Predicated region
      $region97: #{_device_forward.2} parent=95 // pred_check
        %p1977 = pneg %p476
      $region98: #{_device_forward.2} parent=95 // pred_check_branch
        %1979 = sbr.rel (%p1977) target = $region100
      $region99: #{_device_forward.2} parent=95 // pred_region
        %p1980 = scmp.lt.s32.totalorder %s33, 1
        %s1981 = scalar_select %p1980, %s33, 1
        %p1982 = scmp.lt.s32.totalorder %s34, 6
        %s1983 = scalar_select %p1982, %s34, 6
        %s1984 = smul.addr %s1983, 2
        %s1985 = smul.addr %s1981, 14
        %s1986 = sadd.s32 %s1984, %s1985
        %s1987 = smul.addr %s1986, 8
        %s1988 = scalar_lea.vmem %s16, %s1987
      $region100: #{_device_forward.2} parent=95 // pred_fallthru
        _
    $region96: #{_device_forward.2} parent=5 // pred_fallthru
      _
  $region6: #{_device_forward.2} parent=0 // loop_footer
    %s26 = sadd.s32 1, %s22
  $region7: #{_device_forward.2} parent=0 // loop_footer_branch
    %21 = sbr.rel target = $region3
  $region8: #{_device_forward.2} parent=0 // loop_exit
    _

</llo_original>
